<compile_context>
chip_gen: v7x
topology: tpu7x:2x2x1
jax: 0.10.0
libtpu: 0.0.40
codegen_flags: <defaults>
</compile_context>

<pallas_src>
import numpy as np
import jax
import jax.numpy as jnp
from jax import lax
from jax.experimental import pallas as pl
from jax.experimental.pallas import tpu as pltpu


# Model dimensions.
H1, W1, C_IN = 16, 16, 4          # conv1 input spatial / channels
C1 = 8                            # conv1 output channels
H2, W2 = 8, 8                     # spatial after pool1
C2 = 16                           # conv2 output channels
H3, W3 = 4, 4                     # spatial after pool2
HW1, HW2, HW3 = H1 * W1, H2 * W2, H3 * W3
FC_IN, FC_OUT = C2 * HW3, 32

# 3x3 tap offsets, in the same (ky, kx) order as the reshaped conv weights.
_TAPS = [(dy, dx) for dy in (-1, 0, 1) for dx in (-1, 0, 1)]


def _tap_masks(H, W):
    """(9, H*W) 0/1 validity masks per tap for a pad=1 3x3 conv on flat HW."""
    p = np.arange(H * W)
    h, w = p // W, p % W
    rows = []
    for dy, dx in _TAPS:
        ok = (h + dy >= 0) & (h + dy < H) & (w + dx >= 0) & (w + dx < W)
        rows.append(ok.astype(np.float32))
    return jnp.asarray(np.stack(rows, 0))


def _pool_matrix_T(H, W):
    """(H*W, (H/2)*(W/2)) matrix: right-multiply applies AvgPool2d(2)."""
    Ho, Wo = H // 2, W // 2
    P = np.zeros((H * W, Ho * Wo), np.float32)
    q = np.arange(Ho * Wo)
    ho, wo = q // Wo, q % Wo
    for dh in range(2):
        for dw in range(2):
            P[(2 * ho + dh) * W + (2 * wo + dw), q] = 0.25
    return jnp.asarray(P)


def _conv3x3(x, w_ref, m_ref, W, C_out, HW):
    """pad=1 3x3 conv on (C_in, HW) layout: 9 rolled-tap MXU matmuls."""
    acc = jnp.zeros((C_out, HW), jnp.float32)
    for t, (dy, dx) in enumerate(_TAPS):
        off = dy * W + dx
        if off == 0:
            shifted = x                                   # center tap: no shift
        else:
            shifted = pltpu.roll(x, shift=(-off) % HW, axis=1) * m_ref[t:t + 1, :]
        acc = acc + jnp.dot(w_ref[t], shifted, preferred_element_type=jnp.float32)
    return acc


def _fused_kernel(x_ref, w1_ref, b1_ref, m1_ref, p1_ref,
                  w2_ref, b2_ref, m2_ref, p2_ref, wf_ref, bf_ref,
                  o_ref, fcin_ref):
    """Entire ModifiedModel forward for one image, fully VMEM-resident."""
    f32 = jnp.float32
    x = x_ref[0]                                              # (C_IN, 256)

    # ---- conv1 (3x3, pad=1) + ReLU, then pool1 as one 0.25-matrix matmul ---
    a1 = _conv3x3(x, w1_ref, m1_ref, W1, C1, HW1)
    a1 = jnp.maximum(a1 + b1_ref[...], 0.0)                   # (8, 256)
    p1 = jnp.dot(a1, p1_ref[...], preferred_element_type=f32)  # (8, 64)

    # ---- conv2 (3x3, pad=1) + ReLU, then pool2 ------------------------------
    a2 = _conv3x3(p1, w2_ref, m2_ref, W2, C2, HW2)
    a2 = jnp.maximum(a2 + b2_ref[...], 0.0)                   # (16, 64)
    p2 = jnp.dot(a2, p2_ref[...], preferred_element_type=f32)  # (16, 16)

    # ---- flatten (c, hw) into a lane-dense (1, 256) row; this order IS
    #      PyTorch's NCHW flatten (index = c*16 + h*4 + w). ---------------------
    for c in range(C2):
        fcin_ref[0:1, c * HW3:(c + 1) * HW3] = p2[c:c + 1, :]

    # ---- fc1 + ReLU (the 'head' Linear is dropped by ModifiedModel) ---------
    y = jnp.dot(fcin_ref[...], wf_ref[...], preferred_element_type=f32)
    o_ref[0] = jnp.maximum(y + bf_ref[...], 0.0).astype(o_ref.dtype)


def init_params(key):
    ks = jax.random.split(key, 6)
    return dict(
        w1=0.1 * jax.random.normal(ks[0], (3, 3, C_IN, C1), jnp.float32),  # HWIO
        b1=0.1 * jax.random.normal(ks[1], (C1,), jnp.float32),
        w2=0.1 * jax.random.normal(ks[2], (3, 3, C1, C2), jnp.float32),    # HWIO
        b2=0.1 * jax.random.normal(ks[3], (C2,), jnp.float32),
        # fc1 weight, rows already in PyTorch NCHW-flatten order (c, h, w).
        wf=0.1 * jax.random.normal(ks[4], (FC_IN, FC_OUT), jnp.float32),
        bf=0.1 * jax.random.normal(ks[5], (FC_OUT,), jnp.float32),
        # head (32 -> 10) would live here, but ModifiedModel drops it.
    )


@jax.jit
def modified_model_forward(x_nchw, params):
    N = x_nchw.shape[0]
    # NCHW (PyTorch) -> (N, C, H*W): contiguous reshape, spatial on the lanes.
    x = x_nchw.reshape(N, C_IN, HW1).astype(jnp.float32)

    # Per-tap conv weights: (9, C_out, C_in), tap order (ky, kx).
    w1t = jnp.transpose(params["w1"], (0, 1, 3, 2)).reshape(9, C1, C_IN)
    w2t = jnp.transpose(params["w2"], (0, 1, 3, 2)).reshape(9, C2, C1)
    b1 = params["b1"].reshape(C1, 1)
    b2 = params["b2"].reshape(C2, 1)
    bf = params["bf"].reshape(1, FC_OUT)
    wf = params["wf"]                                   # (256, 32)

    M1, M2 = _tap_masks(H1, W1), _tap_masks(H2, W2)      # (9,256), (9,64)
    P1T, P2T = _pool_matrix_T(H1, W1), _pool_matrix_T(H2, W2)  # (256,64), (64,16)

    out = pl.pallas_call(
        _fused_kernel,
        out_shape=jax.ShapeDtypeStruct((N, 1, FC_OUT), jnp.float32),
        grid=(N,),
        in_specs=[
            pl.BlockSpec((1, C_IN, HW1), lambda n: (n, 0, 0)),   # x
            pl.BlockSpec((9, C1, C_IN), lambda n: (0, 0, 0)),    # w1 taps
            pl.BlockSpec((C1, 1), lambda n: (0, 0)),             # b1
            pl.BlockSpec((9, HW1), lambda n: (0, 0)),            # conv1 masks
            pl.BlockSpec((HW1, HW2), lambda n: (0, 0)),          # pool1 matrix
            pl.BlockSpec((9, C2, C1), lambda n: (0, 0, 0)),      # w2 taps
            pl.BlockSpec((C2, 1), lambda n: (0, 0)),             # b2
            pl.BlockSpec((9, HW2), lambda n: (0, 0)),            # conv2 masks
            pl.BlockSpec((HW2, HW3), lambda n: (0, 0)),          # pool2 matrix
            pl.BlockSpec((FC_IN, FC_OUT), lambda n: (0, 0)),     # wf
            pl.BlockSpec((1, FC_OUT), lambda n: (0, 0)),         # bf
        ],
        out_specs=pl.BlockSpec((1, 1, FC_OUT), lambda n: (n, 0, 0)),
        scratch_shapes=[pltpu.VMEM((1, FC_IN), jnp.float32)],    # flat fc1 input
        compiler_params=pltpu.CompilerParams(
            dimension_semantics=("parallel",)),   # batch shards across TCs (v7x)
    )(x, w1t, b1, M1, P1T, w2t, b2, M2, P2T, wf, bf)
    return out.reshape(N, FC_OUT)


# ----------------------------- pure-JAX reference ----------------------------
def _avgpool2_ref(x):
    N, H, W, C = x.shape
    return x.reshape(N, H // 2, 2, W // 2, 2, C).mean(axis=(2, 4))


def reference_forward(x_nchw, params):
    x = jnp.transpose(x_nchw, (0, 2, 3, 1)).astype(jnp.float32)
    dn = ("NHWC", "HWIO", "NHWC")
    x = jnp.maximum(lax.conv_general_dilated(
        x, params["w1"], (1, 1), "SAME", dimension_numbers=dn) + params["b1"], 0.0)
    x = _avgpool2_ref(x)
    x = jnp.maximum(lax.conv_general_dilated(
        x, params["w2"], (1, 1), "SAME", dimension_numbers=dn) + params["b2"], 0.0)
    x = _avgpool2_ref(x)
    x = jnp.transpose(x, (0, 3, 1, 2)).reshape(x.shape[0], -1)   # NCHW flatten
    return jnp.maximum(x @ params["wf"] + params["bf"], 0.0)


if __name__ == "__main__":
    key = jax.random.PRNGKey(0)
    k_x, k_p = jax.random.split(key)
    x = jax.random.normal(k_x, (2, C_IN, H1, W1), jnp.float32)   # NCHW input
    params = init_params(k_p)

    y = modified_model_forward(x, params)
    jax.block_until_ready(y)
    assert y.shape == (2, FC_OUT) and y.dtype == jnp.float32

    ref = reference_forward(x, params)
    err = float(jnp.max(jnp.abs(y - ref)))
    assert err < 5e-2, f"mismatch vs reference: {err}"

    print("KERNEL_OK")
</pallas_src>

<mosaic_0001>
module attributes {stable_mosaic.version = 11 : i64} {
  func.func @_fused_kernel(%arg0: i32, %arg1: memref<1x4x256xf32, #tpu.memory_space<vmem>>, %arg2: memref<9x8x4xf32, #tpu.memory_space<vmem>>, %arg3: memref<8x1xf32, #tpu.memory_space<vmem>>, %arg4: memref<9x256xf32, #tpu.memory_space<vmem>>, %arg5: memref<256x64xf32, #tpu.memory_space<vmem>>, %arg6: memref<9x16x8xf32, #tpu.memory_space<vmem>>, %arg7: memref<16x1xf32, #tpu.memory_space<vmem>>, %arg8: memref<9x64xf32, #tpu.memory_space<vmem>>, %arg9: memref<64x16xf32, #tpu.memory_space<vmem>>, %arg10: memref<256x32xf32, #tpu.memory_space<vmem>>, %arg11: memref<1x32xf32, #tpu.memory_space<vmem>>, %arg12: memref<1x1x32xf32, #tpu.memory_space<vmem>>, %arg13: memref<1x256xf32, #tpu.memory_space<vmem>>) attributes {dimension_semantics = [#tpu.dimension_semantics<parallel>], iteration_bounds = array<i64: 2>, scalar_prefetch = 0 : i64, scratch_operands = 1 : i64, tpu.core_type = #tpu.core_type<tc>, window_params = [{transform_indices = @transform_0, window_bounds = array<i64: 1, 4, 256>}, {pipeline_mode = #tpu.pipeline_mode<synchronous>, transform_indices = @transform_1, window_bounds = array<i64: 9, 8, 4>}, {pipeline_mode = #tpu.pipeline_mode<synchronous>, transform_indices = @transform_2, window_bounds = array<i64: 8, 1>}, {pipeline_mode = #tpu.pipeline_mode<synchronous>, transform_indices = @transform_3, window_bounds = array<i64: 9, 256>}, {pipeline_mode = #tpu.pipeline_mode<synchronous>, transform_indices = @transform_4, window_bounds = array<i64: 256, 64>}, {pipeline_mode = #tpu.pipeline_mode<synchronous>, transform_indices = @transform_5, window_bounds = array<i64: 9, 16, 8>}, {pipeline_mode = #tpu.pipeline_mode<synchronous>, transform_indices = @transform_6, window_bounds = array<i64: 16, 1>}, {pipeline_mode = #tpu.pipeline_mode<synchronous>, transform_indices = @transform_7, window_bounds = array<i64: 9, 64>}, {pipeline_mode = #tpu.pipeline_mode<synchronous>, transform_indices = @transform_8, window_bounds = array<i64: 64, 16>}, {pipeline_mode = #tpu.pipeline_mode<synchronous>, transform_indices = @transform_9, window_bounds = array<i64: 256, 32>}, {pipeline_mode = #tpu.pipeline_mode<synchronous>, transform_indices = @transform_10, window_bounds = array<i64: 1, 32>}, {transform_indices = @transform_11, window_bounds = array<i64: 1, 1, 32>}]} {
    %c0 = arith.constant 0 : index
    %c0_0 = arith.constant 0 : index
    %c0_1 = arith.constant 0 : index
    %0 = vector.load %arg1[%c0, %c0_0, %c0_1] : memref<1x4x256xf32, #tpu.memory_space<vmem>>, vector<1x4x256xf32>
    %1 = vector.shape_cast %0 : vector<1x4x256xf32> to vector<4x256xf32>
    %cst = arith.constant 0.000000e+00 : f32
    %2 = vector.broadcast %cst : f32 to vector<8x256xf32>
    %c17_i32 = arith.constant 17 : i32
    %3 = tpu.dynamic_rotate %1 by %c17_i32 dim 1 : vector<4x256xf32>, i32 -> vector<4x256xf32>
    %c0_2 = arith.constant 0 : index
    %c0_3 = arith.constant 0 : index
    %4 = vector.load %arg4[%c0_2, %c0_3] : memref<9x256xf32, #tpu.memory_space<vmem>>, vector<1x256xf32>
    %5 = vector.broadcast %4 : vector<1x256xf32> to vector<4x256xf32>
    %6 = arith.mulf %3, %5 : vector<4x256xf32>
    %c0_4 = arith.constant 0 : index
    %c0_5 = arith.constant 0 : index
    %c0_6 = arith.constant 0 : index
    %7 = vector.load %arg2[%c0_4, %c0_5, %c0_6] : memref<9x8x4xf32, #tpu.memory_space<vmem>>, vector<1x8x4xf32>
    %8 = vector.shape_cast %7 : vector<1x8x4xf32> to vector<8x4xf32>
    %cst_7 = arith.constant dense<0.000000e+00> : vector<8x256xf32>
    %9 = tpu.matmul %8, %6, %cst_7 {dimension_numbers = #tpu.dot_dimension_numbers<[1], [0], [0], [1], [0, 0, 1, 1], [], []>} : vector<8x4xf32>, vector<4x256xf32>, vector<8x256xf32> -> vector<8x256xf32>
    %10 = arith.addf %2, %9 : vector<8x256xf32>
    %c16_i32 = arith.constant 16 : i32
    %11 = tpu.dynamic_rotate %1 by %c16_i32 dim 1 : vector<4x256xf32>, i32 -> vector<4x256xf32>
    %c1 = arith.constant 1 : index
    %c0_8 = arith.constant 0 : index
    %12 = vector.load %arg4[%c1, %c0_8] : memref<9x256xf32, #tpu.memory_space<vmem>>, vector<1x256xf32>
    %13 = vector.broadcast %12 : vector<1x256xf32> to vector<4x256xf32>
    %14 = arith.mulf %11, %13 : vector<4x256xf32>
    %c1_9 = arith.constant 1 : index
    %c0_10 = arith.constant 0 : index
    %c0_11 = arith.constant 0 : index
    %15 = vector.load %arg2[%c1_9, %c0_10, %c0_11] : memref<9x8x4xf32, #tpu.memory_space<vmem>>, vector<1x8x4xf32>
    %16 = vector.shape_cast %15 : vector<1x8x4xf32> to vector<8x4xf32>
    %cst_12 = arith.constant dense<0.000000e+00> : vector<8x256xf32>
    %17 = tpu.matmul %16, %14, %cst_12 {dimension_numbers = #tpu.dot_dimension_numbers<[1], [0], [0], [1], [0, 0, 1, 1], [], []>} : vector<8x4xf32>, vector<4x256xf32>, vector<8x256xf32> -> vector<8x256xf32>
    %18 = arith.addf %10, %17 : vector<8x256xf32>
    %c15_i32 = arith.constant 15 : i32
    %19 = tpu.dynamic_rotate %1 by %c15_i32 dim 1 : vector<4x256xf32>, i32 -> vector<4x256xf32>
    %c2 = arith.constant 2 : index
    %c0_13 = arith.constant 0 : index
    %20 = vector.load %arg4[%c2, %c0_13] : memref<9x256xf32, #tpu.memory_space<vmem>>, vector<1x256xf32>
    %21 = vector.broadcast %20 : vector<1x256xf32> to vector<4x256xf32>
    %22 = arith.mulf %19, %21 : vector<4x256xf32>
    %c2_14 = arith.constant 2 : index
    %c0_15 = arith.constant 0 : index
    %c0_16 = arith.constant 0 : index
    %23 = vector.load %arg2[%c2_14, %c0_15, %c0_16] : memref<9x8x4xf32, #tpu.memory_space<vmem>>, vector<1x8x4xf32>
    %24 = vector.shape_cast %23 : vector<1x8x4xf32> to vector<8x4xf32>
    %cst_17 = arith.constant dense<0.000000e+00> : vector<8x256xf32>
    %25 = tpu.matmul %24, %22, %cst_17 {dimension_numbers = #tpu.dot_dimension_numbers<[1], [0], [0], [1], [0, 0, 1, 1], [], []>} : vector<8x4xf32>, vector<4x256xf32>, vector<8x256xf32> -> vector<8x256xf32>
    %26 = arith.addf %18, %25 : vector<8x256xf32>
    %c1_i32 = arith.constant 1 : i32
    %27 = tpu.dynamic_rotate %1 by %c1_i32 dim 1 : vector<4x256xf32>, i32 -> vector<4x256xf32>
    %c3 = arith.constant 3 : index
    %c0_18 = arith.constant 0 : index
    %28 = vector.load %arg4[%c3, %c0_18] : memref<9x256xf32, #tpu.memory_space<vmem>>, vector<1x256xf32>
    %29 = vector.broadcast %28 : vector<1x256xf32> to vector<4x256xf32>
    %30 = arith.mulf %27, %29 : vector<4x256xf32>
    %c3_19 = arith.constant 3 : index
    %c0_20 = arith.constant 0 : index
    %c0_21 = arith.constant 0 : index
    %31 = vector.load %arg2[%c3_19, %c0_20, %c0_21] : memref<9x8x4xf32, #tpu.memory_space<vmem>>, vector<1x8x4xf32>
    %32 = vector.shape_cast %31 : vector<1x8x4xf32> to vector<8x4xf32>
    %cst_22 = arith.constant dense<0.000000e+00> : vector<8x256xf32>
    %33 = tpu.matmul %32, %30, %cst_22 {dimension_numbers = #tpu.dot_dimension_numbers<[1], [0], [0], [1], [0, 0, 1, 1], [], []>} : vector<8x4xf32>, vector<4x256xf32>, vector<8x256xf32> -> vector<8x256xf32>
    %34 = arith.addf %26, %33 : vector<8x256xf32>
    %c4 = arith.constant 4 : index
    %c0_23 = arith.constant 0 : index
    %c0_24 = arith.constant 0 : index
    %35 = vector.load %arg2[%c4, %c0_23, %c0_24] : memref<9x8x4xf32, #tpu.memory_space<vmem>>, vector<1x8x4xf32>
    %36 = vector.shape_cast %35 : vector<1x8x4xf32> to vector<8x4xf32>
    %cst_25 = arith.constant dense<0.000000e+00> : vector<8x256xf32>
    %37 = tpu.matmul %36, %1, %cst_25 {dimension_numbers = #tpu.dot_dimension_numbers<[1], [0], [0], [1], [0, 0, 1, 1], [], []>} : vector<8x4xf32>, vector<4x256xf32>, vector<8x256xf32> -> vector<8x256xf32>
    %38 = arith.addf %34, %37 : vector<8x256xf32>
    %c255_i32 = arith.constant 255 : i32
    %39 = tpu.dynamic_rotate %1 by %c255_i32 dim 1 : vector<4x256xf32>, i32 -> vector<4x256xf32>
    %c5 = arith.constant 5 : index
    %c0_26 = arith.constant 0 : index
    %40 = vector.load %arg4[%c5, %c0_26] : memref<9x256xf32, #tpu.memory_space<vmem>>, vector<1x256xf32>
    %41 = vector.broadcast %40 : vector<1x256xf32> to vector<4x256xf32>
    %42 = arith.mulf %39, %41 : vector<4x256xf32>
    %c5_27 = arith.constant 5 : index
    %c0_28 = arith.constant 0 : index
    %c0_29 = arith.constant 0 : index
    %43 = vector.load %arg2[%c5_27, %c0_28, %c0_29] : memref<9x8x4xf32, #tpu.memory_space<vmem>>, vector<1x8x4xf32>
    %44 = vector.shape_cast %43 : vector<1x8x4xf32> to vector<8x4xf32>
    %cst_30 = arith.constant dense<0.000000e+00> : vector<8x256xf32>
    %45 = tpu.matmul %44, %42, %cst_30 {dimension_numbers = #tpu.dot_dimension_numbers<[1], [0], [0], [1], [0, 0, 1, 1], [], []>} : vector<8x4xf32>, vector<4x256xf32>, vector<8x256xf32> -> vector<8x256xf32>
    %46 = arith.addf %38, %45 : vector<8x256xf32>
    %c241_i32 = arith.constant 241 : i32
    %47 = tpu.dynamic_rotate %1 by %c241_i32 dim 1 : vector<4x256xf32>, i32 -> vector<4x256xf32>
    %c6 = arith.constant 6 : index
    %c0_31 = arith.constant 0 : index
    %48 = vector.load %arg4[%c6, %c0_31] : memref<9x256xf32, #tpu.memory_space<vmem>>, vector<1x256xf32>
    %49 = vector.broadcast %48 : vector<1x256xf32> to vector<4x256xf32>
    %50 = arith.mulf %47, %49 : vector<4x256xf32>
    %c6_32 = arith.constant 6 : index
    %c0_33 = arith.constant 0 : index
    %c0_34 = arith.constant 0 : index
    %51 = vector.load %arg2[%c6_32, %c0_33, %c0_34] : memref<9x8x4xf32, #tpu.memory_space<vmem>>, vector<1x8x4xf32>
    %52 = vector.shape_cast %51 : vector<1x8x4xf32> to vector<8x4xf32>
    %cst_35 = arith.constant dense<0.000000e+00> : vector<8x256xf32>
    %53 = tpu.matmul %52, %50, %cst_35 {dimension_numbers = #tpu.dot_dimension_numbers<[1], [0], [0], [1], [0, 0, 1, 1], [], []>} : vector<8x4xf32>, vector<4x256xf32>, vector<8x256xf32> -> vector<8x256xf32>
    %54 = arith.addf %46, %53 : vector<8x256xf32>
    %c240_i32 = arith.constant 240 : i32
    %55 = tpu.dynamic_rotate %1 by %c240_i32 dim 1 : vector<4x256xf32>, i32 -> vector<4x256xf32>
    %c7 = arith.constant 7 : index
    %c0_36 = arith.constant 0 : index
    %56 = vector.load %arg4[%c7, %c0_36] : memref<9x256xf32, #tpu.memory_space<vmem>>, vector<1x256xf32>
    %57 = vector.broadcast %56 : vector<1x256xf32> to vector<4x256xf32>
    %58 = arith.mulf %55, %57 : vector<4x256xf32>
    %c7_37 = arith.constant 7 : index
    %c0_38 = arith.constant 0 : index
    %c0_39 = arith.constant 0 : index
    %59 = vector.load %arg2[%c7_37, %c0_38, %c0_39] : memref<9x8x4xf32, #tpu.memory_space<vmem>>, vector<1x8x4xf32>
    %60 = vector.shape_cast %59 : vector<1x8x4xf32> to vector<8x4xf32>
    %cst_40 = arith.constant dense<0.000000e+00> : vector<8x256xf32>
    %61 = tpu.matmul %60, %58, %cst_40 {dimension_numbers = #tpu.dot_dimension_numbers<[1], [0], [0], [1], [0, 0, 1, 1], [], []>} : vector<8x4xf32>, vector<4x256xf32>, vector<8x256xf32> -> vector<8x256xf32>
    %62 = arith.addf %54, %61 : vector<8x256xf32>
    %c239_i32 = arith.constant 239 : i32
    %63 = tpu.dynamic_rotate %1 by %c239_i32 dim 1 : vector<4x256xf32>, i32 -> vector<4x256xf32>
    %c8 = arith.constant 8 : index
    %c0_41 = arith.constant 0 : index
    %64 = vector.load %arg4[%c8, %c0_41] : memref<9x256xf32, #tpu.memory_space<vmem>>, vector<1x256xf32>
    %65 = vector.broadcast %64 : vector<1x256xf32> to vector<4x256xf32>
    %66 = arith.mulf %63, %65 : vector<4x256xf32>
    %c8_42 = arith.constant 8 : index
    %c0_43 = arith.constant 0 : index
    %c0_44 = arith.constant 0 : index
    %67 = vector.load %arg2[%c8_42, %c0_43, %c0_44] : memref<9x8x4xf32, #tpu.memory_space<vmem>>, vector<1x8x4xf32>
    %68 = vector.shape_cast %67 : vector<1x8x4xf32> to vector<8x4xf32>
    %cst_45 = arith.constant dense<0.000000e+00> : vector<8x256xf32>
    %69 = tpu.matmul %68, %66, %cst_45 {dimension_numbers = #tpu.dot_dimension_numbers<[1], [0], [0], [1], [0, 0, 1, 1], [], []>} : vector<8x4xf32>, vector<4x256xf32>, vector<8x256xf32> -> vector<8x256xf32>
    %70 = arith.addf %62, %69 : vector<8x256xf32>
    %c0_46 = arith.constant 0 : index
    %c0_47 = arith.constant 0 : index
    %71 = vector.load %arg3[%c0_46, %c0_47] : memref<8x1xf32, #tpu.memory_space<vmem>>, vector<8x1xf32>
    %72 = vector.broadcast %71 : vector<8x1xf32> to vector<8x256xf32>
    %73 = arith.addf %70, %72 : vector<8x256xf32>
    %cst_48 = arith.constant 0.000000e+00 : f32
    %74 = vector.broadcast %cst_48 : f32 to vector<8x256xf32>
    %75 = arith.maximumf %73, %74 : vector<8x256xf32>
    %c0_49 = arith.constant 0 : index
    %c0_50 = arith.constant 0 : index
    %76 = vector.load %arg5[%c0_49, %c0_50] : memref<256x64xf32, #tpu.memory_space<vmem>>, vector<256x64xf32>
    %cst_51 = arith.constant dense<0.000000e+00> : vector<8x64xf32>
    %77 = tpu.matmul %75, %76, %cst_51 {dimension_numbers = #tpu.dot_dimension_numbers<[1], [0], [0], [1], [0, 0, 1, 1], [], []>} : vector<8x256xf32>, vector<256x64xf32>, vector<8x64xf32> -> vector<8x64xf32>
    %cst_52 = arith.constant 0.000000e+00 : f32
    %78 = vector.broadcast %cst_52 : f32 to vector<16x64xf32>
    %c9_i32 = arith.constant 9 : i32
    %79 = tpu.dynamic_rotate %77 by %c9_i32 dim 1 : vector<8x64xf32>, i32 -> vector<8x64xf32>
    %c0_53 = arith.constant 0 : index
    %c0_54 = arith.constant 0 : index
    %80 = vector.load %arg8[%c0_53, %c0_54] : memref<9x64xf32, #tpu.memory_space<vmem>>, vector<1x64xf32>
    %81 = vector.broadcast %80 : vector<1x64xf32> to vector<8x64xf32>
    %82 = arith.mulf %79, %81 : vector<8x64xf32>
    %c0_55 = arith.constant 0 : index
    %c0_56 = arith.constant 0 : index
    %c0_57 = arith.constant 0 : index
    %83 = vector.load %arg6[%c0_55, %c0_56, %c0_57] : memref<9x16x8xf32, #tpu.memory_space<vmem>>, vector<1x16x8xf32>
    %84 = vector.shape_cast %83 : vector<1x16x8xf32> to vector<16x8xf32>
    %cst_58 = arith.constant dense<0.000000e+00> : vector<16x64xf32>
    %85 = tpu.matmul %84, %82, %cst_58 {dimension_numbers = #tpu.dot_dimension_numbers<[1], [0], [0], [1], [0, 0, 1, 1], [], []>} : vector<16x8xf32>, vector<8x64xf32>, vector<16x64xf32> -> vector<16x64xf32>
    %86 = arith.addf %78, %85 : vector<16x64xf32>
    %c8_i32 = arith.constant 8 : i32
    %87 = tpu.dynamic_rotate %77 by %c8_i32 dim 1 : vector<8x64xf32>, i32 -> vector<8x64xf32>
    %c1_59 = arith.constant 1 : index
    %c0_60 = arith.constant 0 : index
    %88 = vector.load %arg8[%c1_59, %c0_60] : memref<9x64xf32, #tpu.memory_space<vmem>>, vector<1x64xf32>
    %89 = vector.broadcast %88 : vector<1x64xf32> to vector<8x64xf32>
    %90 = arith.mulf %87, %89 : vector<8x64xf32>
    %c1_61 = arith.constant 1 : index
    %c0_62 = arith.constant 0 : index
    %c0_63 = arith.constant 0 : index
    %91 = vector.load %arg6[%c1_61, %c0_62, %c0_63] : memref<9x16x8xf32, #tpu.memory_space<vmem>>, vector<1x16x8xf32>
    %92 = vector.shape_cast %91 : vector<1x16x8xf32> to vector<16x8xf32>
    %cst_64 = arith.constant dense<0.000000e+00> : vector<16x64xf32>
    %93 = tpu.matmul %92, %90, %cst_64 {dimension_numbers = #tpu.dot_dimension_numbers<[1], [0], [0], [1], [0, 0, 1, 1], [], []>} : vector<16x8xf32>, vector<8x64xf32>, vector<16x64xf32> -> vector<16x64xf32>
    %94 = arith.addf %86, %93 : vector<16x64xf32>
    %c7_i32 = arith.constant 7 : i32
    %95 = tpu.dynamic_rotate %77 by %c7_i32 dim 1 : vector<8x64xf32>, i32 -> vector<8x64xf32>
    %c2_65 = arith.constant 2 : index
    %c0_66 = arith.constant 0 : index
    %96 = vector.load %arg8[%c2_65, %c0_66] : memref<9x64xf32, #tpu.memory_space<vmem>>, vector<1x64xf32>
    %97 = vector.broadcast %96 : vector<1x64xf32> to vector<8x64xf32>
    %98 = arith.mulf %95, %97 : vector<8x64xf32>
    %c2_67 = arith.constant 2 : index
    %c0_68 = arith.constant 0 : index
    %c0_69 = arith.constant 0 : index
    %99 = vector.load %arg6[%c2_67, %c0_68, %c0_69] : memref<9x16x8xf32, #tpu.memory_space<vmem>>, vector<1x16x8xf32>
    %100 = vector.shape_cast %99 : vector<1x16x8xf32> to vector<16x8xf32>
    %cst_70 = arith.constant dense<0.000000e+00> : vector<16x64xf32>
    %101 = tpu.matmul %100, %98, %cst_70 {dimension_numbers = #tpu.dot_dimension_numbers<[1], [0], [0], [1], [0, 0, 1, 1], [], []>} : vector<16x8xf32>, vector<8x64xf32>, vector<16x64xf32> -> vector<16x64xf32>
    %102 = arith.addf %94, %101 : vector<16x64xf32>
    %c1_i32_71 = arith.constant 1 : i32
    %103 = tpu.dynamic_rotate %77 by %c1_i32_71 dim 1 : vector<8x64xf32>, i32 -> vector<8x64xf32>
    %c3_72 = arith.constant 3 : index
    %c0_73 = arith.constant 0 : index
    %104 = vector.load %arg8[%c3_72, %c0_73] : memref<9x64xf32, #tpu.memory_space<vmem>>, vector<1x64xf32>
    %105 = vector.broadcast %104 : vector<1x64xf32> to vector<8x64xf32>
    %106 = arith.mulf %103, %105 : vector<8x64xf32>
    %c3_74 = arith.constant 3 : index
    %c0_75 = arith.constant 0 : index
    %c0_76 = arith.constant 0 : index
    %107 = vector.load %arg6[%c3_74, %c0_75, %c0_76] : memref<9x16x8xf32, #tpu.memory_space<vmem>>, vector<1x16x8xf32>
    %108 = vector.shape_cast %107 : vector<1x16x8xf32> to vector<16x8xf32>
    %cst_77 = arith.constant dense<0.000000e+00> : vector<16x64xf32>
    %109 = tpu.matmul %108, %106, %cst_77 {dimension_numbers = #tpu.dot_dimension_numbers<[1], [0], [0], [1], [0, 0, 1, 1], [], []>} : vector<16x8xf32>, vector<8x64xf32>, vector<16x64xf32> -> vector<16x64xf32>
    %110 = arith.addf %102, %109 : vector<16x64xf32>
    %c4_78 = arith.constant 4 : index
    %c0_79 = arith.constant 0 : index
    %c0_80 = arith.constant 0 : index
    %111 = vector.load %arg6[%c4_78, %c0_79, %c0_80] : memref<9x16x8xf32, #tpu.memory_space<vmem>>, vector<1x16x8xf32>
    %112 = vector.shape_cast %111 : vector<1x16x8xf32> to vector<16x8xf32>
    %cst_81 = arith.constant dense<0.000000e+00> : vector<16x64xf32>
    %113 = tpu.matmul %112, %77, %cst_81 {dimension_numbers = #tpu.dot_dimension_numbers<[1], [0], [0], [1], [0, 0, 1, 1], [], []>} : vector<16x8xf32>, vector<8x64xf32>, vector<16x64xf32> -> vector<16x64xf32>
    %114 = arith.addf %110, %113 : vector<16x64xf32>
    %c63_i32 = arith.constant 63 : i32
    %115 = tpu.dynamic_rotate %77 by %c63_i32 dim 1 : vector<8x64xf32>, i32 -> vector<8x64xf32>
    %c5_82 = arith.constant 5 : index
    %c0_83 = arith.constant 0 : index
    %116 = vector.load %arg8[%c5_82, %c0_83] : memref<9x64xf32, #tpu.memory_space<vmem>>, vector<1x64xf32>
    %117 = vector.broadcast %116 : vector<1x64xf32> to vector<8x64xf32>
    %118 = arith.mulf %115, %117 : vector<8x64xf32>
    %c5_84 = arith.constant 5 : index
    %c0_85 = arith.constant 0 : index
    %c0_86 = arith.constant 0 : index
    %119 = vector.load %arg6[%c5_84, %c0_85, %c0_86] : memref<9x16x8xf32, #tpu.memory_space<vmem>>, vector<1x16x8xf32>
    %120 = vector.shape_cast %119 : vector<1x16x8xf32> to vector<16x8xf32>
    %cst_87 = arith.constant dense<0.000000e+00> : vector<16x64xf32>
    %121 = tpu.matmul %120, %118, %cst_87 {dimension_numbers = #tpu.dot_dimension_numbers<[1], [0], [0], [1], [0, 0, 1, 1], [], []>} : vector<16x8xf32>, vector<8x64xf32>, vector<16x64xf32> -> vector<16x64xf32>
    %122 = arith.addf %114, %121 : vector<16x64xf32>
    %c57_i32 = arith.constant 57 : i32
    %123 = tpu.dynamic_rotate %77 by %c57_i32 dim 1 : vector<8x64xf32>, i32 -> vector<8x64xf32>
    %c6_88 = arith.constant 6 : index
    %c0_89 = arith.constant 0 : index
    %124 = vector.load %arg8[%c6_88, %c0_89] : memref<9x64xf32, #tpu.memory_space<vmem>>, vector<1x64xf32>
    %125 = vector.broadcast %124 : vector<1x64xf32> to vector<8x64xf32>
    %126 = arith.mulf %123, %125 : vector<8x64xf32>
    %c6_90 = arith.constant 6 : index
    %c0_91 = arith.constant 0 : index
    %c0_92 = arith.constant 0 : index
    %127 = vector.load %arg6[%c6_90, %c0_91, %c0_92] : memref<9x16x8xf32, #tpu.memory_space<vmem>>, vector<1x16x8xf32>
    %128 = vector.shape_cast %127 : vector<1x16x8xf32> to vector<16x8xf32>
    %cst_93 = arith.constant dense<0.000000e+00> : vector<16x64xf32>
    %129 = tpu.matmul %128, %126, %cst_93 {dimension_numbers = #tpu.dot_dimension_numbers<[1], [0], [0], [1], [0, 0, 1, 1], [], []>} : vector<16x8xf32>, vector<8x64xf32>, vector<16x64xf32> -> vector<16x64xf32>
    %130 = arith.addf %122, %129 : vector<16x64xf32>
    %c56_i32 = arith.constant 56 : i32
    %131 = tpu.dynamic_rotate %77 by %c56_i32 dim 1 : vector<8x64xf32>, i32 -> vector<8x64xf32>
    %c7_94 = arith.constant 7 : index
    %c0_95 = arith.constant 0 : index
    %132 = vector.load %arg8[%c7_94, %c0_95] : memref<9x64xf32, #tpu.memory_space<vmem>>, vector<1x64xf32>
    %133 = vector.broadcast %132 : vector<1x64xf32> to vector<8x64xf32>
    %134 = arith.mulf %131, %133 : vector<8x64xf32>
    %c7_96 = arith.constant 7 : index
    %c0_97 = arith.constant 0 : index
    %c0_98 = arith.constant 0 : index
    %135 = vector.load %arg6[%c7_96, %c0_97, %c0_98] : memref<9x16x8xf32, #tpu.memory_space<vmem>>, vector<1x16x8xf32>
    %136 = vector.shape_cast %135 : vector<1x16x8xf32> to vector<16x8xf32>
    %cst_99 = arith.constant dense<0.000000e+00> : vector<16x64xf32>
    %137 = tpu.matmul %136, %134, %cst_99 {dimension_numbers = #tpu.dot_dimension_numbers<[1], [0], [0], [1], [0, 0, 1, 1], [], []>} : vector<16x8xf32>, vector<8x64xf32>, vector<16x64xf32> -> vector<16x64xf32>
    %138 = arith.addf %130, %137 : vector<16x64xf32>
    %c55_i32 = arith.constant 55 : i32
    %139 = tpu.dynamic_rotate %77 by %c55_i32 dim 1 : vector<8x64xf32>, i32 -> vector<8x64xf32>
    %c8_100 = arith.constant 8 : index
    %c0_101 = arith.constant 0 : index
    %140 = vector.load %arg8[%c8_100, %c0_101] : memref<9x64xf32, #tpu.memory_space<vmem>>, vector<1x64xf32>
    %141 = vector.broadcast %140 : vector<1x64xf32> to vector<8x64xf32>
    %142 = arith.mulf %139, %141 : vector<8x64xf32>
    %c8_102 = arith.constant 8 : index
    %c0_103 = arith.constant 0 : index
    %c0_104 = arith.constant 0 : index
    %143 = vector.load %arg6[%c8_102, %c0_103, %c0_104] : memref<9x16x8xf32, #tpu.memory_space<vmem>>, vector<1x16x8xf32>
    %144 = vector.shape_cast %143 : vector<1x16x8xf32> to vector<16x8xf32>
    %cst_105 = arith.constant dense<0.000000e+00> : vector<16x64xf32>
    %145 = tpu.matmul %144, %142, %cst_105 {dimension_numbers = #tpu.dot_dimension_numbers<[1], [0], [0], [1], [0, 0, 1, 1], [], []>} : vector<16x8xf32>, vector<8x64xf32>, vector<16x64xf32> -> vector<16x64xf32>
    %146 = arith.addf %138, %145 : vector<16x64xf32>
    %c0_106 = arith.constant 0 : index
    %c0_107 = arith.constant 0 : index
    %147 = vector.load %arg7[%c0_106, %c0_107] : memref<16x1xf32, #tpu.memory_space<vmem>>, vector<16x1xf32>
    %148 = vector.broadcast %147 : vector<16x1xf32> to vector<16x64xf32>
    %149 = arith.addf %146, %148 : vector<16x64xf32>
    %cst_108 = arith.constant 0.000000e+00 : f32
    %150 = vector.broadcast %cst_108 : f32 to vector<16x64xf32>
    %151 = arith.maximumf %149, %150 : vector<16x64xf32>
    %c0_109 = arith.constant 0 : index
    %c0_110 = arith.constant 0 : index
    %152 = vector.load %arg9[%c0_109, %c0_110] : memref<64x16xf32, #tpu.memory_space<vmem>>, vector<64x16xf32>
    %cst_111 = arith.constant dense<0.000000e+00> : vector<16x16xf32>
    %153 = tpu.matmul %151, %152, %cst_111 {dimension_numbers = #tpu.dot_dimension_numbers<[1], [0], [0], [1], [0, 0, 1, 1], [], []>} : vector<16x64xf32>, vector<64x16xf32>, vector<16x16xf32> -> vector<16x16xf32>
    %154 = vector.extract_strided_slice %153 {offsets = [0, 0], sizes = [1, 16], strides = [1, 1]} : vector<16x16xf32> to vector<1x16xf32>
    %c0_112 = arith.constant 0 : index
    %c0_113 = arith.constant 0 : index
    %155 = vector.load %arg13[%c0_112, %c0_113] : memref<1x256xf32, #tpu.memory_space<vmem>>, vector<1x16xf32>
    tpu.vector_store %arg13[%c0_112, %c0_113], %154 {strides = array<i32>} : memref<1x256xf32, #tpu.memory_space<vmem>>, vector<1x16xf32>,
    %156 = vector.extract_strided_slice %153 {offsets = [1, 0], sizes = [1, 16], strides = [1, 1]} : vector<16x16xf32> to vector<1x16xf32>
    %c0_114 = arith.constant 0 : index
    %c16 = arith.constant 16 : index
    %157 = vector.load %arg13[%c0_114, %c16] : memref<1x256xf32, #tpu.memory_space<vmem>>, vector<1x16xf32>
    tpu.vector_store %arg13[%c0_114, %c16], %156 {strides = array<i32>} : memref<1x256xf32, #tpu.memory_space<vmem>>, vector<1x16xf32>,
    %158 = vector.extract_strided_slice %153 {offsets = [2, 0], sizes = [1, 16], strides = [1, 1]} : vector<16x16xf32> to vector<1x16xf32>
    %c0_115 = arith.constant 0 : index
    %c32 = arith.constant 32 : index
    %159 = vector.load %arg13[%c0_115, %c32] : memref<1x256xf32, #tpu.memory_space<vmem>>, vector<1x16xf32>
    tpu.vector_store %arg13[%c0_115, %c32], %158 {strides = array<i32>} : memref<1x256xf32, #tpu.memory_space<vmem>>, vector<1x16xf32>,
    %160 = vector.extract_strided_slice %153 {offsets = [3, 0], sizes = [1, 16], strides = [1, 1]} : vector<16x16xf32> to vector<1x16xf32>
    %c0_116 = arith.constant 0 : index
    %c48 = arith.constant 48 : index
    %161 = vector.load %arg13[%c0_116, %c48] : memref<1x256xf32, #tpu.memory_space<vmem>>, vector<1x16xf32>
    tpu.vector_store %arg13[%c0_116, %c48], %160 {strides = array<i32>} : memref<1x256xf32, #tpu.memory_space<vmem>>, vector<1x16xf32>,
    %162 = vector.extract_strided_slice %153 {offsets = [4, 0], sizes = [1, 16], strides = [1, 1]} : vector<16x16xf32> to vector<1x16xf32>
    %c0_117 = arith.constant 0 : index
    %c64 = arith.constant 64 : index
    %163 = vector.load %arg13[%c0_117, %c64] : memref<1x256xf32, #tpu.memory_space<vmem>>, vector<1x16xf32>
    tpu.vector_store %arg13[%c0_117, %c64], %162 {strides = array<i32>} : memref<1x256xf32, #tpu.memory_space<vmem>>, vector<1x16xf32>,
    %164 = vector.extract_strided_slice %153 {offsets = [5, 0], sizes = [1, 16], strides = [1, 1]} : vector<16x16xf32> to vector<1x16xf32>
    %c0_118 = arith.constant 0 : index
    %c80 = arith.constant 80 : index
    %165 = vector.load %arg13[%c0_118, %c80] : memref<1x256xf32, #tpu.memory_space<vmem>>, vector<1x16xf32>
    tpu.vector_store %arg13[%c0_118, %c80], %164 {strides = array<i32>} : memref<1x256xf32, #tpu.memory_space<vmem>>, vector<1x16xf32>,
    %166 = vector.extract_strided_slice %153 {offsets = [6, 0], sizes = [1, 16], strides = [1, 1]} : vector<16x16xf32> to vector<1x16xf32>
    %c0_119 = arith.constant 0 : index
    %c96 = arith.constant 96 : index
    %167 = vector.load %arg13[%c0_119, %c96] : memref<1x256xf32, #tpu.memory_space<vmem>>, vector<1x16xf32>
    tpu.vector_store %arg13[%c0_119, %c96], %166 {strides = array<i32>} : memref<1x256xf32, #tpu.memory_space<vmem>>, vector<1x16xf32>,
    %168 = vector.extract_strided_slice %153 {offsets = [7, 0], sizes = [1, 16], strides = [1, 1]} : vector<16x16xf32> to vector<1x16xf32>
    %c0_120 = arith.constant 0 : index
    %c112 = arith.constant 112 : index
    %169 = vector.load %arg13[%c0_120, %c112] : memref<1x256xf32, #tpu.memory_space<vmem>>, vector<1x16xf32>
    tpu.vector_store %arg13[%c0_120, %c112], %168 {strides = array<i32>} : memref<1x256xf32, #tpu.memory_space<vmem>>, vector<1x16xf32>,
    %170 = vector.extract_strided_slice %153 {offsets = [8, 0], sizes = [1, 16], strides = [1, 1]} : vector<16x16xf32> to vector<1x16xf32>
    %c0_121 = arith.constant 0 : index
    %c128 = arith.constant 128 : index
    %171 = vector.load %arg13[%c0_121, %c128] : memref<1x256xf32, #tpu.memory_space<vmem>>, vector<1x16xf32>
    tpu.vector_store %arg13[%c0_121, %c128], %170 {strides = array<i32>} : memref<1x256xf32, #tpu.memory_space<vmem>>, vector<1x16xf32>,
    %172 = vector.extract_strided_slice %153 {offsets = [9, 0], sizes = [1, 16], strides = [1, 1]} : vector<16x16xf32> to vector<1x16xf32>
    %c0_122 = arith.constant 0 : index
    %c144 = arith.constant 144 : index
    %173 = vector.load %arg13[%c0_122, %c144] : memref<1x256xf32, #tpu.memory_space<vmem>>, vector<1x16xf32>
    tpu.vector_store %arg13[%c0_122, %c144], %172 {strides = array<i32>} : memref<1x256xf32, #tpu.memory_space<vmem>>, vector<1x16xf32>,
    %174 = vector.extract_strided_slice %153 {offsets = [10, 0], sizes = [1, 16], strides = [1, 1]} : vector<16x16xf32> to vector<1x16xf32>
    %c0_123 = arith.constant 0 : index
    %c160 = arith.constant 160 : index
    %175 = vector.load %arg13[%c0_123, %c160] : memref<1x256xf32, #tpu.memory_space<vmem>>, vector<1x16xf32>
    tpu.vector_store %arg13[%c0_123, %c160], %174 {strides = array<i32>} : memref<1x256xf32, #tpu.memory_space<vmem>>, vector<1x16xf32>,
    %176 = vector.extract_strided_slice %153 {offsets = [11, 0], sizes = [1, 16], strides = [1, 1]} : vector<16x16xf32> to vector<1x16xf32>
    %c0_124 = arith.constant 0 : index
    %c176 = arith.constant 176 : index
    %177 = vector.load %arg13[%c0_124, %c176] : memref<1x256xf32, #tpu.memory_space<vmem>>, vector<1x16xf32>
    tpu.vector_store %arg13[%c0_124, %c176], %176 {strides = array<i32>} : memref<1x256xf32, #tpu.memory_space<vmem>>, vector<1x16xf32>,
    %178 = vector.extract_strided_slice %153 {offsets = [12, 0], sizes = [1, 16], strides = [1, 1]} : vector<16x16xf32> to vector<1x16xf32>
    %c0_125 = arith.constant 0 : index
    %c192 = arith.constant 192 : index
    %179 = vector.load %arg13[%c0_125, %c192] : memref<1x256xf32, #tpu.memory_space<vmem>>, vector<1x16xf32>
    tpu.vector_store %arg13[%c0_125, %c192], %178 {strides = array<i32>} : memref<1x256xf32, #tpu.memory_space<vmem>>, vector<1x16xf32>,
    %180 = vector.extract_strided_slice %153 {offsets = [13, 0], sizes = [1, 16], strides = [1, 1]} : vector<16x16xf32> to vector<1x16xf32>
    %c0_126 = arith.constant 0 : index
    %c208 = arith.constant 208 : index
    %181 = vector.load %arg13[%c0_126, %c208] : memref<1x256xf32, #tpu.memory_space<vmem>>, vector<1x16xf32>
    tpu.vector_store %arg13[%c0_126, %c208], %180 {strides = array<i32>} : memref<1x256xf32, #tpu.memory_space<vmem>>, vector<1x16xf32>,
    %182 = vector.extract_strided_slice %153 {offsets = [14, 0], sizes = [1, 16], strides = [1, 1]} : vector<16x16xf32> to vector<1x16xf32>
    %c0_127 = arith.constant 0 : index
    %c224 = arith.constant 224 : index
    %183 = vector.load %arg13[%c0_127, %c224] : memref<1x256xf32, #tpu.memory_space<vmem>>, vector<1x16xf32>
    tpu.vector_store %arg13[%c0_127, %c224], %182 {strides = array<i32>} : memref<1x256xf32, #tpu.memory_space<vmem>>, vector<1x16xf32>,
    %184 = vector.extract_strided_slice %153 {offsets = [15, 0], sizes = [1, 16], strides = [1, 1]} : vector<16x16xf32> to vector<1x16xf32>
    %c0_128 = arith.constant 0 : index
    %c240 = arith.constant 240 : index
    %185 = vector.load %arg13[%c0_128, %c240] : memref<1x256xf32, #tpu.memory_space<vmem>>, vector<1x16xf32>
    tpu.vector_store %arg13[%c0_128, %c240], %184 {strides = array<i32>} : memref<1x256xf32, #tpu.memory_space<vmem>>, vector<1x16xf32>,
    %c0_129 = arith.constant 0 : index
    %c0_130 = arith.constant 0 : index
    %186 = vector.load %arg13[%c0_129, %c0_130] : memref<1x256xf32, #tpu.memory_space<vmem>>, vector<1x256xf32>
    %c0_131 = arith.constant 0 : index
    %c0_132 = arith.constant 0 : index
    %187 = vector.load %arg10[%c0_131, %c0_132] : memref<256x32xf32, #tpu.memory_space<vmem>>, vector<256x32xf32>
    %cst_133 = arith.constant dense<0.000000e+00> : vector<1x32xf32>
    %188 = tpu.matmul %186, %187, %cst_133 {dimension_numbers = #tpu.dot_dimension_numbers<[1], [0], [0], [1], [0, 0, 1, 1], [], []>} : vector<1x256xf32>, vector<256x32xf32>, vector<1x32xf32> -> vector<1x32xf32>
    %c0_134 = arith.constant 0 : index
    %c0_135 = arith.constant 0 : index
    %189 = vector.load %arg11[%c0_134, %c0_135] : memref<1x32xf32, #tpu.memory_space<vmem>>, vector<1x32xf32>
    %190 = arith.addf %188, %189 : vector<1x32xf32>
    %cst_136 = arith.constant 0.000000e+00 : f32
    %191 = vector.broadcast %cst_136 : f32 to vector<1x32xf32>
    %192 = arith.maximumf %190, %191 : vector<1x32xf32>
    %c0_137 = arith.constant 0 : index
    %c0_138 = arith.constant 0 : index
    %c0_139 = arith.constant 0 : index
    %193 = vector.load %arg12[%c0_137, %c0_138, %c0_139] : memref<1x1x32xf32, #tpu.memory_space<vmem>>, vector<1x1x32xf32>
    %194 = vector.shape_cast %193 : vector<1x1x32xf32> to vector<1x32xf32>
    %195 = vector.shape_cast %192 : vector<1x32xf32> to vector<1x1x32xf32>
    tpu.vector_store %arg12[%c0_137, %c0_138, %c0_139], %195 {strides = array<i32>} : memref<1x1x32xf32, #tpu.memory_space<vmem>>, vector<1x1x32xf32>,
    return
  }
  func.func @transform_0(%arg0: i32) -> (i32, i32, i32) {
    %c0_i32 = arith.constant 0 : i32
    %c0_i32_0 = arith.constant 0 : i32
    %c0_i32_1 = arith.constant 0 : i32
    return %arg0, %c0_i32, %c0_i32_0 : i32, i32, i32
  }
  func.func @transform_1(%arg0: i32) -> (i32, i32, i32) {
    %c0_i32 = arith.constant 0 : i32
    %c0_i32_0 = arith.constant 0 : i32
    %c0_i32_1 = arith.constant 0 : i32
    %c0_i32_2 = arith.constant 0 : i32
    return %c0_i32, %c0_i32_0, %c0_i32_1 : i32, i32, i32
  }
  func.func @transform_2(%arg0: i32) -> (i32, i32) {
    %c0_i32 = arith.constant 0 : i32
    %c0_i32_0 = arith.constant 0 : i32
    %c0_i32_1 = arith.constant 0 : i32
    return %c0_i32, %c0_i32_0 : i32, i32
  }
  func.func @transform_3(%arg0: i32) -> (i32, i32) {
    %c0_i32 = arith.constant 0 : i32
    %c0_i32_0 = arith.constant 0 : i32
    %c0_i32_1 = arith.constant 0 : i32
    return %c0_i32, %c0_i32_0 : i32, i32
  }
  func.func @transform_4(%arg0: i32) -> (i32, i32) {
    %c0_i32 = arith.constant 0 : i32
    %c0_i32_0 = arith.constant 0 : i32
    %c0_i32_1 = arith.constant 0 : i32
    return %c0_i32, %c0_i32_0 : i32, i32
  }
  func.func @transform_5(%arg0: i32) -> (i32, i32, i32) {
    %c0_i32 = arith.constant 0 : i32
    %c0_i32_0 = arith.constant 0 : i32
    %c0_i32_1 = arith.constant 0 : i32
    %c0_i32_2 = arith.constant 0 : i32
    return %c0_i32, %c0_i32_0, %c0_i32_1 : i32, i32, i32
  }
  func.func @transform_6(%arg0: i32) -> (i32, i32) {
    %c0_i32 = arith.constant 0 : i32
    %c0_i32_0 = arith.constant 0 : i32
    %c0_i32_1 = arith.constant 0 : i32
    return %c0_i32, %c0_i32_0 : i32, i32
  }
  func.func @transform_7(%arg0: i32) -> (i32, i32) {
    %c0_i32 = arith.constant 0 : i32
    %c0_i32_0 = arith.constant 0 : i32
    %c0_i32_1 = arith.constant 0 : i32
    return %c0_i32, %c0_i32_0 : i32, i32
  }
  func.func @transform_8(%arg0: i32) -> (i32, i32) {
    %c0_i32 = arith.constant 0 : i32
    %c0_i32_0 = arith.constant 0 : i32
    %c0_i32_1 = arith.constant 0 : i32
    return %c0_i32, %c0_i32_0 : i32, i32
  }
  func.func @transform_9(%arg0: i32) -> (i32, i32) {
    %c0_i32 = arith.constant 0 : i32
    %c0_i32_0 = arith.constant 0 : i32
    %c0_i32_1 = arith.constant 0 : i32
    return %c0_i32, %c0_i32_0 : i32, i32
  }
  func.func @transform_10(%arg0: i32) -> (i32, i32) {
    %c0_i32 = arith.constant 0 : i32
    %c0_i32_0 = arith.constant 0 : i32
    %c0_i32_1 = arith.constant 0 : i32
    return %c0_i32, %c0_i32_0 : i32, i32
  }
  func.func @transform_11(%arg0: i32) -> (i32, i32, i32) {
    %c0_i32 = arith.constant 0 : i32
    %c0_i32_0 = arith.constant 0 : i32
    %c0_i32_1 = arith.constant 0 : i32
    return %arg0, %c0_i32, %c0_i32_0 : i32, i32, i32
  }
}

</mosaic_0001>

<llo_original>
// kernel: modified_model_forward.1
$region0: #{modified_model_forward.1}
  #allocation0 [shape = 'u32[]', space=smem, size = 0x4, offset = 0x4, fixed_abs, tag = 'smem constant byte address 0x4 - core index']
  #allocation1 [shape = 'u32[144,128]{1,0:T(1,128)}', space=vmem, size = 0x12000, scoped, tag = 'internal scratch']
  #allocation2 [shape = 'f32[1,256]{1,0:T(1,128)}', space=vmem, size = 0x400, scoped, tag = 'scratch operand']
  %s0 = inlined_call_operand.vmem [shape: f32[2,4,256], index: 0, kind: input, shape index: {}]
  %s1 = inlined_call_operand.vmem [shape: f32[9,8,4], index: 1, kind: input, shape index: {}]
  %s2 = inlined_call_operand.vmem [shape: f32[8,1], index: 2, kind: input, shape index: {}]
  %s3 = inlined_call_operand.vmem [shape: f32[9,256], index: 3, kind: input, shape index: {}]
  %s4 = inlined_call_operand.vmem [shape: f32[256,64], index: 4, kind: input, shape index: {}]
  %s5 = inlined_call_operand.vmem [shape: f32[9,16,8], index: 5, kind: input, shape index: {}]
  %s6 = inlined_call_operand.vmem [shape: f32[16,1], index: 6, kind: input, shape index: {}]
  %s7 = inlined_call_operand.vmem [shape: f32[9,64], index: 7, kind: input, shape index: {}]
  %s8 = inlined_call_operand.vmem [shape: f32[64,16], index: 8, kind: input, shape index: {}]
  %s9 = inlined_call_operand.vmem [shape: f32[256,32], index: 9, kind: input, shape index: {}]
  %s10 = inlined_call_operand.vmem [shape: f32[1,32], index: 10, kind: input, shape index: {}]
  %s11 = inlined_call_operand.hbm [shape: f32[2,1,32], index: 11, kind: output, shape index: {}]
  %s12 = sld [smem:[#allocation0]]
  $region77: #{modified_model_forward.1} parent=0
    _
  %s14 = ssub.s32 1, %s12
  %s15 = scalar_select 0, %s14, %s12
  $region1: #{modified_model_forward.1} parent=0
    #allocation3 [shape = 'u8[1024]{0}', space=vmem, size = 0x400, scoped, tag = 'output window, operand 0']
    #allocation4 [shape = 's32[2]{0}', space=sflag, size = 0x8, scoped, tag = 'scoped memory for modified_model_forward.1']
    %16 = vsyncpa [#allocation4], 0
    %s17 = scalar_lea.sflag [#allocation4], 1
    %18 = vsyncpa %s17, 0
    loop: start=0, step=1, limit=4
    $region2: #{modified_model_forward.1} parent=1 // loop_pre_header
      _
    $region3: #{modified_model_forward.1} parent=1 // loop_header
      %s20 = sphi 0, %s24
      %p21 = scmp.ge.s32.totalorder %s20, 4
      %s30 = sphi 0, %s32
      %s33 = sphi 0, %s30
      %s34 = sphi 0, %s33
      %s50 = sphi 0, %s34
      %s54 = sphi 0, %s54
      %s56 = sphi 0, %s54
      %s57 = sphi 0, %s56
      %s71 = sphi 0, %s57
      %s75 = sphi 0, %s75
      %s77 = sphi 0, %s75
      %s78 = sphi 0, %s77
      %s92 = sphi 0, %s78
      %s96 = sphi 0, %s96
      %s98 = sphi 0, %s96
      %s99 = sphi 0, %s98
      %s113 = sphi 0, %s99
      %s117 = sphi 0, %s117
      %s119 = sphi 0, %s117
      %s120 = sphi 0, %s119
      %s134 = sphi 0, %s120
      %s138 = sphi 0, %s138
      %s140 = sphi 0, %s138
      %s141 = sphi 0, %s140
      %s155 = sphi 0, %s141
      %s159 = sphi 0, %s159
      %s161 = sphi 0, %s159
      %s162 = sphi 0, %s161
      %s176 = sphi 0, %s162
      %s180 = sphi 0, %s180
      %s182 = sphi 0, %s180
      %s183 = sphi 0, %s182
      %s197 = sphi 0, %s183
      %s201 = sphi 0, %s201
      %s203 = sphi 0, %s201
      %s204 = sphi 0, %s203
      %s218 = sphi 0, %s204
      %s222 = sphi 0, %s222
      %s224 = sphi 0, %s222
      %s225 = sphi 0, %s224
      %s239 = sphi 0, %s225
      %s243 = sphi 0, %s243
      %s245 = sphi 0, %s243
      %s246 = sphi 0, %s245
      %s260 = sphi 0, %s246
      %s266 = sphi 0, %s268
      %s269 = sphi 0, %s266
      %s270 = sphi 0, %s269
      %s286 = sphi 0, %s270
    $region4: #{modified_model_forward.1} parent=1 // loop_header_branch
      %23 = sbr.rel (%p21) target = $region8
    $region5: #{modified_model_forward.1} parent=1 // loop_body
      %s25 = ssub.s32 %s20, 1
      %s26 = ssub.s32 %s20, 2
      %s27 = sadd.s32 %s20, 1
      %s28 = ssub.s32 %s20, %s27
      %p29 = scmp.eq.s32.totalorder %s28, 0
      %s31 = sadd.s32 %s30, 1
      %s32 = scalar_select %p29, %s30, %s31
      %p35 = pneg %p29
      %p36 = scmp.eq.s32.totalorder %s20, 1
      %p37 = por %p35, %p36
      %p38 = scmp.ne.s32.totalorder %s30, %s33
      %p39 = scmp.eq.s32.totalorder %s20, 0
      %p40 = por %p38, %p39
      %p41 = scmp.ne.s32.totalorder %s30, %s33
      %p42 = scmp.eq.s32.totalorder %s25, 1
      %p43 = por %p41, %p42
      %p44 = scmp.ne.s32.totalorder %s33, %s34
      %p45 = scmp.eq.s32.totalorder %s25, 0
      %p46 = por %p44, %p45
      %p47 = scmp.ne.s32.totalorder %s33, %s34
      %p48 = scmp.eq.s32.totalorder %s26, 1
      %p49 = por %p47, %p48
      %p51 = scmp.ne.s32.totalorder %s34, %s50
      %p52 = scmp.eq.s32.totalorder %s26, 0
      %p53 = por %p51, %p52
      %s55 = sadd.s32 %s54, 1
      %p58 = scmp.eq.s32.totalorder %s20, 1
      %p59 = scmp.ne.s32.totalorder %s54, %s56
      %p60 = scmp.eq.s32.totalorder %s20, 0
      %p61 = por %p59, %p60
      %p62 = scmp.ne.s32.totalorder %s54, %s56
      %p63 = scmp.eq.s32.totalorder %s25, 1
      %p64 = por %p62, %p63
      %p65 = scmp.ne.s32.totalorder %s56, %s57
      %p66 = scmp.eq.s32.totalorder %s25, 0
      %p67 = por %p65, %p66
      %p68 = scmp.ne.s32.totalorder %s56, %s57
      %p69 = scmp.eq.s32.totalorder %s26, 1
      %p70 = por %p68, %p69
      %p72 = scmp.ne.s32.totalorder %s57, %s71
      %p73 = scmp.eq.s32.totalorder %s26, 0
      %p74 = por %p72, %p73
      %s76 = sadd.s32 %s75, 1
      %p79 = scmp.eq.s32.totalorder %s20, 1
      %p80 = scmp.ne.s32.totalorder %s75, %s77
      %p81 = scmp.eq.s32.totalorder %s20, 0
      %p82 = por %p80, %p81
      %p83 = scmp.ne.s32.totalorder %s75, %s77
      %p84 = scmp.eq.s32.totalorder %s25, 1
      %p85 = por %p83, %p84
      %p86 = scmp.ne.s32.totalorder %s77, %s78
      %p87 = scmp.eq.s32.totalorder %s25, 0
      %p88 = por %p86, %p87
      %p89 = scmp.ne.s32.totalorder %s77, %s78
      %p90 = scmp.eq.s32.totalorder %s26, 1
      %p91 = por %p89, %p90
      %p93 = scmp.ne.s32.totalorder %s78, %s92
      %p94 = scmp.eq.s32.totalorder %s26, 0
      %p95 = por %p93, %p94
      %s97 = sadd.s32 %s96, 1
      %p100 = scmp.eq.s32.totalorder %s20, 1
      %p101 = scmp.ne.s32.totalorder %s96, %s98
      %p102 = scmp.eq.s32.totalorder %s20, 0
      %p103 = por %p101, %p102
      %p104 = scmp.ne.s32.totalorder %s96, %s98
      %p105 = scmp.eq.s32.totalorder %s25, 1
      %p106 = por %p104, %p105
      %p107 = scmp.ne.s32.totalorder %s98, %s99
      %p108 = scmp.eq.s32.totalorder %s25, 0
      %p109 = por %p107, %p108
      %p110 = scmp.ne.s32.totalorder %s98, %s99
      %p111 = scmp.eq.s32.totalorder %s26, 1
      %p112 = por %p110, %p111
      %p114 = scmp.ne.s32.totalorder %s99, %s113
      %p115 = scmp.eq.s32.totalorder %s26, 0
      %p116 = por %p114, %p115
      %s118 = sadd.s32 %s117, 1
      %p121 = scmp.eq.s32.totalorder %s20, 1
      %p122 = scmp.ne.s32.totalorder %s117, %s119
      %p123 = scmp.eq.s32.totalorder %s20, 0
      %p124 = por %p122, %p123
      %p125 = scmp.ne.s32.totalorder %s117, %s119
      %p126 = scmp.eq.s32.totalorder %s25, 1
      %p127 = por %p125, %p126
      %p128 = scmp.ne.s32.totalorder %s119, %s120
      %p129 = scmp.eq.s32.totalorder %s25, 0
      %p130 = por %p128, %p129
      %p131 = scmp.ne.s32.totalorder %s119, %s120
      %p132 = scmp.eq.s32.totalorder %s26, 1
      %p133 = por %p131, %p132
      %p135 = scmp.ne.s32.totalorder %s120, %s134
      %p136 = scmp.eq.s32.totalorder %s26, 0
      %p137 = por %p135, %p136
      %s139 = sadd.s32 %s138, 1
      %p142 = scmp.eq.s32.totalorder %s20, 1
      %p143 = scmp.ne.s32.totalorder %s138, %s140
      %p144 = scmp.eq.s32.totalorder %s20, 0
      %p145 = por %p143, %p144
      %p146 = scmp.ne.s32.totalorder %s138, %s140
      %p147 = scmp.eq.s32.totalorder %s25, 1
      %p148 = por %p146, %p147
      %p149 = scmp.ne.s32.totalorder %s140, %s141
      %p150 = scmp.eq.s32.totalorder %s25, 0
      %p151 = por %p149, %p150
      %p152 = scmp.ne.s32.totalorder %s140, %s141
      %p153 = scmp.eq.s32.totalorder %s26, 1
      %p154 = por %p152, %p153
      %p156 = scmp.ne.s32.totalorder %s141, %s155
      %p157 = scmp.eq.s32.totalorder %s26, 0
      %p158 = por %p156, %p157
      %s160 = sadd.s32 %s159, 1
      %p163 = scmp.eq.s32.totalorder %s20, 1
      %p164 = scmp.ne.s32.totalorder %s159, %s161
      %p165 = scmp.eq.s32.totalorder %s20, 0
      %p166 = por %p164, %p165
      %p167 = scmp.ne.s32.totalorder %s159, %s161
      %p168 = scmp.eq.s32.totalorder %s25, 1
      %p169 = por %p167, %p168
      %p170 = scmp.ne.s32.totalorder %s161, %s162
      %p171 = scmp.eq.s32.totalorder %s25, 0
      %p172 = por %p170, %p171
      %p173 = scmp.ne.s32.totalorder %s161, %s162
      %p174 = scmp.eq.s32.totalorder %s26, 1
      %p175 = por %p173, %p174
      %p177 = scmp.ne.s32.totalorder %s162, %s176
      %p178 = scmp.eq.s32.totalorder %s26, 0
      %p179 = por %p177, %p178
      %s181 = sadd.s32 %s180, 1
      %p184 = scmp.eq.s32.totalorder %s20, 1
      %p185 = scmp.ne.s32.totalorder %s180, %s182
      %p186 = scmp.eq.s32.totalorder %s20, 0
      %p187 = por %p185, %p186
      %p188 = scmp.ne.s32.totalorder %s180, %s182
      %p189 = scmp.eq.s32.totalorder %s25, 1
      %p190 = por %p188, %p189
      %p191 = scmp.ne.s32.totalorder %s182, %s183
      %p192 = scmp.eq.s32.totalorder %s25, 0
      %p193 = por %p191, %p192
      %p194 = scmp.ne.s32.totalorder %s182, %s183
      %p195 = scmp.eq.s32.totalorder %s26, 1
      %p196 = por %p194, %p195
      %p198 = scmp.ne.s32.totalorder %s183, %s197
      %p199 = scmp.eq.s32.totalorder %s26, 0
      %p200 = por %p198, %p199
      %s202 = sadd.s32 %s201, 1
      %p205 = scmp.eq.s32.totalorder %s20, 1
      %p206 = scmp.ne.s32.totalorder %s201, %s203
      %p207 = scmp.eq.s32.totalorder %s20, 0
      %p208 = por %p206, %p207
      %p209 = scmp.ne.s32.totalorder %s201, %s203
      %p210 = scmp.eq.s32.totalorder %s25, 1
      %p211 = por %p209, %p210
      %p212 = scmp.ne.s32.totalorder %s203, %s204
      %p213 = scmp.eq.s32.totalorder %s25, 0
      %p214 = por %p212, %p213
      %p215 = scmp.ne.s32.totalorder %s203, %s204
      %p216 = scmp.eq.s32.totalorder %s26, 1
      %p217 = por %p215, %p216
      %p219 = scmp.ne.s32.totalorder %s204, %s218
      %p220 = scmp.eq.s32.totalorder %s26, 0
      %p221 = por %p219, %p220
      %s223 = sadd.s32 %s222, 1
      %p226 = scmp.eq.s32.totalorder %s20, 1
      %p227 = scmp.ne.s32.totalorder %s222, %s224
      %p228 = scmp.eq.s32.totalorder %s20, 0
      %p229 = por %p227, %p228
      %p230 = scmp.ne.s32.totalorder %s222, %s224
      %p231 = scmp.eq.s32.totalorder %s25, 1
      %p232 = por %p230, %p231
      %p233 = scmp.ne.s32.totalorder %s224, %s225
      %p234 = scmp.eq.s32.totalorder %s25, 0
      %p235 = por %p233, %p234
      %p236 = scmp.ne.s32.totalorder %s224, %s225
      %p237 = scmp.eq.s32.totalorder %s26, 1
      %p238 = por %p236, %p237
      %p240 = scmp.ne.s32.totalorder %s225, %s239
      %p241 = scmp.eq.s32.totalorder %s26, 0
      %p242 = por %p240, %p241
      %s244 = sadd.s32 %s243, 1
      %p247 = scmp.eq.s32.totalorder %s20, 1
      %p248 = scmp.ne.s32.totalorder %s243, %s245
      %p249 = scmp.eq.s32.totalorder %s20, 0
      %p250 = por %p248, %p249
      %p251 = scmp.ne.s32.totalorder %s243, %s245
      %p252 = scmp.eq.s32.totalorder %s25, 1
      %p253 = por %p251, %p252
      %p254 = scmp.ne.s32.totalorder %s245, %s246
      %p255 = scmp.eq.s32.totalorder %s25, 0
      %p256 = por %p254, %p255
      %p257 = scmp.ne.s32.totalorder %s245, %s246
      %p258 = scmp.eq.s32.totalorder %s26, 1
      %p259 = por %p257, %p258
      %p261 = scmp.ne.s32.totalorder %s246, %s260
      %p262 = scmp.eq.s32.totalorder %s26, 0
      %p263 = por %p261, %p262
      %s264 = ssub.s32 %s20, %s27
      %p265 = scmp.eq.s32.totalorder %s264, 0
      %s267 = sadd.s32 %s266, 1
      %s268 = scalar_select %p265, %s266, %s267
      %p271 = pneg %p265
      %p272 = scmp.eq.s32.totalorder %s20, 1
      %p273 = por %p271, %p272
      %p274 = scmp.ne.s32.totalorder %s266, %s269
      %p275 = scmp.eq.s32.totalorder %s20, 0
      %p276 = por %p274, %p275
      %p277 = scmp.ne.s32.totalorder %s266, %s269
      %p278 = scmp.eq.s32.totalorder %s25, 1
      %p279 = por %p277, %p278
      %p280 = scmp.ne.s32.totalorder %s269, %s270
      %p281 = scmp.eq.s32.totalorder %s25, 0
      %p282 = por %p280, %p281
      %p283 = scmp.ne.s32.totalorder %s269, %s270
      %p284 = scmp.eq.s32.totalorder %s26, 1
      %p285 = por %p283, %p284
      %p287 = scmp.ne.s32.totalorder %s270, %s286
      %p288 = scmp.eq.s32.totalorder %s26, 0
      %p289 = por %p287, %p288
      %p290 = scmp.le.s32.totalorder 1, %s20
      %p291 = scmp.lt.s32.totalorder %s20, 3
      %p292 = pnand %p290, %p291
      %p293 = pneg %p292
      // Predicated region
      $region9: #{modified_model_forward.1} parent=5 // pred_check
        _
      $region10: #{modified_model_forward.1} parent=5 // pred_check_branch
        %295 = sbr.rel (%p292) target = $region12
      $region11: #{modified_model_forward.1} parent=5 // pred_region
        %s296 = ssub.s32 %s20, 1
        // Predicated region
        $region13: #{modified_model_forward.1} parent=11 // pred_check
          %p297 = pneg %p67
        $region14: #{modified_model_forward.1} parent=11 // pred_check_branch
          %299 = sbr.rel (%p297) target = $region16
        $region15: #{modified_model_forward.1} parent=11 // pred_region
          _
        $region16: #{modified_model_forward.1} parent=11 // pred_fallthru
          _
        // Predicated region
        $region17: #{modified_model_forward.1} parent=11 // pred_check
          %p300 = pneg %p88
        $region18: #{modified_model_forward.1} parent=11 // pred_check_branch
          %302 = sbr.rel (%p300) target = $region20
        $region19: #{modified_model_forward.1} parent=11 // pred_region
          _
        $region20: #{modified_model_forward.1} parent=11 // pred_fallthru
          _
        // Predicated region
        $region21: #{modified_model_forward.1} parent=11 // pred_check
          %p303 = pneg %p109
        $region22: #{modified_model_forward.1} parent=11 // pred_check_branch
          %305 = sbr.rel (%p303) target = $region24
        $region23: #{modified_model_forward.1} parent=11 // pred_region
          _
        $region24: #{modified_model_forward.1} parent=11 // pred_fallthru
          _
        // Predicated region
        $region25: #{modified_model_forward.1} parent=11 // pred_check
          %p306 = pneg %p130
        $region26: #{modified_model_forward.1} parent=11 // pred_check_branch
          %308 = sbr.rel (%p306) target = $region28
        $region27: #{modified_model_forward.1} parent=11 // pred_region
          _
        $region28: #{modified_model_forward.1} parent=11 // pred_fallthru
          _
        // Predicated region
        $region29: #{modified_model_forward.1} parent=11 // pred_check
          %p309 = pneg %p151
        $region30: #{modified_model_forward.1} parent=11 // pred_check_branch
          %311 = sbr.rel (%p309) target = $region32
        $region31: #{modified_model_forward.1} parent=11 // pred_region
          _
        $region32: #{modified_model_forward.1} parent=11 // pred_fallthru
          _
        // Predicated region
        $region33: #{modified_model_forward.1} parent=11 // pred_check
          %p312 = pneg %p172
        $region34: #{modified_model_forward.1} parent=11 // pred_check_branch
          %314 = sbr.rel (%p312) target = $region36
        $region35: #{modified_model_forward.1} parent=11 // pred_region
          _
        $region36: #{modified_model_forward.1} parent=11 // pred_fallthru
          _
        // Predicated region
        $region37: #{modified_model_forward.1} parent=11 // pred_check
          %p315 = pneg %p193
        $region38: #{modified_model_forward.1} parent=11 // pred_check_branch
          %317 = sbr.rel (%p315) target = $region40
        $region39: #{modified_model_forward.1} parent=11 // pred_region
          _
        $region40: #{modified_model_forward.1} parent=11 // pred_fallthru
          _
        // Predicated region
        $region41: #{modified_model_forward.1} parent=11 // pred_check
          %p318 = pneg %p214
        $region42: #{modified_model_forward.1} parent=11 // pred_check_branch
          %320 = sbr.rel (%p318) target = $region44
        $region43: #{modified_model_forward.1} parent=11 // pred_region
          _
        $region44: #{modified_model_forward.1} parent=11 // pred_fallthru
          _
        // Predicated region
        $region45: #{modified_model_forward.1} parent=11 // pred_check
          %p321 = pneg %p235
        $region46: #{modified_model_forward.1} parent=11 // pred_check_branch
          %323 = sbr.rel (%p321) target = $region48
        $region47: #{modified_model_forward.1} parent=11 // pred_region
          _
        $region48: #{modified_model_forward.1} parent=11 // pred_fallthru
          _
        // Predicated region
        $region49: #{modified_model_forward.1} parent=11 // pred_check
          %p324 = pneg %p256
        $region50: #{modified_model_forward.1} parent=11 // pred_check_branch
          %326 = sbr.rel (%p324) target = $region52
        $region51: #{modified_model_forward.1} parent=11 // pred_region
          _
        $region52: #{modified_model_forward.1} parent=11 // pred_fallthru
          _
      $region12: #{modified_model_forward.1} parent=5 // pred_fallthru
        _
      %p327 = scmp.lt.s32.totalorder %s20, 2
      // Predicated region
      $region53: #{modified_model_forward.1} parent=5 // pred_check
        %p328 = pneg %p327
      $region54: #{modified_model_forward.1} parent=5 // pred_check_branch
        %330 = sbr.rel (%p328) target = $region56
      $region55: #{modified_model_forward.1} parent=5 // pred_region
        // Predicated region
        $region57: #{modified_model_forward.1} parent=55 // pred_check
          %p331 = pneg %p40
        $region58: #{modified_model_forward.1} parent=55 // pred_check_branch
          %333 = sbr.rel (%p331) target = $region60
        $region59: #{modified_model_forward.1} parent=55 // pred_region
          %p334 = scmp.lt.s32.totalorder %s20, 1
          %s335 = scalar_select %p334, %s20, 1
          %s336 = smul.addr %s335, 2
          %s337 = smul.addr %s336, 4
          %s338 = scalar_lea.vmem %s0, %s337
        $region60: #{modified_model_forward.1} parent=55 // pred_fallthru
          _
      $region56: #{modified_model_forward.1} parent=5 // pred_fallthru
        _
      %p339 = scmp.le.s32.totalorder 1, %s20
      %p340 = scmp.lt.s32.totalorder %s20, 3
      %p341 = pnand %p339, %p340
      %p342 = pneg %p341
      // Predicated region
      $region61: #{modified_model_forward.1} parent=5 // pred_check
        _
      $region62: #{modified_model_forward.1} parent=5 // pred_check_branch
        %344 = sbr.rel (%p341) target = $region64
      $region63: #{modified_model_forward.1} parent=5 // pred_region
        %s345 = ssub.s32 %s20, 1
        %p346 = scmp.lt.s32.totalorder %s25, 1
        %s347 = scalar_select %p346, %s25, 1
        %s348 = smul.addr %s347, 2
        %s349 = smul.addr %s348, 4
        %s350 = scalar_lea.vmem %s0, %s349
        %p351 = pneg %p46
        %p352 = pneg %p43
        %p353 = pneg %p67
        %p354 = pneg %p64
        %p355 = pneg %p88
        %p356 = pneg %p85
        %p357 = pneg %p109
        %p358 = pneg %p106
        %p359 = pneg %p130
        %p360 = pneg %p127
        %p361 = pneg %p151
        %p362 = pneg %p148
        %p363 = pneg %p172
        %p364 = pneg %p169
        %p365 = pneg %p193
        %p366 = pneg %p190
        %p367 = pneg %p214
        %p368 = pneg %p211
        %p369 = pneg %p235
        %p370 = pneg %p232
        %p371 = pneg %p256
        %p372 = pneg %p253
        %p373 = pneg %p282
        %p374 = pneg %p279
        %s375 = sand.u32 %s269, 1
        %s376 = scalar_lea.sflag [#allocation4], %s375
        %s377 = sand.u32 %s269, 1
        %s378 = scalar_lea.vmem [#allocation3], %s377
        %p379 = scmp.lt.s32.totalorder %s25, 1
        %s380 = scalar_select %p379, %s25, 1
        %s381 = smul.addr %s380, 2
        %s382 = smul.addr %s381, 4
        %s383 = scalar_lea.vmem %s0, %s382
        %v384 = vld [vmem:[%s383] sm:$0xff]
        %v386 = vcombine.high %v384, %v384
        %388 = vrot.lane.b32.xlu0 %v384, 17
        %v389 = vpop.permute.xlu0 %388
        %390 = vrot.lane.b32.xlu0 %v386, 17
        %v391 = vpop.permute.xlu0 %390
        %v392 = vlaneseq
        %v393 = vand.u32 %v392, 127
        %vm394 = vcmp.lt.s32.totalorder %v393, 17
        %v395 = vsel %vm394, %v389, %v391
        %v396 = vsel %vm394, %v391, %v389
        %v397 = vld [vmem:[%s3] ss:$8 sm:$0x3]
        %v399 = vlaneseq
        %v400 = vshrl.u32 %v399, 7
        %v401 = vsub.s32 0, %v400
        %v402 = vrot.slane %v397, %v401
        %v403 = vlaneseq
        %v404 = vshrl.u32 %v403, 7
        %v405 = vsub.s32 1, %v404
        %v406 = vrot.slane %v397, %v405
        %v409 = vmul.f32 %v396, %v402
        %v410 = vmul.f32 %v395, %v406
        %v411 = vld [vmem:[%s1] sm:$0xff]
        %412 = vrot.lane.b32.xlu0 %v384, 16
        %v413 = vpop.permute.xlu0 %412
        %414 = vrot.lane.b32.xlu0 %v386, 16
        %v415 = vpop.permute.xlu0 %414
        %vm416 = vcmp.lt.s32.totalorder %v393, 16
        %v417 = vsel %vm416, %v413, %v415
        %v418 = vsel %vm416, %v415, %v413
        %s419 = scalar_lea.vmem %s3, 1
        %v420 = vld [vmem:[%s419] ss:$8 sm:$0x3]
        %v422 = vlaneseq
        %v423 = vshrl.u32 %v422, 7
        %v424 = vsub.s32 0, %v423
        %v425 = vrot.slane %v420, %v424
        %v426 = vlaneseq
        %v427 = vshrl.u32 %v426, 7
        %v428 = vsub.s32 1, %v427
        %v429 = vrot.slane %v420, %v428
        %v432 = vmul.f32 %v418, %v425
        %v433 = vmul.f32 %v417, %v429
        %s434 = scalar_lea.vmem %s1, 8
        %v435 = vld [vmem:[%s434] sm:$0xff]
        %vm436 = vcmask 31744
        %v438 = vsel %vm436, %v435, 0
        %vm440 = vcmask 1043456
        %v442 = vsel %vm440, %v432, 0
        %v445 = vsel %vm440, %v433, 0
        %447 = vmatprep.subr.mxu0 %v445
        %448 = vmatpush1.msra.mxu0 %v442
        %449 = vmatprep.subr.mxu0 0.0
        %450 = vmatpush1.msra.mxu0 0.0
        %451 = vmatprep.subr.mxu0 0.0
        %452 = vmatpush1.msra.mxu0 0.0
        %453 = vmatprep.subr.mxu0 0.0
        %454 = vmatpush1.msra.mxu0 0.0
        %455 = vmatprep.subr.mxu0 0.0
        %456 = vmatpush1.msra.mxu0 0.0
        %457 = vmatprep.subr.mxu0 0.0
        %458 = vmatpush1.msra.mxu0 0.0
        %459 = vmatprep.subr.mxu0 0.0
        %460 = vmatpush1.msra.mxu0 0.0
        %461 = vmatprep.subr.mxu0 0.0
        %462 = vmatpush1.msra.mxu0 0.0
        %463 = vmatprep.subr.mxu0 0.0
        %464 = vmatpush1.msra.mxu0 0.0
        %465 = vmatprep.subr.mxu0 0.0
        %466 = vmatpush1.msra.mxu0 0.0
        %467 = vmatprep.subr.mxu0 0.0
        %468 = vmatpush1.msra.mxu0 0.0
        %469 = vmatprep.subr.mxu0 0.0
        %470 = vmatpush1.msra.mxu0 0.0
        %471 = vmatprep.subr.mxu0 0.0
        %472 = vmatpush1.msra.mxu0 0.0
        %473 = vmatprep.subr.mxu0 0.0
        %474 = vmatpush1.msra.mxu0 0.0
        %475 = vmatprep.subr.mxu0 0.0
        %476 = vmatpush1.msra.mxu0 0.0
        %477 = vmatprep.subr.mxu0 0.0
        %478 = vmatpush1.msra.mxu0 0.0
        %479 = vmatprep.subr.mxu0 0.0
        %480 = vmatpush1.msra.mxu0 0.0
        %481 = vmatprep.subr.mxu0 0.0
        %482 = vmatpush1.msra.mxu0 0.0
        %483 = vmatprep.subr.mxu0 0.0
        %484 = vmatpush1.msra.mxu0 0.0
        %485 = vmatprep.subr.mxu0 0.0
        %486 = vmatpush1.msra.mxu0 0.0
        %487 = vmatprep.subr.mxu0 0.0
        %488 = vmatpush1.msra.mxu0 0.0
        %489 = vmatprep.subr.mxu0 0.0
        %490 = vmatpush1.msra.mxu0 0.0
        %491 = vmatprep.subr.mxu0 0.0
        %492 = vmatpush1.msra.mxu0 0.0
        %493 = vmatprep.subr.mxu0 0.0
        %494 = vmatpush1.msra.mxu0 0.0
        %495 = vmatprep.subr.mxu0 0.0
        %496 = vmatpush1.msra.mxu0 0.0
        %497 = vmatprep.subr.mxu0 0.0
        %498 = vmatpush1.msra.mxu0 0.0
        %499 = vmatprep.subr.mxu0 0.0
        %500 = vmatpush1.msra.mxu0 0.0
        %501 = vmatprep.subr.mxu0 0.0
        %502 = vmatpush1.msra.mxu0 0.0
        %503 = vmatprep.subr.mxu0 0.0
        %504 = vmatpush1.msra.mxu0 0.0
        %505 = vmatprep.subr.mxu0 0.0
        %506 = vmatpush1.msra.mxu0 0.0
        %507 = vmatprep.subr.mxu0 0.0
        %508 = vmatpush1.msra.mxu0 0.0
        %509 = vmatprep.subr.mxu0 0.0
        %510 = vmatpush1.msra.mxu0 0.0
        %511 = vmatprep.mubr.f32.mxu0 0.0
        %512 = vmatmul.mubr.f32.gmra.mrb[0].mxu0 %v438
        %v513 = vpop.f32.mrb[0].mxu0
        %v514 = vadd.f32 0.0, %v513
        %v515 = vpop.f32.mrb[0].mxu0
        %v516 = vadd.f32 0.0, %v515
        %517 = vdwg.mxu0
        %v519 = vsel %vm436, %v411, 0
        %v522 = vsel %vm440, %v409, 0
        %v525 = vsel %vm440, %v410, 0
        %527 = vmatprep.subr.mxu0 %v525
        %528 = vmatpush1.msra.mxu0 %v522
        %529 = vmatprep.subr.mxu0 0.0
        %530 = vmatpush1.msra.mxu0 0.0
        %531 = vmatprep.subr.mxu0 0.0
        %532 = vmatpush1.msra.mxu0 0.0
        %533 = vmatprep.subr.mxu0 0.0
        %534 = vmatpush1.msra.mxu0 0.0
        %535 = vmatprep.subr.mxu0 0.0
        %536 = vmatpush1.msra.mxu0 0.0
        %537 = vmatprep.subr.mxu0 0.0
        %538 = vmatpush1.msra.mxu0 0.0
        %539 = vmatprep.subr.mxu0 0.0
        %540 = vmatpush1.msra.mxu0 0.0
        %541 = vmatprep.subr.mxu0 0.0
        %542 = vmatpush1.msra.mxu0 0.0
        %543 = vmatprep.subr.mxu0 0.0
        %544 = vmatpush1.msra.mxu0 0.0
        %545 = vmatprep.subr.mxu0 0.0
        %546 = vmatpush1.msra.mxu0 0.0
        %547 = vmatprep.subr.mxu0 0.0
        %548 = vmatpush1.msra.mxu0 0.0
        %549 = vmatprep.subr.mxu0 0.0
        %550 = vmatpush1.msra.mxu0 0.0
        %551 = vmatprep.subr.mxu0 0.0
        %552 = vmatpush1.msra.mxu0 0.0
        %553 = vmatprep.subr.mxu0 0.0
        %554 = vmatpush1.msra.mxu0 0.0
        %555 = vmatprep.subr.mxu0 0.0
        %556 = vmatpush1.msra.mxu0 0.0
        %557 = vmatprep.subr.mxu0 0.0
        %558 = vmatpush1.msra.mxu0 0.0
        %559 = vmatprep.subr.mxu0 0.0
        %560 = vmatpush1.msra.mxu0 0.0
        %561 = vmatprep.subr.mxu0 0.0
        %562 = vmatpush1.msra.mxu0 0.0
        %563 = vmatprep.subr.mxu0 0.0
        %564 = vmatpush1.msra.mxu0 0.0
        %565 = vmatprep.subr.mxu0 0.0
        %566 = vmatpush1.msra.mxu0 0.0
        %567 = vmatprep.subr.mxu0 0.0
        %568 = vmatpush1.msra.mxu0 0.0
        %569 = vmatprep.subr.mxu0 0.0
        %570 = vmatpush1.msra.mxu0 0.0
        %571 = vmatprep.subr.mxu0 0.0
        %572 = vmatpush1.msra.mxu0 0.0
        %573 = vmatprep.subr.mxu0 0.0
        %574 = vmatpush1.msra.mxu0 0.0
        %575 = vmatprep.subr.mxu0 0.0
        %576 = vmatpush1.msra.mxu0 0.0
        %577 = vmatprep.subr.mxu0 0.0
        %578 = vmatpush1.msra.mxu0 0.0
        %579 = vmatprep.subr.mxu0 0.0
        %580 = vmatpush1.msra.mxu0 0.0
        %581 = vmatprep.subr.mxu0 0.0
        %582 = vmatpush1.msra.mxu0 0.0
        %583 = vmatprep.subr.mxu0 0.0
        %584 = vmatpush1.msra.mxu0 0.0
        %585 = vmatprep.subr.mxu0 0.0
        %586 = vmatpush1.msra.mxu0 0.0
        %587 = vmatprep.subr.mxu0 0.0
        %588 = vmatpush1.msra.mxu0 0.0
        %589 = vmatprep.subr.mxu0 0.0
        %590 = vmatpush1.msra.mxu0 0.0
        %591 = vmatprep.mubr.f32.mxu0 0.0
        %592 = vmatmul.mubr.f32.gmra.mrb[0].mxu0 %v519
        %v593 = vpop.f32.mrb[0].mxu0
        %v594 = vadd.f32 %v514, %v593
        %v595 = vpop.f32.mrb[0].mxu0
        %v596 = vadd.f32 %v516, %v595
        %597 = vdwg.mxu0
        %598 = vrot.lane.b32.xlu0 %v384, 15
        %v599 = vpop.permute.xlu0 %598
        %600 = vrot.lane.b32.xlu0 %v386, 15
        %v601 = vpop.permute.xlu0 %600
        %vm602 = vcmp.lt.s32.totalorder %v393, 15
        %v603 = vsel %vm602, %v599, %v601
        %v604 = vsel %vm602, %v601, %v599
        %s605 = scalar_lea.vmem %s3, 2
        %v606 = vld [vmem:[%s605] ss:$8 sm:$0x3]
        %v608 = vlaneseq
        %v609 = vshrl.u32 %v608, 7
        %v610 = vsub.s32 0, %v609
        %v611 = vrot.slane %v606, %v610
        %v612 = vlaneseq
        %v613 = vshrl.u32 %v612, 7
        %v614 = vsub.s32 1, %v613
        %v615 = vrot.slane %v606, %v614
        %v618 = vmul.f32 %v604, %v611
        %v619 = vmul.f32 %v603, %v615
        %s620 = scalar_lea.vmem %s1, 16
        %v621 = vld [vmem:[%s620] sm:$0xff]
        %v623 = vsel %vm436, %v621, 0
        %v626 = vsel %vm440, %v618, 0
        %v629 = vsel %vm440, %v619, 0
        %631 = vmatprep.subr.mxu0 %v629
        %632 = vmatpush1.msra.mxu0 %v626
        %633 = vmatprep.subr.mxu0 0.0
        %634 = vmatpush1.msra.mxu0 0.0
        %635 = vmatprep.subr.mxu0 0.0
        %636 = vmatpush1.msra.mxu0 0.0
        %637 = vmatprep.subr.mxu0 0.0
        %638 = vmatpush1.msra.mxu0 0.0
        %639 = vmatprep.subr.mxu0 0.0
        %640 = vmatpush1.msra.mxu0 0.0
        %641 = vmatprep.subr.mxu0 0.0
        %642 = vmatpush1.msra.mxu0 0.0
        %643 = vmatprep.subr.mxu0 0.0
        %644 = vmatpush1.msra.mxu0 0.0
        %645 = vmatprep.subr.mxu0 0.0
        %646 = vmatpush1.msra.mxu0 0.0
        %647 = vmatprep.subr.mxu0 0.0
        %648 = vmatpush1.msra.mxu0 0.0
        %649 = vmatprep.subr.mxu0 0.0
        %650 = vmatpush1.msra.mxu0 0.0
        %651 = vmatprep.subr.mxu0 0.0
        %652 = vmatpush1.msra.mxu0 0.0
        %653 = vmatprep.subr.mxu0 0.0
        %654 = vmatpush1.msra.mxu0 0.0
        %655 = vmatprep.subr.mxu0 0.0
        %656 = vmatpush1.msra.mxu0 0.0
        %657 = vmatprep.subr.mxu0 0.0
        %658 = vmatpush1.msra.mxu0 0.0
        %659 = vmatprep.subr.mxu0 0.0
        %660 = vmatpush1.msra.mxu0 0.0
        %661 = vmatprep.subr.mxu0 0.0
        %662 = vmatpush1.msra.mxu0 0.0
        %663 = vmatprep.subr.mxu0 0.0
        %664 = vmatpush1.msra.mxu0 0.0
        %665 = vmatprep.subr.mxu0 0.0
        %666 = vmatpush1.msra.mxu0 0.0
        %667 = vmatprep.subr.mxu0 0.0
        %668 = vmatpush1.msra.mxu0 0.0
        %669 = vmatprep.subr.mxu0 0.0
        %670 = vmatpush1.msra.mxu0 0.0
        %671 = vmatprep.subr.mxu0 0.0
        %672 = vmatpush1.msra.mxu0 0.0
        %673 = vmatprep.subr.mxu0 0.0
        %674 = vmatpush1.msra.mxu0 0.0
        %675 = vmatprep.subr.mxu0 0.0
        %676 = vmatpush1.msra.mxu0 0.0
        %677 = vmatprep.subr.mxu0 0.0
        %678 = vmatpush1.msra.mxu0 0.0
        %679 = vmatprep.subr.mxu0 0.0
        %680 = vmatpush1.msra.mxu0 0.0
        %681 = vmatprep.subr.mxu0 0.0
        %682 = vmatpush1.msra.mxu0 0.0
        %683 = vmatprep.subr.mxu0 0.0
        %684 = vmatpush1.msra.mxu0 0.0
        %685 = vmatprep.subr.mxu0 0.0
        %686 = vmatpush1.msra.mxu0 0.0
        %687 = vmatprep.subr.mxu0 0.0
        %688 = vmatpush1.msra.mxu0 0.0
        %689 = vmatprep.subr.mxu0 0.0
        %690 = vmatpush1.msra.mxu0 0.0
        %691 = vmatprep.subr.mxu0 0.0
        %692 = vmatpush1.msra.mxu0 0.0
        %693 = vmatprep.subr.mxu0 0.0
        %694 = vmatpush1.msra.mxu0 0.0
        %695 = vmatprep.mubr.f32.mxu0 0.0
        %696 = vmatmul.mubr.f32.gmra.mrb[0].mxu0 %v623
        %v697 = vpop.f32.mrb[0].mxu0
        %v698 = vadd.f32 0.0, %v697
        %v699 = vpop.f32.mrb[0].mxu0
        %v700 = vadd.f32 0.0, %v699
        %701 = vdwg.mxu0
        %v702 = vadd.f32 %v594, %v698
        %v703 = vadd.f32 %v596, %v700
        %704 = vrot.lane.b32.xlu0 %v384, 1
        %v705 = vpop.permute.xlu0 %704
        %706 = vrot.lane.b32.xlu0 %v386, 1
        %v707 = vpop.permute.xlu0 %706
        %vm708 = vcmp.lt.s32.totalorder %v393, 1
        %v709 = vsel %vm708, %v705, %v707
        %v710 = vsel %vm708, %v707, %v705
        %s711 = scalar_lea.vmem %s3, 3
        %v712 = vld [vmem:[%s711] ss:$8 sm:$0x3]
        %v714 = vlaneseq
        %v715 = vshrl.u32 %v714, 7
        %v716 = vsub.s32 0, %v715
        %v717 = vrot.slane %v712, %v716
        %v718 = vlaneseq
        %v719 = vshrl.u32 %v718, 7
        %v720 = vsub.s32 1, %v719
        %v721 = vrot.slane %v712, %v720
        %v724 = vmul.f32 %v710, %v717
        %v725 = vmul.f32 %v709, %v721
        %s726 = scalar_lea.vmem %s1, 24
        %v727 = vld [vmem:[%s726] sm:$0xff]
        %v729 = vsel %vm436, %v727, 0
        %v732 = vsel %vm440, %v724, 0
        %v735 = vsel %vm440, %v725, 0
        %737 = vmatprep.subr.mxu0 %v735
        %738 = vmatpush1.msra.mxu0 %v732
        %739 = vmatprep.subr.mxu0 0.0
        %740 = vmatpush1.msra.mxu0 0.0
        %741 = vmatprep.subr.mxu0 0.0
        %742 = vmatpush1.msra.mxu0 0.0
        %743 = vmatprep.subr.mxu0 0.0
        %744 = vmatpush1.msra.mxu0 0.0
        %745 = vmatprep.subr.mxu0 0.0
        %746 = vmatpush1.msra.mxu0 0.0
        %747 = vmatprep.subr.mxu0 0.0
        %748 = vmatpush1.msra.mxu0 0.0
        %749 = vmatprep.subr.mxu0 0.0
        %750 = vmatpush1.msra.mxu0 0.0
        %751 = vmatprep.subr.mxu0 0.0
        %752 = vmatpush1.msra.mxu0 0.0
        %753 = vmatprep.subr.mxu0 0.0
        %754 = vmatpush1.msra.mxu0 0.0
        %755 = vmatprep.subr.mxu0 0.0
        %756 = vmatpush1.msra.mxu0 0.0
        %757 = vmatprep.subr.mxu0 0.0
        %758 = vmatpush1.msra.mxu0 0.0
        %759 = vmatprep.subr.mxu0 0.0
        %760 = vmatpush1.msra.mxu0 0.0
        %761 = vmatprep.subr.mxu0 0.0
        %762 = vmatpush1.msra.mxu0 0.0
        %763 = vmatprep.subr.mxu0 0.0
        %764 = vmatpush1.msra.mxu0 0.0
        %765 = vmatprep.subr.mxu0 0.0
        %766 = vmatpush1.msra.mxu0 0.0
        %767 = vmatprep.subr.mxu0 0.0
        %768 = vmatpush1.msra.mxu0 0.0
        %769 = vmatprep.subr.mxu0 0.0
        %770 = vmatpush1.msra.mxu0 0.0
        %771 = vmatprep.subr.mxu0 0.0
        %772 = vmatpush1.msra.mxu0 0.0
        %773 = vmatprep.subr.mxu0 0.0
        %774 = vmatpush1.msra.mxu0 0.0
        %775 = vmatprep.subr.mxu0 0.0
        %776 = vmatpush1.msra.mxu0 0.0
        %777 = vmatprep.subr.mxu0 0.0
        %778 = vmatpush1.msra.mxu0 0.0
        %779 = vmatprep.subr.mxu0 0.0
        %780 = vmatpush1.msra.mxu0 0.0
        %781 = vmatprep.subr.mxu0 0.0
        %782 = vmatpush1.msra.mxu0 0.0
        %783 = vmatprep.subr.mxu0 0.0
        %784 = vmatpush1.msra.mxu0 0.0
        %785 = vmatprep.subr.mxu0 0.0
        %786 = vmatpush1.msra.mxu0 0.0
        %787 = vmatprep.subr.mxu0 0.0
        %788 = vmatpush1.msra.mxu0 0.0
        %789 = vmatprep.subr.mxu0 0.0
        %790 = vmatpush1.msra.mxu0 0.0
        %791 = vmatprep.subr.mxu0 0.0
        %792 = vmatpush1.msra.mxu0 0.0
        %793 = vmatprep.subr.mxu0 0.0
        %794 = vmatpush1.msra.mxu0 0.0
        %795 = vmatprep.subr.mxu0 0.0
        %796 = vmatpush1.msra.mxu0 0.0
        %797 = vmatprep.subr.mxu0 0.0
        %798 = vmatpush1.msra.mxu0 0.0
        %799 = vmatprep.subr.mxu0 0.0
        %800 = vmatpush1.msra.mxu0 0.0
        %801 = vmatprep.mubr.f32.mxu0 0.0
        %802 = vmatmul.mubr.f32.gmra.mrb[0].mxu0 %v729
        %v803 = vpop.f32.mrb[0].mxu0
        %v804 = vadd.f32 0.0, %v803
        %v805 = vpop.f32.mrb[0].mxu0
        %v806 = vadd.f32 0.0, %v805
        %807 = vdwg.mxu0
        %v808 = vadd.f32 %v702, %v804
        %v809 = vadd.f32 %v703, %v806
        %s810 = scalar_lea.vmem %s1, 32
        %v811 = vld [vmem:[%s810] sm:$0xff]
        %v813 = vsel %vm436, %v811, 0
        %v815 = vsel %vm440, %v384, 0
        %v817 = vsel %vm440, %v386, 0
        %819 = vmatprep.subr.mxu0 %v817
        %820 = vmatpush1.msra.mxu0 %v815
        %821 = vmatprep.subr.mxu0 0.0
        %822 = vmatpush1.msra.mxu0 0.0
        %823 = vmatprep.subr.mxu0 0.0
        %824 = vmatpush1.msra.mxu0 0.0
        %825 = vmatprep.subr.mxu0 0.0
        %826 = vmatpush1.msra.mxu0 0.0
        %827 = vmatprep.subr.mxu0 0.0
        %828 = vmatpush1.msra.mxu0 0.0
        %829 = vmatprep.subr.mxu0 0.0
        %830 = vmatpush1.msra.mxu0 0.0
        %831 = vmatprep.subr.mxu0 0.0
        %832 = vmatpush1.msra.mxu0 0.0
        %833 = vmatprep.subr.mxu0 0.0
        %834 = vmatpush1.msra.mxu0 0.0
        %835 = vmatprep.subr.mxu0 0.0
        %836 = vmatpush1.msra.mxu0 0.0
        %837 = vmatprep.subr.mxu0 0.0
        %838 = vmatpush1.msra.mxu0 0.0
        %839 = vmatprep.subr.mxu0 0.0
        %840 = vmatpush1.msra.mxu0 0.0
        %841 = vmatprep.subr.mxu0 0.0
        %842 = vmatpush1.msra.mxu0 0.0
        %843 = vmatprep.subr.mxu0 0.0
        %844 = vmatpush1.msra.mxu0 0.0
        %845 = vmatprep.subr.mxu0 0.0
        %846 = vmatpush1.msra.mxu0 0.0
        %847 = vmatprep.subr.mxu0 0.0
        %848 = vmatpush1.msra.mxu0 0.0
        %849 = vmatprep.subr.mxu0 0.0
        %850 = vmatpush1.msra.mxu0 0.0
        %851 = vmatprep.subr.mxu0 0.0
        %852 = vmatpush1.msra.mxu0 0.0
        %853 = vmatprep.subr.mxu0 0.0
        %854 = vmatpush1.msra.mxu0 0.0
        %855 = vmatprep.subr.mxu0 0.0
        %856 = vmatpush1.msra.mxu0 0.0
        %857 = vmatprep.subr.mxu0 0.0
        %858 = vmatpush1.msra.mxu0 0.0
        %859 = vmatprep.subr.mxu0 0.0
        %860 = vmatpush1.msra.mxu0 0.0
        %861 = vmatprep.subr.mxu0 0.0
        %862 = vmatpush1.msra.mxu0 0.0
        %863 = vmatprep.subr.mxu0 0.0
        %864 = vmatpush1.msra.mxu0 0.0
        %865 = vmatprep.subr.mxu0 0.0
        %866 = vmatpush1.msra.mxu0 0.0
        %867 = vmatprep.subr.mxu0 0.0
        %868 = vmatpush1.msra.mxu0 0.0
        %869 = vmatprep.subr.mxu0 0.0
        %870 = vmatpush1.msra.mxu0 0.0
        %871 = vmatprep.subr.mxu0 0.0
        %872 = vmatpush1.msra.mxu0 0.0
        %873 = vmatprep.subr.mxu0 0.0
        %874 = vmatpush1.msra.mxu0 0.0
        %875 = vmatprep.subr.mxu0 0.0
        %876 = vmatpush1.msra.mxu0 0.0
        %877 = vmatprep.subr.mxu0 0.0
        %878 = vmatpush1.msra.mxu0 0.0
        %879 = vmatprep.subr.mxu0 0.0
        %880 = vmatpush1.msra.mxu0 0.0
        %881 = vmatprep.subr.mxu0 0.0
        %882 = vmatpush1.msra.mxu0 0.0
        %883 = vmatprep.mubr.f32.mxu0 0.0
        %884 = vmatmul.mubr.f32.gmra.mrb[0].mxu0 %v813
        %v885 = vpop.f32.mrb[0].mxu0
        %v886 = vadd.f32 0.0, %v885
        %v887 = vpop.f32.mrb[0].mxu0
        %v888 = vadd.f32 0.0, %v887
        %889 = vdwg.mxu0
        %v890 = vadd.f32 %v808, %v886
        %v891 = vadd.f32 %v809, %v888
        %892 = vrot.lane.b32.xlu0 %v384, 127
        %v893 = vpop.permute.xlu0 %892
        %894 = vrot.lane.b32.xlu0 %v386, 127
        %v895 = vpop.permute.xlu0 %894
        %vm896 = vcmp.lt.s32.totalorder %v393, 127
        %v897 = vsel %vm896, %v893, %v895
        %v898 = vsel %vm896, %v895, %v893
        %s899 = scalar_lea.vmem %s3, 5
        %v900 = vld [vmem:[%s899] ss:$8 sm:$0x3]
        %v902 = vlaneseq
        %v903 = vshrl.u32 %v902, 7
        %v904 = vsub.s32 0, %v903
        %v905 = vrot.slane %v900, %v904
        %v906 = vlaneseq
        %v907 = vshrl.u32 %v906, 7
        %v908 = vsub.s32 1, %v907
        %v909 = vrot.slane %v900, %v908
        %v912 = vmul.f32 %v897, %v905
        %v913 = vmul.f32 %v898, %v909
        %s914 = scalar_lea.vmem %s1, 40
        %v915 = vld [vmem:[%s914] sm:$0xff]
        %v917 = vsel %vm436, %v915, 0
        %v920 = vsel %vm440, %v912, 0
        %v923 = vsel %vm440, %v913, 0
        %925 = vmatprep.subr.mxu0 %v923
        %926 = vmatpush1.msra.mxu0 %v920
        %927 = vmatprep.subr.mxu0 0.0
        %928 = vmatpush1.msra.mxu0 0.0
        %929 = vmatprep.subr.mxu0 0.0
        %930 = vmatpush1.msra.mxu0 0.0
        %931 = vmatprep.subr.mxu0 0.0
        %932 = vmatpush1.msra.mxu0 0.0
        %933 = vmatprep.subr.mxu0 0.0
        %934 = vmatpush1.msra.mxu0 0.0
        %935 = vmatprep.subr.mxu0 0.0
        %936 = vmatpush1.msra.mxu0 0.0
        %937 = vmatprep.subr.mxu0 0.0
        %938 = vmatpush1.msra.mxu0 0.0
        %939 = vmatprep.subr.mxu0 0.0
        %940 = vmatpush1.msra.mxu0 0.0
        %941 = vmatprep.subr.mxu0 0.0
        %942 = vmatpush1.msra.mxu0 0.0
        %943 = vmatprep.subr.mxu0 0.0
        %944 = vmatpush1.msra.mxu0 0.0
        %945 = vmatprep.subr.mxu0 0.0
        %946 = vmatpush1.msra.mxu0 0.0
        %947 = vmatprep.subr.mxu0 0.0
        %948 = vmatpush1.msra.mxu0 0.0
        %949 = vmatprep.subr.mxu0 0.0
        %950 = vmatpush1.msra.mxu0 0.0
        %951 = vmatprep.subr.mxu0 0.0
        %952 = vmatpush1.msra.mxu0 0.0
        %953 = vmatprep.subr.mxu0 0.0
        %954 = vmatpush1.msra.mxu0 0.0
        %955 = vmatprep.subr.mxu0 0.0
        %956 = vmatpush1.msra.mxu0 0.0
        %957 = vmatprep.subr.mxu0 0.0
        %958 = vmatpush1.msra.mxu0 0.0
        %959 = vmatprep.subr.mxu0 0.0
        %960 = vmatpush1.msra.mxu0 0.0
        %961 = vmatprep.subr.mxu0 0.0
        %962 = vmatpush1.msra.mxu0 0.0
        %963 = vmatprep.subr.mxu0 0.0
        %964 = vmatpush1.msra.mxu0 0.0
        %965 = vmatprep.subr.mxu0 0.0
        %966 = vmatpush1.msra.mxu0 0.0
        %967 = vmatprep.subr.mxu0 0.0
        %968 = vmatpush1.msra.mxu0 0.0
        %969 = vmatprep.subr.mxu0 0.0
        %970 = vmatpush1.msra.mxu0 0.0
        %971 = vmatprep.subr.mxu0 0.0
        %972 = vmatpush1.msra.mxu0 0.0
        %973 = vmatprep.subr.mxu0 0.0
        %974 = vmatpush1.msra.mxu0 0.0
        %975 = vmatprep.subr.mxu0 0.0
        %976 = vmatpush1.msra.mxu0 0.0
        %977 = vmatprep.subr.mxu0 0.0
        %978 = vmatpush1.msra.mxu0 0.0
        %979 = vmatprep.subr.mxu0 0.0
        %980 = vmatpush1.msra.mxu0 0.0
        %981 = vmatprep.subr.mxu0 0.0
        %982 = vmatpush1.msra.mxu0 0.0
        %983 = vmatprep.subr.mxu0 0.0
        %984 = vmatpush1.msra.mxu0 0.0
        %985 = vmatprep.subr.mxu0 0.0
        %986 = vmatpush1.msra.mxu0 0.0
        %987 = vmatprep.subr.mxu0 0.0
        %988 = vmatpush1.msra.mxu0 0.0
        %989 = vmatprep.mubr.f32.mxu0 0.0
        %990 = vmatmul.mubr.f32.gmra.mrb[0].mxu0 %v917
        %v991 = vpop.f32.mrb[0].mxu0
        %v992 = vadd.f32 0.0, %v991
        %v993 = vpop.f32.mrb[0].mxu0
        %v994 = vadd.f32 0.0, %v993
        %995 = vdwg.mxu0
        %v996 = vadd.f32 %v890, %v992
        %v997 = vadd.f32 %v891, %v994
        %998 = vrot.lane.b32.xlu0 %v384, 113
        %v999 = vpop.permute.xlu0 %998
        %1000 = vrot.lane.b32.xlu0 %v386, 113
        %v1001 = vpop.permute.xlu0 %1000
        %vm1002 = vcmp.lt.s32.totalorder %v393, 113
        %v1003 = vsel %vm1002, %v999, %v1001
        %v1004 = vsel %vm1002, %v1001, %v999
        %s1005 = scalar_lea.vmem %s3, 6
        %v1006 = vld [vmem:[%s1005] ss:$8 sm:$0x3]
        %v1008 = vlaneseq
        %v1009 = vshrl.u32 %v1008, 7
        %v1010 = vsub.s32 0, %v1009
        %v1011 = vrot.slane %v1006, %v1010
        %v1012 = vlaneseq
        %v1013 = vshrl.u32 %v1012, 7
        %v1014 = vsub.s32 1, %v1013
        %v1015 = vrot.slane %v1006, %v1014
        %v1018 = vmul.f32 %v1003, %v1011
        %v1019 = vmul.f32 %v1004, %v1015
        %s1020 = scalar_lea.vmem %s1, 48
        %v1021 = vld [vmem:[%s1020] sm:$0xff]
        %v1023 = vsel %vm436, %v1021, 0
        %v1026 = vsel %vm440, %v1018, 0
        %v1029 = vsel %vm440, %v1019, 0
        %1031 = vmatprep.subr.mxu0 %v1029
        %1032 = vmatpush1.msra.mxu0 %v1026
        %1033 = vmatprep.subr.mxu0 0.0
        %1034 = vmatpush1.msra.mxu0 0.0
        %1035 = vmatprep.subr.mxu0 0.0
        %1036 = vmatpush1.msra.mxu0 0.0
        %1037 = vmatprep.subr.mxu0 0.0
        %1038 = vmatpush1.msra.mxu0 0.0
        %1039 = vmatprep.subr.mxu0 0.0
        %1040 = vmatpush1.msra.mxu0 0.0
        %1041 = vmatprep.subr.mxu0 0.0
        %1042 = vmatpush1.msra.mxu0 0.0
        %1043 = vmatprep.subr.mxu0 0.0
        %1044 = vmatpush1.msra.mxu0 0.0
        %1045 = vmatprep.subr.mxu0 0.0
        %1046 = vmatpush1.msra.mxu0 0.0
        %1047 = vmatprep.subr.mxu0 0.0
        %1048 = vmatpush1.msra.mxu0 0.0
        %1049 = vmatprep.subr.mxu0 0.0
        %1050 = vmatpush1.msra.mxu0 0.0
        %1051 = vmatprep.subr.mxu0 0.0
        %1052 = vmatpush1.msra.mxu0 0.0
        %1053 = vmatprep.subr.mxu0 0.0
        %1054 = vmatpush1.msra.mxu0 0.0
        %1055 = vmatprep.subr.mxu0 0.0
        %1056 = vmatpush1.msra.mxu0 0.0
        %1057 = vmatprep.subr.mxu0 0.0
        %1058 = vmatpush1.msra.mxu0 0.0
        %1059 = vmatprep.subr.mxu0 0.0
        %1060 = vmatpush1.msra.mxu0 0.0
        %1061 = vmatprep.subr.mxu0 0.0
        %1062 = vmatpush1.msra.mxu0 0.0
        %1063 = vmatprep.subr.mxu0 0.0
        %1064 = vmatpush1.msra.mxu0 0.0
        %1065 = vmatprep.subr.mxu0 0.0
        %1066 = vmatpush1.msra.mxu0 0.0
        %1067 = vmatprep.subr.mxu0 0.0
        %1068 = vmatpush1.msra.mxu0 0.0
        %1069 = vmatprep.subr.mxu0 0.0
        %1070 = vmatpush1.msra.mxu0 0.0
        %1071 = vmatprep.subr.mxu0 0.0
        %1072 = vmatpush1.msra.mxu0 0.0
        %1073 = vmatprep.subr.mxu0 0.0
        %1074 = vmatpush1.msra.mxu0 0.0
        %1075 = vmatprep.subr.mxu0 0.0
        %1076 = vmatpush1.msra.mxu0 0.0
        %1077 = vmatprep.subr.mxu0 0.0
        %1078 = vmatpush1.msra.mxu0 0.0
        %1079 = vmatprep.subr.mxu0 0.0
        %1080 = vmatpush1.msra.mxu0 0.0
        %1081 = vmatprep.subr.mxu0 0.0
        %1082 = vmatpush1.msra.mxu0 0.0
        %1083 = vmatprep.subr.mxu0 0.0
        %1084 = vmatpush1.msra.mxu0 0.0
        %1085 = vmatprep.subr.mxu0 0.0
        %1086 = vmatpush1.msra.mxu0 0.0
        %1087 = vmatprep.subr.mxu0 0.0
        %1088 = vmatpush1.msra.mxu0 0.0
        %1089 = vmatprep.subr.mxu0 0.0
        %1090 = vmatpush1.msra.mxu0 0.0
        %1091 = vmatprep.subr.mxu0 0.0
        %1092 = vmatpush1.msra.mxu0 0.0
        %1093 = vmatprep.subr.mxu0 0.0
        %1094 = vmatpush1.msra.mxu0 0.0
        %1095 = vmatprep.mubr.f32.mxu0 0.0
        %1096 = vmatmul.mubr.f32.gmra.mrb[0].mxu0 %v1023
        %v1097 = vpop.f32.mrb[0].mxu0
        %v1098 = vadd.f32 0.0, %v1097
        %v1099 = vpop.f32.mrb[0].mxu0
        %v1100 = vadd.f32 0.0, %v1099
        %1101 = vdwg.mxu0
        %v1102 = vadd.f32 %v996, %v1098
        %v1103 = vadd.f32 %v997, %v1100
        %1104 = vrot.lane.b32.xlu0 %v384, 112
        %v1105 = vpop.permute.xlu0 %1104
        %1106 = vrot.lane.b32.xlu0 %v386, 112
        %v1107 = vpop.permute.xlu0 %1106
        %vm1108 = vcmp.lt.s32.totalorder %v393, 112
        %v1109 = vsel %vm1108, %v1105, %v1107
        %v1110 = vsel %vm1108, %v1107, %v1105
        %s1111 = scalar_lea.vmem %s3, 7
        %v1112 = vld [vmem:[%s1111] ss:$8 sm:$0x3]
        %v1114 = vlaneseq
        %v1115 = vshrl.u32 %v1114, 7
        %v1116 = vsub.s32 0, %v1115
        %v1117 = vrot.slane %v1112, %v1116
        %v1118 = vlaneseq
        %v1119 = vshrl.u32 %v1118, 7
        %v1120 = vsub.s32 1, %v1119
        %v1121 = vrot.slane %v1112, %v1120
        %v1124 = vmul.f32 %v1109, %v1117
        %v1125 = vmul.f32 %v1110, %v1121
        %s1126 = scalar_lea.vmem %s1, 56
        %v1127 = vld [vmem:[%s1126] sm:$0xff]
        %v1129 = vsel %vm436, %v1127, 0
        %v1132 = vsel %vm440, %v1124, 0
        %v1135 = vsel %vm440, %v1125, 0
        %1137 = vmatprep.subr.mxu0 %v1135
        %1138 = vmatpush1.msra.mxu0 %v1132
        %1139 = vmatprep.subr.mxu0 0.0
        %1140 = vmatpush1.msra.mxu0 0.0
        %1141 = vmatprep.subr.mxu0 0.0
        %1142 = vmatpush1.msra.mxu0 0.0
        %1143 = vmatprep.subr.mxu0 0.0
        %1144 = vmatpush1.msra.mxu0 0.0
        %1145 = vmatprep.subr.mxu0 0.0
        %1146 = vmatpush1.msra.mxu0 0.0
        %1147 = vmatprep.subr.mxu0 0.0
        %1148 = vmatpush1.msra.mxu0 0.0
        %1149 = vmatprep.subr.mxu0 0.0
        %1150 = vmatpush1.msra.mxu0 0.0
        %1151 = vmatprep.subr.mxu0 0.0
        %1152 = vmatpush1.msra.mxu0 0.0
        %1153 = vmatprep.subr.mxu0 0.0
        %1154 = vmatpush1.msra.mxu0 0.0
        %1155 = vmatprep.subr.mxu0 0.0
        %1156 = vmatpush1.msra.mxu0 0.0
        %1157 = vmatprep.subr.mxu0 0.0
        %1158 = vmatpush1.msra.mxu0 0.0
        %1159 = vmatprep.subr.mxu0 0.0
        %1160 = vmatpush1.msra.mxu0 0.0
        %1161 = vmatprep.subr.mxu0 0.0
        %1162 = vmatpush1.msra.mxu0 0.0
        %1163 = vmatprep.subr.mxu0 0.0
        %1164 = vmatpush1.msra.mxu0 0.0
        %1165 = vmatprep.subr.mxu0 0.0
        %1166 = vmatpush1.msra.mxu0 0.0
        %1167 = vmatprep.subr.mxu0 0.0
        %1168 = vmatpush1.msra.mxu0 0.0
        %1169 = vmatprep.subr.mxu0 0.0
        %1170 = vmatpush1.msra.mxu0 0.0
        %1171 = vmatprep.subr.mxu0 0.0
        %1172 = vmatpush1.msra.mxu0 0.0
        %1173 = vmatprep.subr.mxu0 0.0
        %1174 = vmatpush1.msra.mxu0 0.0
        %1175 = vmatprep.subr.mxu0 0.0
        %1176 = vmatpush1.msra.mxu0 0.0
        %1177 = vmatprep.subr.mxu0 0.0
        %1178 = vmatpush1.msra.mxu0 0.0
        %1179 = vmatprep.subr.mxu0 0.0
        %1180 = vmatpush1.msra.mxu0 0.0
        %1181 = vmatprep.subr.mxu0 0.0
        %1182 = vmatpush1.msra.mxu0 0.0
        %1183 = vmatprep.subr.mxu0 0.0
        %1184 = vmatpush1.msra.mxu0 0.0
        %1185 = vmatprep.subr.mxu0 0.0
        %1186 = vmatpush1.msra.mxu0 0.0
        %1187 = vmatprep.subr.mxu0 0.0
        %1188 = vmatpush1.msra.mxu0 0.0
        %1189 = vmatprep.subr.mxu0 0.0
        %1190 = vmatpush1.msra.mxu0 0.0
        %1191 = vmatprep.subr.mxu0 0.0
        %1192 = vmatpush1.msra.mxu0 0.0
        %1193 = vmatprep.subr.mxu0 0.0
        %1194 = vmatpush1.msra.mxu0 0.0
        %1195 = vmatprep.subr.mxu0 0.0
        %1196 = vmatpush1.msra.mxu0 0.0
        %1197 = vmatprep.subr.mxu0 0.0
        %1198 = vmatpush1.msra.mxu0 0.0
        %1199 = vmatprep.subr.mxu0 0.0
        %1200 = vmatpush1.msra.mxu0 0.0
        %1201 = vmatprep.mubr.f32.mxu0 0.0
        %1202 = vmatmul.mubr.f32.gmra.mrb[0].mxu0 %v1129
        %v1203 = vpop.f32.mrb[0].mxu0
        %v1204 = vadd.f32 0.0, %v1203
        %v1205 = vpop.f32.mrb[0].mxu0
        %v1206 = vadd.f32 0.0, %v1205
        %1207 = vdwg.mxu0
        %v1208 = vadd.f32 %v1102, %v1204
        %v1209 = vadd.f32 %v1103, %v1206
        %1210 = vrot.lane.b32.xlu0 %v384, 111
        %v1211 = vpop.permute.xlu0 %1210
        %1212 = vrot.lane.b32.xlu0 %v386, 111
        %v1213 = vpop.permute.xlu0 %1212
        %vm1214 = vcmp.lt.s32.totalorder %v393, 111
        %v1215 = vsel %vm1214, %v1211, %v1213
        %v1216 = vsel %vm1214, %v1213, %v1211
        %s1217 = scalar_lea.vmem %s3, 16
        %v1218 = vld [vmem:[%s1217] ss:$8 sm:$0x3]
        %v1220 = vlaneseq
        %v1221 = vshrl.u32 %v1220, 7
        %v1222 = vsub.s32 0, %v1221
        %v1223 = vrot.slane %v1218, %v1222
        %v1224 = vlaneseq
        %v1225 = vshrl.u32 %v1224, 7
        %v1226 = vsub.s32 1, %v1225
        %v1227 = vrot.slane %v1218, %v1226
        %v1230 = vmul.f32 %v1215, %v1223
        %v1231 = vmul.f32 %v1216, %v1227
        %s1232 = scalar_lea.vmem %s1, 64
        %v1233 = vld [vmem:[%s1232] sm:$0xff]
        %v1235 = vsel %vm436, %v1233, 0
        %v1238 = vsel %vm440, %v1230, 0
        %v1241 = vsel %vm440, %v1231, 0
        %1243 = vmatprep.subr.mxu0 %v1241
        %1244 = vmatpush1.msra.mxu0 %v1238
        %1245 = vmatprep.subr.mxu0 0.0
        %1246 = vmatpush1.msra.mxu0 0.0
        %1247 = vmatprep.subr.mxu0 0.0
        %1248 = vmatpush1.msra.mxu0 0.0
        %1249 = vmatprep.subr.mxu0 0.0
        %1250 = vmatpush1.msra.mxu0 0.0
        %1251 = vmatprep.subr.mxu0 0.0
        %1252 = vmatpush1.msra.mxu0 0.0
        %1253 = vmatprep.subr.mxu0 0.0
        %1254 = vmatpush1.msra.mxu0 0.0
        %1255 = vmatprep.subr.mxu0 0.0
        %1256 = vmatpush1.msra.mxu0 0.0
        %1257 = vmatprep.subr.mxu0 0.0
        %1258 = vmatpush1.msra.mxu0 0.0
        %1259 = vmatprep.subr.mxu0 0.0
        %1260 = vmatpush1.msra.mxu0 0.0
        %1261 = vmatprep.subr.mxu0 0.0
        %1262 = vmatpush1.msra.mxu0 0.0
        %1263 = vmatprep.subr.mxu0 0.0
        %1264 = vmatpush1.msra.mxu0 0.0
        %1265 = vmatprep.subr.mxu0 0.0
        %1266 = vmatpush1.msra.mxu0 0.0
        %1267 = vmatprep.subr.mxu0 0.0
        %1268 = vmatpush1.msra.mxu0 0.0
        %1269 = vmatprep.subr.mxu0 0.0
        %1270 = vmatpush1.msra.mxu0 0.0
        %1271 = vmatprep.subr.mxu0 0.0
        %1272 = vmatpush1.msra.mxu0 0.0
        %1273 = vmatprep.subr.mxu0 0.0
        %1274 = vmatpush1.msra.mxu0 0.0
        %1275 = vmatprep.subr.mxu0 0.0
        %1276 = vmatpush1.msra.mxu0 0.0
        %1277 = vmatprep.subr.mxu0 0.0
        %1278 = vmatpush1.msra.mxu0 0.0
        %1279 = vmatprep.subr.mxu0 0.0
        %1280 = vmatpush1.msra.mxu0 0.0
        %1281 = vmatprep.subr.mxu0 0.0
        %1282 = vmatpush1.msra.mxu0 0.0
        %1283 = vmatprep.subr.mxu0 0.0
        %1284 = vmatpush1.msra.mxu0 0.0
        %1285 = vmatprep.subr.mxu0 0.0
        %1286 = vmatpush1.msra.mxu0 0.0
        %1287 = vmatprep.subr.mxu0 0.0
        %1288 = vmatpush1.msra.mxu0 0.0
        %1289 = vmatprep.subr.mxu0 0.0
        %1290 = vmatpush1.msra.mxu0 0.0
        %1291 = vmatprep.subr.mxu0 0.0
        %1292 = vmatpush1.msra.mxu0 0.0
        %1293 = vmatprep.subr.mxu0 0.0
        %1294 = vmatpush1.msra.mxu0 0.0
        %1295 = vmatprep.subr.mxu0 0.0
        %1296 = vmatpush1.msra.mxu0 0.0
        %1297 = vmatprep.subr.mxu0 0.0
        %1298 = vmatpush1.msra.mxu0 0.0
        %1299 = vmatprep.subr.mxu0 0.0
        %1300 = vmatpush1.msra.mxu0 0.0
        %1301 = vmatprep.subr.mxu0 0.0
        %1302 = vmatpush1.msra.mxu0 0.0
        %1303 = vmatprep.subr.mxu0 0.0
        %1304 = vmatpush1.msra.mxu0 0.0
        %1305 = vmatprep.subr.mxu0 0.0
        %1306 = vmatpush1.msra.mxu0 0.0
        %1307 = vmatprep.mubr.f32.mxu0 0.0
        %1308 = vmatmul.mubr.f32.gmra.mrb[0].mxu0 %v1235
        %v1309 = vpop.f32.mrb[0].mxu0
        %v1310 = vadd.f32 0.0, %v1309
        %v1311 = vpop.f32.mrb[0].mxu0
        %v1312 = vadd.f32 0.0, %v1311
        %1313 = vdwg.mxu0
        %v1314 = vadd.f32 %v1208, %v1310
        %v1315 = vadd.f32 %v1209, %v1312
        %v1316 = vld [vmem:[%s2] sm:$0xff]
        %1318 = vset.pattern.permute.xlu0 0
        %1319 = vperm.xlu0 %1318, %v1316
        %v1320 = vpop.permute.xlu0 %1319
        %v1322 = vadd.f32 %v1314, %v1320
        %v1323 = vadd.f32 %v1315, %v1320
        %v1324 = vmax.f32 %v1322, 0.0
        %v1325 = vmax.f32 %v1323, 0.0
        %v1326 = vld [vmem:[%s4] sm:$0xff]
        %v1327 = vld [vmem:[%s4 + $0x8] sm:$0xff]
        %v1328 = vld [vmem:[%s4 + $0x10] sm:$0xff]
        %v1329 = vld [vmem:[%s4 + $0x18] sm:$0xff]
        %v1330 = vld [vmem:[%s4 + $0x20] sm:$0xff]
        %v1331 = vld [vmem:[%s4 + $0x28] sm:$0xff]
        %v1332 = vld [vmem:[%s4 + $0x30] sm:$0xff]
        %v1333 = vld [vmem:[%s4 + $0x38] sm:$0xff]
        %v1334 = vld [vmem:[%s4 + $0x40] sm:$0xff]
        %v1335 = vld [vmem:[%s4 + $0x48] sm:$0xff]
        %v1336 = vld [vmem:[%s4 + $0x50] sm:$0xff]
        %v1337 = vld [vmem:[%s4 + $0x58] sm:$0xff]
        %v1338 = vld [vmem:[%s4 + $0x60] sm:$0xff]
        %v1339 = vld [vmem:[%s4 + $0x68] sm:$0xff]
        %v1340 = vld [vmem:[%s4 + $0x70] sm:$0xff]
        %v1341 = vld [vmem:[%s4 + $0x78] sm:$0xff]
        %v1342 = vld [vmem:[%s4 + $0x80] sm:$0xff]
        %v1343 = vld [vmem:[%s4 + $0x88] sm:$0xff]
        %v1344 = vld [vmem:[%s4 + $0x90] sm:$0xff]
        %v1345 = vld [vmem:[%s4 + $0x98] sm:$0xff]
        %v1346 = vld [vmem:[%s4 + $0xa0] sm:$0xff]
        %v1347 = vld [vmem:[%s4 + $0xa8] sm:$0xff]
        %v1348 = vld [vmem:[%s4 + $0xb0] sm:$0xff]
        %v1349 = vld [vmem:[%s4 + $0xb8] sm:$0xff]
        %v1350 = vld [vmem:[%s4 + $0xc0] sm:$0xff]
        %v1351 = vld [vmem:[%s4 + $0xc8] sm:$0xff]
        %v1352 = vld [vmem:[%s4 + $0xd0] sm:$0xff]
        %v1353 = vld [vmem:[%s4 + $0xd8] sm:$0xff]
        %v1354 = vld [vmem:[%s4 + $0xe0] sm:$0xff]
        %v1355 = vld [vmem:[%s4 + $0xe8] sm:$0xff]
        %v1356 = vld [vmem:[%s4 + $0xf0] sm:$0xff]
        %v1357 = vld [vmem:[%s4 + $0xf8] sm:$0xff]
        %1358 = vmatprep.subr.mxu0 0.0
        %1359 = vmatpush1.msra.mxu0 %v1326
        %1360 = vmatprep.subr.mxu0 0.0
        %1361 = vmatpush1.msra.mxu0 %v1327
        %1362 = vmatprep.subr.mxu0 0.0
        %1363 = vmatpush1.msra.mxu0 %v1328
        %1364 = vmatprep.subr.mxu0 0.0
        %1365 = vmatpush1.msra.mxu0 %v1329
        %1366 = vmatprep.subr.mxu0 0.0
        %1367 = vmatpush1.msra.mxu0 %v1330
        %1368 = vmatprep.subr.mxu0 0.0
        %1369 = vmatpush1.msra.mxu0 %v1331
        %1370 = vmatprep.subr.mxu0 0.0
        %1371 = vmatpush1.msra.mxu0 %v1332
        %1372 = vmatprep.subr.mxu0 0.0
        %1373 = vmatpush1.msra.mxu0 %v1333
        %1374 = vmatprep.subr.mxu0 0.0
        %1375 = vmatpush1.msra.mxu0 %v1334
        %1376 = vmatprep.subr.mxu0 0.0
        %1377 = vmatpush1.msra.mxu0 %v1335
        %1378 = vmatprep.subr.mxu0 0.0
        %1379 = vmatpush1.msra.mxu0 %v1336
        %1380 = vmatprep.subr.mxu0 0.0
        %1381 = vmatpush1.msra.mxu0 %v1337
        %1382 = vmatprep.subr.mxu0 0.0
        %1383 = vmatpush1.msra.mxu0 %v1338
        %1384 = vmatprep.subr.mxu0 0.0
        %1385 = vmatpush1.msra.mxu0 %v1339
        %1386 = vmatprep.subr.mxu0 0.0
        %1387 = vmatpush1.msra.mxu0 %v1340
        %1388 = vmatprep.subr.mxu0 0.0
        %1389 = vmatpush1.msra.mxu0 %v1341
        %1390 = vmatprep.subr.mxu0 0.0
        %1391 = vmatpush1.msra.mxu0 %v1342
        %1392 = vmatprep.subr.mxu0 0.0
        %1393 = vmatpush1.msra.mxu0 %v1343
        %1394 = vmatprep.subr.mxu0 0.0
        %1395 = vmatpush1.msra.mxu0 %v1344
        %1396 = vmatprep.subr.mxu0 0.0
        %1397 = vmatpush1.msra.mxu0 %v1345
        %1398 = vmatprep.subr.mxu0 0.0
        %1399 = vmatpush1.msra.mxu0 %v1346
        %1400 = vmatprep.subr.mxu0 0.0
        %1401 = vmatpush1.msra.mxu0 %v1347
        %1402 = vmatprep.subr.mxu0 0.0
        %1403 = vmatpush1.msra.mxu0 %v1348
        %1404 = vmatprep.subr.mxu0 0.0
        %1405 = vmatpush1.msra.mxu0 %v1349
        %1406 = vmatprep.subr.mxu0 0.0
        %1407 = vmatpush1.msra.mxu0 %v1350
        %1408 = vmatprep.subr.mxu0 0.0
        %1409 = vmatpush1.msra.mxu0 %v1351
        %1410 = vmatprep.subr.mxu0 0.0
        %1411 = vmatpush1.msra.mxu0 %v1352
        %1412 = vmatprep.subr.mxu0 0.0
        %1413 = vmatpush1.msra.mxu0 %v1353
        %1414 = vmatprep.subr.mxu0 0.0
        %1415 = vmatpush1.msra.mxu0 %v1354
        %1416 = vmatprep.subr.mxu0 0.0
        %1417 = vmatpush1.msra.mxu0 %v1355
        %1418 = vmatprep.subr.mxu0 0.0
        %1419 = vmatpush1.msra.mxu0 %v1356
        %1420 = vmatprep.subr.mxu0 0.0
        %1421 = vmatpush1.msra.mxu0 %v1357
        %1422 = vmatprep.mubr.f32.mxu0 %v1325
        %1423 = vmatmul.mubr.f32.gmra.mrb[0].mxu0 %v1324
        %v1424 = vpop.f32.mrb[0].mxu0
        %v1425 = vadd.f32 0.0, %v1424
        %v1426 = vpop.f32.mrb[0].mxu0
        %1427 = vdwg.mxu0
        %vm1428 = vcmask 1048064
        %1429 = vrot.lane.b32.xlu0 %v1425, 64
        %v1430 = vpop.permute.xlu0 %1429
        %v1431 = vsel %vm1428, %v1430, %v1425
        %1432 = vrot.lane.b32.xlu0 %v1431, 64
        %v1433 = vpop.permute.xlu0 %1432
        %v1434 = vsel %vm1428, %v1433, %v1425
        %v1435 = vld [vmem:[%s7] sm:$0x1]
        %v1436 = vlaneseq
        %v1437 = vshrl.u32 %v1436, 7
        %v1438 = vsub.s32 0, %v1437
        %v1439 = vrot.slane %v1435, %v1438
        %1441 = vrot.lane.b32.xlu0 %v1439, 55
        %v1442 = vpop.permute.xlu0 %1441
        %v1444 = vmul.f32 %v1434, %v1442
        %v1445 = vld [vmem:[%s5] sm:$0xff]
        %v1446 = vld [vmem:[%s5 + $0x8] sm:$0xff]
        %v1447 = vld [vmem:[%s7 + $0x1] sm:$0x1]
        %v1448 = vlaneseq
        %v1449 = vshrl.u32 %v1448, 7
        %v1450 = vsub.s32 0, %v1449
        %v1451 = vrot.slane %v1447, %v1450
        %1453 = vrot.lane.b32.xlu0 %v1451, 56
        %v1454 = vpop.permute.xlu0 %1453
        %v1456 = vmul.f32 %v1434, %v1454
        %s1457 = scalar_lea.vmem %s5, 16
        %v1458 = vld [vmem:[%s1457] sm:$0xff]
        %v1459 = vld [vmem:[%s1457 + $0x8] sm:$0xff]
        %1461 = vrot.lane.b32.xlu0 %v1456, 72
        %v1462 = vpop.permute.xlu0 %1461
        %vm1464 = vcmask 64512
        %v1466 = vsel %vm1464, %v1458, 0
        %v1469 = vsel %vm1464, %v1459, 0
        %1471 = vmatprep.subr.mxu0 0.0
        %1472 = vmatpush1.msra.mxu0 %v1462
        %1473 = vmatprep.subr.mxu0 0.0
        %1474 = vmatpush1.msra.mxu0 0.0
        %1475 = vmatprep.subr.mxu0 0.0
        %1476 = vmatpush1.msra.mxu0 0.0
        %1477 = vmatprep.subr.mxu0 0.0
        %1478 = vmatpush1.msra.mxu0 0.0
        %1479 = vmatprep.subr.mxu0 0.0
        %1480 = vmatpush1.msra.mxu0 0.0
        %1481 = vmatprep.subr.mxu0 0.0
        %1482 = vmatpush1.msra.mxu0 0.0
        %1483 = vmatprep.subr.mxu0 0.0
        %1484 = vmatpush1.msra.mxu0 0.0
        %1485 = vmatprep.subr.mxu0 0.0
        %1486 = vmatpush1.msra.mxu0 0.0
        %1487 = vmatprep.subr.mxu0 0.0
        %1488 = vmatpush1.msra.mxu0 0.0
        %1489 = vmatprep.subr.mxu0 0.0
        %1490 = vmatpush1.msra.mxu0 0.0
        %1491 = vmatprep.subr.mxu0 0.0
        %1492 = vmatpush1.msra.mxu0 0.0
        %1493 = vmatprep.subr.mxu0 0.0
        %1494 = vmatpush1.msra.mxu0 0.0
        %1495 = vmatprep.subr.mxu0 0.0
        %1496 = vmatpush1.msra.mxu0 0.0
        %1497 = vmatprep.subr.mxu0 0.0
        %1498 = vmatpush1.msra.mxu0 0.0
        %1499 = vmatprep.subr.mxu0 0.0
        %1500 = vmatpush1.msra.mxu0 0.0
        %1501 = vmatprep.subr.mxu0 0.0
        %1502 = vmatpush1.msra.mxu0 0.0
        %1503 = vmatprep.subr.mxu0 0.0
        %1504 = vmatpush1.msra.mxu0 0.0
        %1505 = vmatprep.subr.mxu0 0.0
        %1506 = vmatpush1.msra.mxu0 0.0
        %1507 = vmatprep.subr.mxu0 0.0
        %1508 = vmatpush1.msra.mxu0 0.0
        %1509 = vmatprep.subr.mxu0 0.0
        %1510 = vmatpush1.msra.mxu0 0.0
        %1511 = vmatprep.subr.mxu0 0.0
        %1512 = vmatpush1.msra.mxu0 0.0
        %1513 = vmatprep.subr.mxu0 0.0
        %1514 = vmatpush1.msra.mxu0 0.0
        %1515 = vmatprep.subr.mxu0 0.0
        %1516 = vmatpush1.msra.mxu0 0.0
        %1517 = vmatprep.subr.mxu0 0.0
        %1518 = vmatpush1.msra.mxu0 0.0
        %1519 = vmatprep.subr.mxu0 0.0
        %1520 = vmatpush1.msra.mxu0 0.0
        %1521 = vmatprep.subr.mxu0 0.0
        %1522 = vmatpush1.msra.mxu0 0.0
        %1523 = vmatprep.subr.mxu0 0.0
        %1524 = vmatpush1.msra.mxu0 0.0
        %1525 = vmatprep.subr.mxu0 0.0
        %1526 = vmatpush1.msra.mxu0 0.0
        %1527 = vmatprep.subr.mxu0 0.0
        %1528 = vmatpush1.msra.mxu0 0.0
        %1529 = vmatprep.subr.mxu0 0.0
        %1530 = vmatpush1.msra.mxu0 0.0
        %1531 = vmatprep.subr.mxu0 0.0
        %1532 = vmatpush1.msra.mxu0 0.0
        %1533 = vmatprep.subr.mxu0 0.0
        %1534 = vmatpush1.msra.mxu0 0.0
        %1535 = vmatprep.mubr.f32.mxu0 0.0
        %1536 = vmatmul.mubr.f32.gmra.mrb[0].mxu0 %v1466
        %v1537 = vpop.f32.mrb[0].mxu0
        %v1538 = vadd.f32 0.0, %v1537
        %v1539 = vpop.f32.mrb[0].mxu0
        %1540 = vmatprep.mubr.f32.mxu0 0.0
        %1541 = vmatmul.mubr.f32.gmra.mrb[0].mxu0 %v1469
        %v1542 = vpop.f32.mrb[0].mxu0
        %v1543 = vadd.f32 0.0, %v1542
        %v1544 = vpop.f32.mrb[0].mxu0
        %1545 = vdwg.mxu0
        %1547 = vrot.lane.b32.xlu0 %v1444, 73
        %v1548 = vpop.permute.xlu0 %1547
        %v1551 = vsel %vm1464, %v1445, 0
        %v1554 = vsel %vm1464, %v1446, 0
        %1556 = vmatprep.subr.mxu0 0.0
        %1557 = vmatpush1.msra.mxu0 %v1548
        %1558 = vmatprep.subr.mxu0 0.0
        %1559 = vmatpush1.msra.mxu0 0.0
        %1560 = vmatprep.subr.mxu0 0.0
        %1561 = vmatpush1.msra.mxu0 0.0
        %1562 = vmatprep.subr.mxu0 0.0
        %1563 = vmatpush1.msra.mxu0 0.0
        %1564 = vmatprep.subr.mxu0 0.0
        %1565 = vmatpush1.msra.mxu0 0.0
        %1566 = vmatprep.subr.mxu0 0.0
        %1567 = vmatpush1.msra.mxu0 0.0
        %1568 = vmatprep.subr.mxu0 0.0
        %1569 = vmatpush1.msra.mxu0 0.0
        %1570 = vmatprep.subr.mxu0 0.0
        %1571 = vmatpush1.msra.mxu0 0.0
        %1572 = vmatprep.subr.mxu0 0.0
        %1573 = vmatpush1.msra.mxu0 0.0
        %1574 = vmatprep.subr.mxu0 0.0
        %1575 = vmatpush1.msra.mxu0 0.0
        %1576 = vmatprep.subr.mxu0 0.0
        %1577 = vmatpush1.msra.mxu0 0.0
        %1578 = vmatprep.subr.mxu0 0.0
        %1579 = vmatpush1.msra.mxu0 0.0
        %1580 = vmatprep.subr.mxu0 0.0
        %1581 = vmatpush1.msra.mxu0 0.0
        %1582 = vmatprep.subr.mxu0 0.0
        %1583 = vmatpush1.msra.mxu0 0.0
        %1584 = vmatprep.subr.mxu0 0.0
        %1585 = vmatpush1.msra.mxu0 0.0
        %1586 = vmatprep.subr.mxu0 0.0
        %1587 = vmatpush1.msra.mxu0 0.0
        %1588 = vmatprep.subr.mxu0 0.0
        %1589 = vmatpush1.msra.mxu0 0.0
        %1590 = vmatprep.subr.mxu0 0.0
        %1591 = vmatpush1.msra.mxu0 0.0
        %1592 = vmatprep.subr.mxu0 0.0
        %1593 = vmatpush1.msra.mxu0 0.0
        %1594 = vmatprep.subr.mxu0 0.0
        %1595 = vmatpush1.msra.mxu0 0.0
        %1596 = vmatprep.subr.mxu0 0.0
        %1597 = vmatpush1.msra.mxu0 0.0
        %1598 = vmatprep.subr.mxu0 0.0
        %1599 = vmatpush1.msra.mxu0 0.0
        %1600 = vmatprep.subr.mxu0 0.0
        %1601 = vmatpush1.msra.mxu0 0.0
        %1602 = vmatprep.subr.mxu0 0.0
        %1603 = vmatpush1.msra.mxu0 0.0
        %1604 = vmatprep.subr.mxu0 0.0
        %1605 = vmatpush1.msra.mxu0 0.0
        %1606 = vmatprep.subr.mxu0 0.0
        %1607 = vmatpush1.msra.mxu0 0.0
        %1608 = vmatprep.subr.mxu0 0.0
        %1609 = vmatpush1.msra.mxu0 0.0
        %1610 = vmatprep.subr.mxu0 0.0
        %1611 = vmatpush1.msra.mxu0 0.0
        %1612 = vmatprep.subr.mxu0 0.0
        %1613 = vmatpush1.msra.mxu0 0.0
        %1614 = vmatprep.subr.mxu0 0.0
        %1615 = vmatpush1.msra.mxu0 0.0
        %1616 = vmatprep.subr.mxu0 0.0
        %1617 = vmatpush1.msra.mxu0 0.0
        %1618 = vmatprep.subr.mxu0 0.0
        %1619 = vmatpush1.msra.mxu0 0.0
        %1620 = vmatprep.mubr.f32.mxu0 0.0
        %1621 = vmatmul.mubr.f32.gmra.mrb[0].mxu0 %v1551
        %v1622 = vpop.f32.mrb[0].mxu0
        %v1623 = vadd.f32 %v1538, %v1622
        %v1624 = vpop.f32.mrb[0].mxu0
        %1625 = vmatprep.mubr.f32.mxu0 0.0
        %1626 = vmatmul.mubr.f32.gmra.mrb[0].mxu0 %v1554
        %v1627 = vpop.f32.mrb[0].mxu0
        %v1628 = vadd.f32 %v1543, %v1627
        %v1629 = vpop.f32.mrb[0].mxu0
        %1630 = vdwg.mxu0
        %v1631 = vld [vmem:[%s7 + $0x2] sm:$0x1]
        %v1632 = vlaneseq
        %v1633 = vshrl.u32 %v1632, 7
        %v1634 = vsub.s32 0, %v1633
        %v1635 = vrot.slane %v1631, %v1634
        %1637 = vrot.lane.b32.xlu0 %v1635, 57
        %v1638 = vpop.permute.xlu0 %1637
        %v1640 = vmul.f32 %v1434, %v1638
        %s1641 = scalar_lea.vmem %s5, 32
        %v1642 = vld [vmem:[%s1641] sm:$0xff]
        %v1643 = vld [vmem:[%s1641 + $0x8] sm:$0xff]
        %1645 = vrot.lane.b32.xlu0 %v1640, 71
        %v1646 = vpop.permute.xlu0 %1645
        %v1649 = vsel %vm1464, %v1642, 0
        %v1652 = vsel %vm1464, %v1643, 0
        %1654 = vmatprep.subr.mxu0 0.0
        %1655 = vmatpush1.msra.mxu0 %v1646
        %1656 = vmatprep.subr.mxu0 0.0
        %1657 = vmatpush1.msra.mxu0 0.0
        %1658 = vmatprep.subr.mxu0 0.0
        %1659 = vmatpush1.msra.mxu0 0.0
        %1660 = vmatprep.subr.mxu0 0.0
        %1661 = vmatpush1.msra.mxu0 0.0
        %1662 = vmatprep.subr.mxu0 0.0
        %1663 = vmatpush1.msra.mxu0 0.0
        %1664 = vmatprep.subr.mxu0 0.0
        %1665 = vmatpush1.msra.mxu0 0.0
        %1666 = vmatprep.subr.mxu0 0.0
        %1667 = vmatpush1.msra.mxu0 0.0
        %1668 = vmatprep.subr.mxu0 0.0
        %1669 = vmatpush1.msra.mxu0 0.0
        %1670 = vmatprep.subr.mxu0 0.0
        %1671 = vmatpush1.msra.mxu0 0.0
        %1672 = vmatprep.subr.mxu0 0.0
        %1673 = vmatpush1.msra.mxu0 0.0
        %1674 = vmatprep.subr.mxu0 0.0
        %1675 = vmatpush1.msra.mxu0 0.0
        %1676 = vmatprep.subr.mxu0 0.0
        %1677 = vmatpush1.msra.mxu0 0.0
        %1678 = vmatprep.subr.mxu0 0.0
        %1679 = vmatpush1.msra.mxu0 0.0
        %1680 = vmatprep.subr.mxu0 0.0
        %1681 = vmatpush1.msra.mxu0 0.0
        %1682 = vmatprep.subr.mxu0 0.0
        %1683 = vmatpush1.msra.mxu0 0.0
        %1684 = vmatprep.subr.mxu0 0.0
        %1685 = vmatpush1.msra.mxu0 0.0
        %1686 = vmatprep.subr.mxu0 0.0
        %1687 = vmatpush1.msra.mxu0 0.0
        %1688 = vmatprep.subr.mxu0 0.0
        %1689 = vmatpush1.msra.mxu0 0.0
        %1690 = vmatprep.subr.mxu0 0.0
        %1691 = vmatpush1.msra.mxu0 0.0
        %1692 = vmatprep.subr.mxu0 0.0
        %1693 = vmatpush1.msra.mxu0 0.0
        %1694 = vmatprep.subr.mxu0 0.0
        %1695 = vmatpush1.msra.mxu0 0.0
        %1696 = vmatprep.subr.mxu0 0.0
        %1697 = vmatpush1.msra.mxu0 0.0
        %1698 = vmatprep.subr.mxu0 0.0
        %1699 = vmatpush1.msra.mxu0 0.0
        %1700 = vmatprep.subr.mxu0 0.0
        %1701 = vmatpush1.msra.mxu0 0.0
        %1702 = vmatprep.subr.mxu0 0.0
        %1703 = vmatpush1.msra.mxu0 0.0
        %1704 = vmatprep.subr.mxu0 0.0
        %1705 = vmatpush1.msra.mxu0 0.0
        %1706 = vmatprep.subr.mxu0 0.0
        %1707 = vmatpush1.msra.mxu0 0.0
        %1708 = vmatprep.subr.mxu0 0.0
        %1709 = vmatpush1.msra.mxu0 0.0
        %1710 = vmatprep.subr.mxu0 0.0
        %1711 = vmatpush1.msra.mxu0 0.0
        %1712 = vmatprep.subr.mxu0 0.0
        %1713 = vmatpush1.msra.mxu0 0.0
        %1714 = vmatprep.subr.mxu0 0.0
        %1715 = vmatpush1.msra.mxu0 0.0
        %1716 = vmatprep.subr.mxu0 0.0
        %1717 = vmatpush1.msra.mxu0 0.0
        %1718 = vmatprep.mubr.f32.mxu0 0.0
        %1719 = vmatmul.mubr.f32.gmra.mrb[0].mxu0 %v1649
        %v1720 = vpop.f32.mrb[0].mxu0
        %v1721 = vadd.f32 0.0, %v1720
        %v1722 = vpop.f32.mrb[0].mxu0
        %1723 = vmatprep.mubr.f32.mxu0 0.0
        %1724 = vmatmul.mubr.f32.gmra.mrb[0].mxu0 %v1652
        %v1725 = vpop.f32.mrb[0].mxu0
        %v1726 = vadd.f32 0.0, %v1725
        %v1727 = vpop.f32.mrb[0].mxu0
        %1728 = vdwg.mxu0
        %v1729 = vadd.f32 %v1623, %v1721
        %v1730 = vadd.f32 %v1628, %v1726
        %v1731 = vld [vmem:[%s7 + $0x3] sm:$0x1]
        %v1732 = vlaneseq
        %v1733 = vshrl.u32 %v1732, 7
        %v1734 = vsub.s32 0, %v1733
        %v1735 = vrot.slane %v1731, %v1734
        %1737 = vrot.lane.b32.xlu0 %v1735, 63
        %v1738 = vpop.permute.xlu0 %1737
        %v1740 = vmul.f32 %v1434, %v1738
        %s1741 = scalar_lea.vmem %s5, 48
        %v1742 = vld [vmem:[%s1741] sm:$0xff]
        %v1743 = vld [vmem:[%s1741 + $0x8] sm:$0xff]
        %1745 = vrot.lane.b32.xlu0 %v1740, 65
        %v1746 = vpop.permute.xlu0 %1745
        %v1749 = vsel %vm1464, %v1742, 0
        %v1752 = vsel %vm1464, %v1743, 0
        %1754 = vmatprep.subr.mxu0 0.0
        %1755 = vmatpush1.msra.mxu0 %v1746
        %1756 = vmatprep.subr.mxu0 0.0
        %1757 = vmatpush1.msra.mxu0 0.0
        %1758 = vmatprep.subr.mxu0 0.0
        %1759 = vmatpush1.msra.mxu0 0.0
        %1760 = vmatprep.subr.mxu0 0.0
        %1761 = vmatpush1.msra.mxu0 0.0
        %1762 = vmatprep.subr.mxu0 0.0
        %1763 = vmatpush1.msra.mxu0 0.0
        %1764 = vmatprep.subr.mxu0 0.0
        %1765 = vmatpush1.msra.mxu0 0.0
        %1766 = vmatprep.subr.mxu0 0.0
        %1767 = vmatpush1.msra.mxu0 0.0
        %1768 = vmatprep.subr.mxu0 0.0
        %1769 = vmatpush1.msra.mxu0 0.0
        %1770 = vmatprep.subr.mxu0 0.0
        %1771 = vmatpush1.msra.mxu0 0.0
        %1772 = vmatprep.subr.mxu0 0.0
        %1773 = vmatpush1.msra.mxu0 0.0
        %1774 = vmatprep.subr.mxu0 0.0
        %1775 = vmatpush1.msra.mxu0 0.0
        %1776 = vmatprep.subr.mxu0 0.0
        %1777 = vmatpush1.msra.mxu0 0.0
        %1778 = vmatprep.subr.mxu0 0.0
        %1779 = vmatpush1.msra.mxu0 0.0
        %1780 = vmatprep.subr.mxu0 0.0
        %1781 = vmatpush1.msra.mxu0 0.0
        %1782 = vmatprep.subr.mxu0 0.0
        %1783 = vmatpush1.msra.mxu0 0.0
        %1784 = vmatprep.subr.mxu0 0.0
        %1785 = vmatpush1.msra.mxu0 0.0
        %1786 = vmatprep.subr.mxu0 0.0
        %1787 = vmatpush1.msra.mxu0 0.0
        %1788 = vmatprep.subr.mxu0 0.0
        %1789 = vmatpush1.msra.mxu0 0.0
        %1790 = vmatprep.subr.mxu0 0.0
        %1791 = vmatpush1.msra.mxu0 0.0
        %1792 = vmatprep.subr.mxu0 0.0
        %1793 = vmatpush1.msra.mxu0 0.0
        %1794 = vmatprep.subr.mxu0 0.0
        %1795 = vmatpush1.msra.mxu0 0.0
        %1796 = vmatprep.subr.mxu0 0.0
        %1797 = vmatpush1.msra.mxu0 0.0
        %1798 = vmatprep.subr.mxu0 0.0
        %1799 = vmatpush1.msra.mxu0 0.0
        %1800 = vmatprep.subr.mxu0 0.0
        %1801 = vmatpush1.msra.mxu0 0.0
        %1802 = vmatprep.subr.mxu0 0.0
        %1803 = vmatpush1.msra.mxu0 0.0
        %1804 = vmatprep.subr.mxu0 0.0
        %1805 = vmatpush1.msra.mxu0 0.0
        %1806 = vmatprep.subr.mxu0 0.0
        %1807 = vmatpush1.msra.mxu0 0.0
        %1808 = vmatprep.subr.mxu0 0.0
        %1809 = vmatpush1.msra.mxu0 0.0
        %1810 = vmatprep.subr.mxu0 0.0
        %1811 = vmatpush1.msra.mxu0 0.0
        %1812 = vmatprep.subr.mxu0 0.0
        %1813 = vmatpush1.msra.mxu0 0.0
        %1814 = vmatprep.subr.mxu0 0.0
        %1815 = vmatpush1.msra.mxu0 0.0
        %1816 = vmatprep.subr.mxu0 0.0
        %1817 = vmatpush1.msra.mxu0 0.0
        %1818 = vmatprep.mubr.f32.mxu0 0.0
        %1819 = vmatmul.mubr.f32.gmra.mrb[0].mxu0 %v1749
        %v1820 = vpop.f32.mrb[0].mxu0
        %v1821 = vadd.f32 0.0, %v1820
        %v1822 = vpop.f32.mrb[0].mxu0
        %1823 = vmatprep.mubr.f32.mxu0 0.0
        %1824 = vmatmul.mubr.f32.gmra.mrb[0].mxu0 %v1752
        %v1825 = vpop.f32.mrb[0].mxu0
        %v1826 = vadd.f32 0.0, %v1825
        %v1827 = vpop.f32.mrb[0].mxu0
        %1828 = vdwg.mxu0
        %v1829 = vadd.f32 %v1729, %v1821
        %v1830 = vadd.f32 %v1730, %v1826
        %s1831 = scalar_lea.vmem %s5, 64
        %v1832 = vld [vmem:[%s1831] sm:$0xff]
        %v1833 = vld [vmem:[%s1831 + $0x8] sm:$0xff]
        %v1835 = vsel %vm1464, %v1832, 0
        %v1838 = vsel %vm1464, %v1833, 0
        %1840 = vmatprep.subr.mxu0 0.0
        %1841 = vmatpush1.msra.mxu0 %v1425
        %1842 = vmatprep.subr.mxu0 0.0
        %1843 = vmatpush1.msra.mxu0 0.0
        %1844 = vmatprep.subr.mxu0 0.0
        %1845 = vmatpush1.msra.mxu0 0.0
        %1846 = vmatprep.subr.mxu0 0.0
        %1847 = vmatpush1.msra.mxu0 0.0
        %1848 = vmatprep.subr.mxu0 0.0
        %1849 = vmatpush1.msra.mxu0 0.0
        %1850 = vmatprep.subr.mxu0 0.0
        %1851 = vmatpush1.msra.mxu0 0.0
        %1852 = vmatprep.subr.mxu0 0.0
        %1853 = vmatpush1.msra.mxu0 0.0
        %1854 = vmatprep.subr.mxu0 0.0
        %1855 = vmatpush1.msra.mxu0 0.0
        %1856 = vmatprep.subr.mxu0 0.0
        %1857 = vmatpush1.msra.mxu0 0.0
        %1858 = vmatprep.subr.mxu0 0.0
        %1859 = vmatpush1.msra.mxu0 0.0
        %1860 = vmatprep.subr.mxu0 0.0
        %1861 = vmatpush1.msra.mxu0 0.0
        %1862 = vmatprep.subr.mxu0 0.0
        %1863 = vmatpush1.msra.mxu0 0.0
        %1864 = vmatprep.subr.mxu0 0.0
        %1865 = vmatpush1.msra.mxu0 0.0
        %1866 = vmatprep.subr.mxu0 0.0
        %1867 = vmatpush1.msra.mxu0 0.0
        %1868 = vmatprep.subr.mxu0 0.0
        %1869 = vmatpush1.msra.mxu0 0.0
        %1870 = vmatprep.subr.mxu0 0.0
        %1871 = vmatpush1.msra.mxu0 0.0
        %1872 = vmatprep.subr.mxu0 0.0
        %1873 = vmatpush1.msra.mxu0 0.0
        %1874 = vmatprep.subr.mxu0 0.0
        %1875 = vmatpush1.msra.mxu0 0.0
        %1876 = vmatprep.subr.mxu0 0.0
        %1877 = vmatpush1.msra.mxu0 0.0
        %1878 = vmatprep.subr.mxu0 0.0
        %1879 = vmatpush1.msra.mxu0 0.0
        %1880 = vmatprep.subr.mxu0 0.0
        %1881 = vmatpush1.msra.mxu0 0.0
        %1882 = vmatprep.subr.mxu0 0.0
        %1883 = vmatpush1.msra.mxu0 0.0
        %1884 = vmatprep.subr.mxu0 0.0
        %1885 = vmatpush1.msra.mxu0 0.0
        %1886 = vmatprep.subr.mxu0 0.0
        %1887 = vmatpush1.msra.mxu0 0.0
        %1888 = vmatprep.subr.mxu0 0.0
        %1889 = vmatpush1.msra.mxu0 0.0
        %1890 = vmatprep.subr.mxu0 0.0
        %1891 = vmatpush1.msra.mxu0 0.0
        %1892 = vmatprep.subr.mxu0 0.0
        %1893 = vmatpush1.msra.mxu0 0.0
        %1894 = vmatprep.subr.mxu0 0.0
        %1895 = vmatpush1.msra.mxu0 0.0
        %1896 = vmatprep.subr.mxu0 0.0
        %1897 = vmatpush1.msra.mxu0 0.0
        %1898 = vmatprep.subr.mxu0 0.0
        %1899 = vmatpush1.msra.mxu0 0.0
        %1900 = vmatprep.subr.mxu0 0.0
        %1901 = vmatpush1.msra.mxu0 0.0
        %1902 = vmatprep.subr.mxu0 0.0
        %1903 = vmatpush1.msra.mxu0 0.0
        %1904 = vmatprep.mubr.f32.mxu0 0.0
        %1905 = vmatmul.mubr.f32.gmra.mrb[0].mxu0 %v1835
        %v1906 = vpop.f32.mrb[0].mxu0
        %v1907 = vadd.f32 0.0, %v1906
        %v1908 = vpop.f32.mrb[0].mxu0
        %1909 = vmatprep.mubr.f32.mxu0 0.0
        %1910 = vmatmul.mubr.f32.gmra.mrb[0].mxu0 %v1838
        %v1911 = vpop.f32.mrb[0].mxu0
        %v1912 = vadd.f32 0.0, %v1911
        %v1913 = vpop.f32.mrb[0].mxu0
        %1914 = vdwg.mxu0
        %v1915 = vadd.f32 %v1829, %v1907
        %v1916 = vadd.f32 %v1830, %v1912
        %v1917 = vld [vmem:[%s7 + $0x5] sm:$0x1]
        %v1918 = vlaneseq
        %v1919 = vshrl.u32 %v1918, 7
        %v1920 = vsub.s32 0, %v1919
        %v1921 = vrot.slane %v1917, %v1920
        %1923 = vrot.lane.b32.xlu0 %v1921, 1
        %v1924 = vpop.permute.xlu0 %1923
        %v1926 = vmul.f32 %v1434, %v1924
        %s1927 = scalar_lea.vmem %s5, 80
        %v1928 = vld [vmem:[%s1927] sm:$0xff]
        %v1929 = vld [vmem:[%s1927 + $0x8] sm:$0xff]
        %1931 = vrot.lane.b32.xlu0 %v1926, 127
        %v1932 = vpop.permute.xlu0 %1931
        %v1935 = vsel %vm1464, %v1928, 0
        %v1938 = vsel %vm1464, %v1929, 0
        %1940 = vmatprep.subr.mxu0 0.0
        %1941 = vmatpush1.msra.mxu0 %v1932
        %1942 = vmatprep.subr.mxu0 0.0
        %1943 = vmatpush1.msra.mxu0 0.0
        %1944 = vmatprep.subr.mxu0 0.0
        %1945 = vmatpush1.msra.mxu0 0.0
        %1946 = vmatprep.subr.mxu0 0.0
        %1947 = vmatpush1.msra.mxu0 0.0
        %1948 = vmatprep.subr.mxu0 0.0
        %1949 = vmatpush1.msra.mxu0 0.0
        %1950 = vmatprep.subr.mxu0 0.0
        %1951 = vmatpush1.msra.mxu0 0.0
        %1952 = vmatprep.subr.mxu0 0.0
        %1953 = vmatpush1.msra.mxu0 0.0
        %1954 = vmatprep.subr.mxu0 0.0
        %1955 = vmatpush1.msra.mxu0 0.0
        %1956 = vmatprep.subr.mxu0 0.0
        %1957 = vmatpush1.msra.mxu0 0.0
        %1958 = vmatprep.subr.mxu0 0.0
        %1959 = vmatpush1.msra.mxu0 0.0
        %1960 = vmatprep.subr.mxu0 0.0
        %1961 = vmatpush1.msra.mxu0 0.0
        %1962 = vmatprep.subr.mxu0 0.0
        %1963 = vmatpush1.msra.mxu0 0.0
        %1964 = vmatprep.subr.mxu0 0.0
        %1965 = vmatpush1.msra.mxu0 0.0
        %1966 = vmatprep.subr.mxu0 0.0
        %1967 = vmatpush1.msra.mxu0 0.0
        %1968 = vmatprep.subr.mxu0 0.0
        %1969 = vmatpush1.msra.mxu0 0.0
        %1970 = vmatprep.subr.mxu0 0.0
        %1971 = vmatpush1.msra.mxu0 0.0
        %1972 = vmatprep.subr.mxu0 0.0
        %1973 = vmatpush1.msra.mxu0 0.0
        %1974 = vmatprep.subr.mxu0 0.0
        %1975 = vmatpush1.msra.mxu0 0.0
        %1976 = vmatprep.subr.mxu0 0.0
        %1977 = vmatpush1.msra.mxu0 0.0
        %1978 = vmatprep.subr.mxu0 0.0
        %1979 = vmatpush1.msra.mxu0 0.0
        %1980 = vmatprep.subr.mxu0 0.0
        %1981 = vmatpush1.msra.mxu0 0.0
        %1982 = vmatprep.subr.mxu0 0.0
        %1983 = vmatpush1.msra.mxu0 0.0
        %1984 = vmatprep.subr.mxu0 0.0
        %1985 = vmatpush1.msra.mxu0 0.0
        %1986 = vmatprep.subr.mxu0 0.0
        %1987 = vmatpush1.msra.mxu0 0.0
        %1988 = vmatprep.subr.mxu0 0.0
        %1989 = vmatpush1.msra.mxu0 0.0
        %1990 = vmatprep.subr.mxu0 0.0
        %1991 = vmatpush1.msra.mxu0 0.0
        %1992 = vmatprep.subr.mxu0 0.0
        %1993 = vmatpush1.msra.mxu0 0.0
        %1994 = vmatprep.subr.mxu0 0.0
        %1995 = vmatpush1.msra.mxu0 0.0
        %1996 = vmatprep.subr.mxu0 0.0
        %1997 = vmatpush1.msra.mxu0 0.0
        %1998 = vmatprep.subr.mxu0 0.0
        %1999 = vmatpush1.msra.mxu0 0.0
        %2000 = vmatprep.subr.mxu0 0.0
        %2001 = vmatpush1.msra.mxu0 0.0
        %2002 = vmatprep.subr.mxu0 0.0
        %2003 = vmatpush1.msra.mxu0 0.0
        %2004 = vmatprep.mubr.f32.mxu0 0.0
        %2005 = vmatmul.mubr.f32.gmra.mrb[0].mxu0 %v1935
        %v2006 = vpop.f32.mrb[0].mxu0
        %v2007 = vadd.f32 0.0, %v2006
        %v2008 = vpop.f32.mrb[0].mxu0
        %2009 = vmatprep.mubr.f32.mxu0 0.0
        %2010 = vmatmul.mubr.f32.gmra.mrb[0].mxu0 %v1938
        %v2011 = vpop.f32.mrb[0].mxu0
        %v2012 = vadd.f32 0.0, %v2011
        %v2013 = vpop.f32.mrb[0].mxu0
        %2014 = vdwg.mxu0
        %v2015 = vadd.f32 %v1915, %v2007
        %v2016 = vadd.f32 %v1916, %v2012
        %v2017 = vld [vmem:[%s7 + $0x6] sm:$0x1]
        %v2018 = vlaneseq
        %v2019 = vshrl.u32 %v2018, 7
        %v2020 = vsub.s32 0, %v2019
        %v2021 = vrot.slane %v2017, %v2020
        %2023 = vrot.lane.b32.xlu0 %v2021, 7
        %v2024 = vpop.permute.xlu0 %2023
        %v2026 = vmul.f32 %v1434, %v2024
        %s2027 = scalar_lea.vmem %s5, 96
        %v2028 = vld [vmem:[%s2027] sm:$0xff]
        %v2029 = vld [vmem:[%s2027 + $0x8] sm:$0xff]
        %2031 = vrot.lane.b32.xlu0 %v2026, 121
        %v2032 = vpop.permute.xlu0 %2031
        %v2035 = vsel %vm1464, %v2028, 0
        %v2038 = vsel %vm1464, %v2029, 0
        %2040 = vmatprep.subr.mxu0 0.0
        %2041 = vmatpush1.msra.mxu0 %v2032
        %2042 = vmatprep.subr.mxu0 0.0
        %2043 = vmatpush1.msra.mxu0 0.0
        %2044 = vmatprep.subr.mxu0 0.0
        %2045 = vmatpush1.msra.mxu0 0.0
        %2046 = vmatprep.subr.mxu0 0.0
        %2047 = vmatpush1.msra.mxu0 0.0
        %2048 = vmatprep.subr.mxu0 0.0
        %2049 = vmatpush1.msra.mxu0 0.0
        %2050 = vmatprep.subr.mxu0 0.0
        %2051 = vmatpush1.msra.mxu0 0.0
        %2052 = vmatprep.subr.mxu0 0.0
        %2053 = vmatpush1.msra.mxu0 0.0
        %2054 = vmatprep.subr.mxu0 0.0
        %2055 = vmatpush1.msra.mxu0 0.0
        %2056 = vmatprep.subr.mxu0 0.0
        %2057 = vmatpush1.msra.mxu0 0.0
        %2058 = vmatprep.subr.mxu0 0.0
        %2059 = vmatpush1.msra.mxu0 0.0
        %2060 = vmatprep.subr.mxu0 0.0
        %2061 = vmatpush1.msra.mxu0 0.0
        %2062 = vmatprep.subr.mxu0 0.0
        %2063 = vmatpush1.msra.mxu0 0.0
        %2064 = vmatprep.subr.mxu0 0.0
        %2065 = vmatpush1.msra.mxu0 0.0
        %2066 = vmatprep.subr.mxu0 0.0
        %2067 = vmatpush1.msra.mxu0 0.0
        %2068 = vmatprep.subr.mxu0 0.0
        %2069 = vmatpush1.msra.mxu0 0.0
        %2070 = vmatprep.subr.mxu0 0.0
        %2071 = vmatpush1.msra.mxu0 0.0
        %2072 = vmatprep.subr.mxu0 0.0
        %2073 = vmatpush1.msra.mxu0 0.0
        %2074 = vmatprep.subr.mxu0 0.0
        %2075 = vmatpush1.msra.mxu0 0.0
        %2076 = vmatprep.subr.mxu0 0.0
        %2077 = vmatpush1.msra.mxu0 0.0
        %2078 = vmatprep.subr.mxu0 0.0
        %2079 = vmatpush1.msra.mxu0 0.0
        %2080 = vmatprep.subr.mxu0 0.0
        %2081 = vmatpush1.msra.mxu0 0.0
        %2082 = vmatprep.subr.mxu0 0.0
        %2083 = vmatpush1.msra.mxu0 0.0
        %2084 = vmatprep.subr.mxu0 0.0
        %2085 = vmatpush1.msra.mxu0 0.0
        %2086 = vmatprep.subr.mxu0 0.0
        %2087 = vmatpush1.msra.mxu0 0.0
        %2088 = vmatprep.subr.mxu0 0.0
        %2089 = vmatpush1.msra.mxu0 0.0
        %2090 = vmatprep.subr.mxu0 0.0
        %2091 = vmatpush1.msra.mxu0 0.0
        %2092 = vmatprep.subr.mxu0 0.0
        %2093 = vmatpush1.msra.mxu0 0.0
        %2094 = vmatprep.subr.mxu0 0.0
        %2095 = vmatpush1.msra.mxu0 0.0
        %2096 = vmatprep.subr.mxu0 0.0
        %2097 = vmatpush1.msra.mxu0 0.0
        %2098 = vmatprep.subr.mxu0 0.0
        %2099 = vmatpush1.msra.mxu0 0.0
        %2100 = vmatprep.subr.mxu0 0.0
        %2101 = vmatpush1.msra.mxu0 0.0
        %2102 = vmatprep.subr.mxu0 0.0
        %2103 = vmatpush1.msra.mxu0 0.0
        %2104 = vmatprep.mubr.f32.mxu0 0.0
        %2105 = vmatmul.mubr.f32.gmra.mrb[0].mxu0 %v2035
        %v2106 = vpop.f32.mrb[0].mxu0
        %v2107 = vadd.f32 0.0, %v2106
        %v2108 = vpop.f32.mrb[0].mxu0
        %2109 = vmatprep.mubr.f32.mxu0 0.0
        %2110 = vmatmul.mubr.f32.gmra.mrb[0].mxu0 %v2038
        %v2111 = vpop.f32.mrb[0].mxu0
        %v2112 = vadd.f32 0.0, %v2111
        %v2113 = vpop.f32.mrb[0].mxu0
        %2114 = vdwg.mxu0
        %v2115 = vadd.f32 %v2015, %v2107
        %v2116 = vadd.f32 %v2016, %v2112
        %v2117 = vld [vmem:[%s7 + $0x7] sm:$0x1]
        %v2118 = vlaneseq
        %v2119 = vshrl.u32 %v2118, 7
        %v2120 = vsub.s32 0, %v2119
        %v2121 = vrot.slane %v2117, %v2120
        %2123 = vrot.lane.b32.xlu0 %v2121, 8
        %v2124 = vpop.permute.xlu0 %2123
        %v2126 = vmul.f32 %v1434, %v2124
        %s2127 = scalar_lea.vmem %s5, 112
        %v2128 = vld [vmem:[%s2127] sm:$0xff]
        %v2129 = vld [vmem:[%s2127 + $0x8] sm:$0xff]
        %2131 = vrot.lane.b32.xlu0 %v2126, 120
        %v2132 = vpop.permute.xlu0 %2131
        %v2135 = vsel %vm1464, %v2128, 0
        %v2138 = vsel %vm1464, %v2129, 0
        %2140 = vmatprep.subr.mxu0 0.0
        %2141 = vmatpush1.msra.mxu0 %v2132
        %2142 = vmatprep.subr.mxu0 0.0
        %2143 = vmatpush1.msra.mxu0 0.0
        %2144 = vmatprep.subr.mxu0 0.0
        %2145 = vmatpush1.msra.mxu0 0.0
        %2146 = vmatprep.subr.mxu0 0.0
        %2147 = vmatpush1.msra.mxu0 0.0
        %2148 = vmatprep.subr.mxu0 0.0
        %2149 = vmatpush1.msra.mxu0 0.0
        %2150 = vmatprep.subr.mxu0 0.0
        %2151 = vmatpush1.msra.mxu0 0.0
        %2152 = vmatprep.subr.mxu0 0.0
        %2153 = vmatpush1.msra.mxu0 0.0
        %2154 = vmatprep.subr.mxu0 0.0
        %2155 = vmatpush1.msra.mxu0 0.0
        %2156 = vmatprep.subr.mxu0 0.0
        %2157 = vmatpush1.msra.mxu0 0.0
        %2158 = vmatprep.subr.mxu0 0.0
        %2159 = vmatpush1.msra.mxu0 0.0
        %2160 = vmatprep.subr.mxu0 0.0
        %2161 = vmatpush1.msra.mxu0 0.0
        %2162 = vmatprep.subr.mxu0 0.0
        %2163 = vmatpush1.msra.mxu0 0.0
        %2164 = vmatprep.subr.mxu0 0.0
        %2165 = vmatpush1.msra.mxu0 0.0
        %2166 = vmatprep.subr.mxu0 0.0
        %2167 = vmatpush1.msra.mxu0 0.0
        %2168 = vmatprep.subr.mxu0 0.0
        %2169 = vmatpush1.msra.mxu0 0.0
        %2170 = vmatprep.subr.mxu0 0.0
        %2171 = vmatpush1.msra.mxu0 0.0
        %2172 = vmatprep.subr.mxu0 0.0
        %2173 = vmatpush1.msra.mxu0 0.0
        %2174 = vmatprep.subr.mxu0 0.0
        %2175 = vmatpush1.msra.mxu0 0.0
        %2176 = vmatprep.subr.mxu0 0.0
        %2177 = vmatpush1.msra.mxu0 0.0
        %2178 = vmatprep.subr.mxu0 0.0
        %2179 = vmatpush1.msra.mxu0 0.0
        %2180 = vmatprep.subr.mxu0 0.0
        %2181 = vmatpush1.msra.mxu0 0.0
        %2182 = vmatprep.subr.mxu0 0.0
        %2183 = vmatpush1.msra.mxu0 0.0
        %2184 = vmatprep.subr.mxu0 0.0
        %2185 = vmatpush1.msra.mxu0 0.0
        %2186 = vmatprep.subr.mxu0 0.0
        %2187 = vmatpush1.msra.mxu0 0.0
        %2188 = vmatprep.subr.mxu0 0.0
        %2189 = vmatpush1.msra.mxu0 0.0
        %2190 = vmatprep.subr.mxu0 0.0
        %2191 = vmatpush1.msra.mxu0 0.0
        %2192 = vmatprep.subr.mxu0 0.0
        %2193 = vmatpush1.msra.mxu0 0.0
        %2194 = vmatprep.subr.mxu0 0.0
        %2195 = vmatpush1.msra.mxu0 0.0
        %2196 = vmatprep.subr.mxu0 0.0
        %2197 = vmatpush1.msra.mxu0 0.0
        %2198 = vmatprep.subr.mxu0 0.0
        %2199 = vmatpush1.msra.mxu0 0.0
        %2200 = vmatprep.subr.mxu0 0.0
        %2201 = vmatpush1.msra.mxu0 0.0
        %2202 = vmatprep.subr.mxu0 0.0
        %2203 = vmatpush1.msra.mxu0 0.0
        %2204 = vmatprep.mubr.f32.mxu0 0.0
        %2205 = vmatmul.mubr.f32.gmra.mrb[0].mxu0 %v2135
        %v2206 = vpop.f32.mrb[0].mxu0
        %v2207 = vadd.f32 0.0, %v2206
        %v2208 = vpop.f32.mrb[0].mxu0
        %2209 = vmatprep.mubr.f32.mxu0 0.0
        %2210 = vmatmul.mubr.f32.gmra.mrb[0].mxu0 %v2138
        %v2211 = vpop.f32.mrb[0].mxu0
        %v2212 = vadd.f32 0.0, %v2211
        %v2213 = vpop.f32.mrb[0].mxu0
        %2214 = vdwg.mxu0
        %v2215 = vadd.f32 %v2115, %v2207
        %v2216 = vadd.f32 %v2116, %v2212
        %v2217 = vld [vmem:[%s7 + $0x8] sm:$0x1]
        %v2218 = vlaneseq
        %v2219 = vshrl.u32 %v2218, 7
        %v2220 = vsub.s32 0, %v2219
        %v2221 = vrot.slane %v2217, %v2220
        %2223 = vrot.lane.b32.xlu0 %v2221, 9
        %v2224 = vpop.permute.xlu0 %2223
        %v2226 = vmul.f32 %v1434, %v2224
        %s2227 = scalar_lea.vmem %s5, 128
        %v2228 = vld [vmem:[%s2227] sm:$0xff]
        %v2229 = vld [vmem:[%s2227 + $0x8] sm:$0xff]
        %2231 = vrot.lane.b32.xlu0 %v2226, 119
        %v2232 = vpop.permute.xlu0 %2231
        %v2235 = vsel %vm1464, %v2228, 0
        %v2238 = vsel %vm1464, %v2229, 0
        %2240 = vmatprep.subr.mxu0 0.0
        %2241 = vmatpush1.msra.mxu0 %v2232
        %2242 = vmatprep.subr.mxu0 0.0
        %2243 = vmatpush1.msra.mxu0 0.0
        %2244 = vmatprep.subr.mxu0 0.0
        %2245 = vmatpush1.msra.mxu0 0.0
        %2246 = vmatprep.subr.mxu0 0.0
        %2247 = vmatpush1.msra.mxu0 0.0
        %2248 = vmatprep.subr.mxu0 0.0
        %2249 = vmatpush1.msra.mxu0 0.0
        %2250 = vmatprep.subr.mxu0 0.0
        %2251 = vmatpush1.msra.mxu0 0.0
        %2252 = vmatprep.subr.mxu0 0.0
        %2253 = vmatpush1.msra.mxu0 0.0
        %2254 = vmatprep.subr.mxu0 0.0
        %2255 = vmatpush1.msra.mxu0 0.0
        %2256 = vmatprep.subr.mxu0 0.0
        %2257 = vmatpush1.msra.mxu0 0.0
        %2258 = vmatprep.subr.mxu0 0.0
        %2259 = vmatpush1.msra.mxu0 0.0
        %2260 = vmatprep.subr.mxu0 0.0
        %2261 = vmatpush1.msra.mxu0 0.0
        %2262 = vmatprep.subr.mxu0 0.0
        %2263 = vmatpush1.msra.mxu0 0.0
        %2264 = vmatprep.subr.mxu0 0.0
        %2265 = vmatpush1.msra.mxu0 0.0
        %2266 = vmatprep.subr.mxu0 0.0
        %2267 = vmatpush1.msra.mxu0 0.0
        %2268 = vmatprep.subr.mxu0 0.0
        %2269 = vmatpush1.msra.mxu0 0.0
        %2270 = vmatprep.subr.mxu0 0.0
        %2271 = vmatpush1.msra.mxu0 0.0
        %2272 = vmatprep.subr.mxu0 0.0
        %2273 = vmatpush1.msra.mxu0 0.0
        %2274 = vmatprep.subr.mxu0 0.0
        %2275 = vmatpush1.msra.mxu0 0.0
        %2276 = vmatprep.subr.mxu0 0.0
        %2277 = vmatpush1.msra.mxu0 0.0
        %2278 = vmatprep.subr.mxu0 0.0
        %2279 = vmatpush1.msra.mxu0 0.0
        %2280 = vmatprep.subr.mxu0 0.0
        %2281 = vmatpush1.msra.mxu0 0.0
        %2282 = vmatprep.subr.mxu0 0.0
        %2283 = vmatpush1.msra.mxu0 0.0
        %2284 = vmatprep.subr.mxu0 0.0
        %2285 = vmatpush1.msra.mxu0 0.0
        %2286 = vmatprep.subr.mxu0 0.0
        %2287 = vmatpush1.msra.mxu0 0.0
        %2288 = vmatprep.subr.mxu0 0.0
        %2289 = vmatpush1.msra.mxu0 0.0
        %2290 = vmatprep.subr.mxu0 0.0
        %2291 = vmatpush1.msra.mxu0 0.0
        %2292 = vmatprep.subr.mxu0 0.0
        %2293 = vmatpush1.msra.mxu0 0.0
        %2294 = vmatprep.subr.mxu0 0.0
        %2295 = vmatpush1.msra.mxu0 0.0
        %2296 = vmatprep.subr.mxu0 0.0
        %2297 = vmatpush1.msra.mxu0 0.0
        %2298 = vmatprep.subr.mxu0 0.0
        %2299 = vmatpush1.msra.mxu0 0.0
        %2300 = vmatprep.subr.mxu0 0.0
        %2301 = vmatpush1.msra.mxu0 0.0
        %2302 = vmatprep.subr.mxu0 0.0
        %2303 = vmatpush1.msra.mxu0 0.0
        %2304 = vmatprep.mubr.f32.mxu0 0.0
        %2305 = vmatmul.mubr.f32.gmra.mrb[0].mxu0 %v2235
        %v2306 = vpop.f32.mrb[0].mxu0
        %v2307 = vadd.f32 0.0, %v2306
        %v2308 = vpop.f32.mrb[0].mxu0
        %2309 = vmatprep.mubr.f32.mxu0 0.0
        %2310 = vmatmul.mubr.f32.gmra.mrb[0].mxu0 %v2238
        %v2311 = vpop.f32.mrb[0].mxu0
        %v2312 = vadd.f32 0.0, %v2311
        %v2313 = vpop.f32.mrb[0].mxu0
        %2314 = vdwg.mxu0
        %v2315 = vadd.f32 %v2215, %v2307
        %v2316 = vadd.f32 %v2216, %v2312
        %v2317 = vld [vmem:[%s6] sm:$0xff]
        %v2318 = vld [vmem:[%s6 + $0x8] sm:$0xff]
        %2320 = vset.pattern.permute.xlu0 0
        %2321 = vperm.xlu0 %2320, %v2317
        %v2322 = vpop.permute.xlu0 %2321
        %2325 = vset.pattern.permute.xlu0 0
        %2326 = vperm.xlu0 %2325, %v2318
        %v2327 = vpop.permute.xlu0 %2326
        %v2329 = vadd.f32 %v2315, %v2322
        %v2330 = vadd.f32 %v2316, %v2327
        %v2331 = vmax.f32 %v2329, 0.0
        %v2332 = vmax.f32 %v2330, 0.0
        %v2333 = vld [vmem:[%s8] sm:$0xff]
        %v2334 = vld [vmem:[%s8 + $0x8] sm:$0xff]
        %v2335 = vld [vmem:[%s8 + $0x10] sm:$0xff]
        %v2336 = vld [vmem:[%s8 + $0x18] sm:$0xff]
        %v2337 = vld [vmem:[%s8 + $0x20] sm:$0xff]
        %v2338 = vld [vmem:[%s8 + $0x28] sm:$0xff]
        %v2339 = vld [vmem:[%s8 + $0x30] sm:$0xff]
        %v2340 = vld [vmem:[%s8 + $0x38] sm:$0xff]
        %vm2341 = vcmask 523264
        %v2343 = vsel %vm2341, %v2331, 0
        %v2346 = vsel %vm2341, %v2332, 0
        %2348 = vmatprep.subr.mxu0 0.0
        %2349 = vmatpush1.msra.mxu0 %v2333
        %2350 = vmatprep.subr.mxu0 0.0
        %2351 = vmatpush1.msra.mxu0 %v2334
        %2352 = vmatprep.subr.mxu0 0.0
        %2353 = vmatpush1.msra.mxu0 %v2335
        %2354 = vmatprep.subr.mxu0 0.0
        %2355 = vmatpush1.msra.mxu0 %v2336
        %2356 = vmatprep.subr.mxu0 0.0
        %2357 = vmatpush1.msra.mxu0 %v2337
        %2358 = vmatprep.subr.mxu0 0.0
        %2359 = vmatpush1.msra.mxu0 %v2338
        %2360 = vmatprep.subr.mxu0 0.0
        %2361 = vmatpush1.msra.mxu0 %v2339
        %2362 = vmatprep.subr.mxu0 0.0
        %2363 = vmatpush1.msra.mxu0 %v2340
        %2364 = vmatprep.subr.mxu0 0.0
        %2365 = vmatpush1.msra.mxu0 0.0
        %2366 = vmatprep.subr.mxu0 0.0
        %2367 = vmatpush1.msra.mxu0 0.0
        %2368 = vmatprep.subr.mxu0 0.0
        %2369 = vmatpush1.msra.mxu0 0.0
        %2370 = vmatprep.subr.mxu0 0.0
        %2371 = vmatpush1.msra.mxu0 0.0
        %2372 = vmatprep.subr.mxu0 0.0
        %2373 = vmatpush1.msra.mxu0 0.0
        %2374 = vmatprep.subr.mxu0 0.0
        %2375 = vmatpush1.msra.mxu0 0.0
        %2376 = vmatprep.subr.mxu0 0.0
        %2377 = vmatpush1.msra.mxu0 0.0
        %2378 = vmatprep.subr.mxu0 0.0
        %2379 = vmatpush1.msra.mxu0 0.0
        %2380 = vmatprep.subr.mxu0 0.0
        %2381 = vmatpush1.msra.mxu0 0.0
        %2382 = vmatprep.subr.mxu0 0.0
        %2383 = vmatpush1.msra.mxu0 0.0
        %2384 = vmatprep.subr.mxu0 0.0
        %2385 = vmatpush1.msra.mxu0 0.0
        %2386 = vmatprep.subr.mxu0 0.0
        %2387 = vmatpush1.msra.mxu0 0.0
        %2388 = vmatprep.subr.mxu0 0.0
        %2389 = vmatpush1.msra.mxu0 0.0
        %2390 = vmatprep.subr.mxu0 0.0
        %2391 = vmatpush1.msra.mxu0 0.0
        %2392 = vmatprep.subr.mxu0 0.0
        %2393 = vmatpush1.msra.mxu0 0.0
        %2394 = vmatprep.subr.mxu0 0.0
        %2395 = vmatpush1.msra.mxu0 0.0
        %2396 = vmatprep.subr.mxu0 0.0
        %2397 = vmatpush1.msra.mxu0 0.0
        %2398 = vmatprep.subr.mxu0 0.0
        %2399 = vmatpush1.msra.mxu0 0.0
        %2400 = vmatprep.subr.mxu0 0.0
        %2401 = vmatpush1.msra.mxu0 0.0
        %2402 = vmatprep.subr.mxu0 0.0
        %2403 = vmatpush1.msra.mxu0 0.0
        %2404 = vmatprep.subr.mxu0 0.0
        %2405 = vmatpush1.msra.mxu0 0.0
        %2406 = vmatprep.subr.mxu0 0.0
        %2407 = vmatpush1.msra.mxu0 0.0
        %2408 = vmatprep.subr.mxu0 0.0
        %2409 = vmatpush1.msra.mxu0 0.0
        %2410 = vmatprep.subr.mxu0 0.0
        %2411 = vmatpush1.msra.mxu0 0.0
        %2412 = vmatprep.mubr.f32.mxu0 0.0
        %2413 = vmatmul.mubr.f32.gmra.mrb[0].mxu0 %v2343
        %v2414 = vpop.f32.mrb[0].mxu0
        %v2415 = vadd.f32 0.0, %v2414
        %v2416 = vpop.f32.mrb[0].mxu0
        %2417 = vmatprep.mubr.f32.mxu0 0.0
        %2418 = vmatmul.mubr.f32.gmra.mrb[0].mxu0 %v2346
        %v2419 = vpop.f32.mrb[0].mxu0
        %v2420 = vadd.f32 0.0, %v2419
        %v2421 = vpop.f32.mrb[0].mxu0
        %2422 = vdwg.mxu0
        %v2423 = vlaneseq
        %vm2424 = vcmp.ge.s32.totalorder %v2423, 0
        %vm2425 = vcmp.lt.s32.totalorder %v2423, 16
        %vm2426 = vmand %vm2424, %vm2425
        %2427 = vst.msk [vmem:[#allocation2] sm:$0x1] %vm2426, %v2415
        %v2430 = vunpack.c.l.s4 1966171168
        %v2431 = vunpack.c.0.s8 %v2430
        %v2432 = vlaneseq
        %v2433 = vshrl.u32 %v2432, 7
        %v2434 = vsub.s32 %v2431, %v2433
        %v2435 = vrot.slane %v2415, %v2434
        %v2436 = vcombine.high %v2435, %v2435
        %v2438 = vunpack.c.l.s4 1966171168
        %v2439 = vunpack.c.0.s8 %v2438
        %v2440 = vlaneseq
        %v2441 = vshrl.u32 %v2440, 7
        %v2442 = vsub.s32 %v2439, %v2441
        %v2443 = vrot.slane %v2435, %v2442
        %v2445 = vunpack.c.l.s4 1966171168
        %v2446 = vunpack.c.0.s8 %v2445
        %v2447 = vlaneseq
        %v2448 = vshrl.u32 %v2447, 7
        %v2449 = vsub.s32 %v2446, %v2448
        %v2450 = vrot.slane %v2436, %v2449
        %2451 = vrot.lane.b32.xlu0 %v2450, 16
        %v2452 = vpop.permute.xlu0 %2451
        %vm2454 = vcmp.ge.s32.totalorder %v2423, 16
        %vm2455 = vcmp.lt.s32.totalorder %v2423, 32
        %vm2456 = vmand %vm2454, %vm2455
        %2457 = vst.msk [vmem:[#allocation2] sm:$0x1] %vm2456, %v2452
        %v2458 = vcombine.high %v2443, %v2443
        %2459 = vrot.lane.b32.xlu0 %v2458, 32
        %v2460 = vpop.permute.xlu0 %2459
        %vm2462 = vcmp.ge.s32.totalorder %v2423, 32
        %vm2463 = vcmp.lt.s32.totalorder %v2423, 48
        %vm2464 = vmand %vm2462, %vm2463
        %2465 = vst.msk [vmem:[#allocation2] sm:$0x1] %vm2464, %v2460
        %v2466 = vcombine.high %v2450, %v2450
        %2467 = vrot.lane.b32.xlu0 %v2466, 48
        %v2468 = vpop.permute.xlu0 %2467
        %vm2470 = vcmp.ge.s32.totalorder %v2423, 48
        %vm2471 = vcmp.lt.s32.totalorder %v2423, 64
        %vm2472 = vmand %vm2470, %vm2471
        %2473 = vst.msk [vmem:[#allocation2] sm:$0x1] %vm2472, %v2468
        %v2474 = vcombine.high %v2415, %v2415
        %v2476 = vunpack.c.l.s4 1966171168
        %v2477 = vunpack.c.0.s8 %v2476
        %v2478 = vlaneseq
        %v2479 = vshrl.u32 %v2478, 7
        %v2480 = vsub.s32 %v2477, %v2479
        %v2481 = vrot.slane %v2474, %v2480
        %v2483 = vunpack.c.l.s4 1966171168
        %v2484 = vunpack.c.0.s8 %v2483
        %v2485 = vlaneseq
        %v2486 = vshrl.u32 %v2485, 7
        %v2487 = vsub.s32 %v2484, %v2486
        %v2488 = vrot.slane %v2481, %v2487
        %2489 = vrot.lane.b32.xlu0 %v2488, 64
        %v2490 = vpop.permute.xlu0 %2489
        %vm2492 = vcmp.ge.s32.totalorder %v2423, 64
        %vm2493 = vcmp.lt.s32.totalorder %v2423, 80
        %vm2494 = vmand %vm2492, %vm2493
        %2495 = vst.msk [vmem:[#allocation2] sm:$0x1] %vm2494, %v2490
        %v2496 = vcombine.high %v2481, %v2481
        %v2498 = vunpack.c.l.s4 1966171168
        %v2499 = vunpack.c.0.s8 %v2498
        %v2500 = vlaneseq
        %v2501 = vshrl.u32 %v2500, 7
        %v2502 = vsub.s32 %v2499, %v2501
        %v2503 = vrot.slane %v2496, %v2502
        %2504 = vrot.lane.b32.xlu0 %v2503, 80
        %v2505 = vpop.permute.xlu0 %2504
        %vm2507 = vcmp.ge.s32.totalorder %v2423, 80
        %vm2508 = vcmp.lt.s32.totalorder %v2423, 96
        %vm2509 = vmand %vm2507, %vm2508
        %2510 = vst.msk [vmem:[#allocation2] sm:$0x1] %vm2509, %v2505
        %v2511 = vcombine.high %v2488, %v2488
        %2512 = vrot.lane.b32.xlu0 %v2511, 96
        %v2513 = vpop.permute.xlu0 %2512
        %vm2515 = vcmp.ge.s32.totalorder %v2423, 96
        %vm2516 = vcmp.lt.s32.totalorder %v2423, 112
        %vm2517 = vmand %vm2515, %vm2516
        %2518 = vst.msk [vmem:[#allocation2] sm:$0x1] %vm2517, %v2513
        %v2519 = vcombine.high %v2503, %v2503
        %2520 = vrot.lane.b32.xlu0 %v2519, 112
        %v2521 = vpop.permute.xlu0 %2520
        %vm2523 = vcmp.ge.s32.totalorder %v2423, 112
        %vm2524 = vcmp.lt.s32.totalorder %v2423, 128
        %vm2525 = vmand %vm2523, %vm2524
        %2526 = vst.msk [vmem:[#allocation2] sm:$0x1] %vm2525, %v2521
        %2527 = vst.msk [vmem:[#allocation2 + $0x1] sm:$0x1] %vm2426, %v2420
        %v2530 = vunpack.c.l.s4 1966171168
        %v2531 = vunpack.c.0.s8 %v2530
        %v2532 = vlaneseq
        %v2533 = vshrl.u32 %v2532, 7
        %v2534 = vsub.s32 %v2531, %v2533
        %v2535 = vrot.slane %v2420, %v2534
        %v2536 = vcombine.high %v2535, %v2535
        %v2538 = vunpack.c.l.s4 1966171168
        %v2539 = vunpack.c.0.s8 %v2538
        %v2540 = vlaneseq
        %v2541 = vshrl.u32 %v2540, 7
        %v2542 = vsub.s32 %v2539, %v2541
        %v2543 = vrot.slane %v2535, %v2542
        %v2545 = vunpack.c.l.s4 1966171168
        %v2546 = vunpack.c.0.s8 %v2545
        %v2547 = vlaneseq
        %v2548 = vshrl.u32 %v2547, 7
        %v2549 = vsub.s32 %v2546, %v2548
        %v2550 = vrot.slane %v2536, %v2549
        %2551 = vrot.lane.b32.xlu0 %v2550, 16
        %v2552 = vpop.permute.xlu0 %2551
        %2554 = vst.msk [vmem:[#allocation2 + $0x1] sm:$0x1] %vm2456, %v2552
        %v2555 = vcombine.high %v2543, %v2543
        %2556 = vrot.lane.b32.xlu0 %v2555, 32
        %v2557 = vpop.permute.xlu0 %2556
        %2559 = vst.msk [vmem:[#allocation2 + $0x1] sm:$0x1] %vm2464, %v2557
        %v2560 = vcombine.high %v2550, %v2550
        %2561 = vrot.lane.b32.xlu0 %v2560, 48
        %v2562 = vpop.permute.xlu0 %2561
        %2564 = vst.msk [vmem:[#allocation2 + $0x1] sm:$0x1] %vm2472, %v2562
        %v2565 = vcombine.high %v2420, %v2420
        %v2567 = vunpack.c.l.s4 1966171168
        %v2568 = vunpack.c.0.s8 %v2567
        %v2569 = vlaneseq
        %v2570 = vshrl.u32 %v2569, 7
        %v2571 = vsub.s32 %v2568, %v2570
        %v2572 = vrot.slane %v2565, %v2571
        %v2574 = vunpack.c.l.s4 1966171168
        %v2575 = vunpack.c.0.s8 %v2574
        %v2576 = vlaneseq
        %v2577 = vshrl.u32 %v2576, 7
        %v2578 = vsub.s32 %v2575, %v2577
        %v2579 = vrot.slane %v2572, %v2578
        %2580 = vrot.lane.b32.xlu0 %v2579, 64
        %v2581 = vpop.permute.xlu0 %2580
        %2583 = vst.msk [vmem:[#allocation2 + $0x1] sm:$0x1] %vm2494, %v2581
        %v2584 = vcombine.high %v2572, %v2572
        %v2586 = vunpack.c.l.s4 1966171168
        %v2587 = vunpack.c.0.s8 %v2586
        %v2588 = vlaneseq
        %v2589 = vshrl.u32 %v2588, 7
        %v2590 = vsub.s32 %v2587, %v2589
        %v2591 = vrot.slane %v2584, %v2590
        %2592 = vrot.lane.b32.xlu0 %v2591, 80
        %v2593 = vpop.permute.xlu0 %2592
        %2595 = vst.msk [vmem:[#allocation2 + $0x1] sm:$0x1] %vm2509, %v2593
        %v2596 = vcombine.high %v2579, %v2579
        %2597 = vrot.lane.b32.xlu0 %v2596, 96
        %v2598 = vpop.permute.xlu0 %2597
        %2600 = vst.msk [vmem:[#allocation2 + $0x1] sm:$0x1] %vm2517, %v2598
        %v2601 = vcombine.high %v2591, %v2591
        %2602 = vrot.lane.b32.xlu0 %v2601, 112
        %v2603 = vpop.permute.xlu0 %2602
        %2605 = vst.msk [vmem:[#allocation2 + $0x1] sm:$0x1] %vm2525, %v2603
        %v2606 = vld [vmem:[#allocation2] sm:$0x3]
        %v2607 = vld [vmem:[%s9] sm:$0xff]
        %v2608 = vld [vmem:[%s9 + $0x8] sm:$0xff]
        %v2609 = vld [vmem:[%s9 + $0x10] sm:$0xff]
        %v2610 = vld [vmem:[%s9 + $0x18] sm:$0xff]
        %v2611 = vld [vmem:[%s9 + $0x20] sm:$0xff]
        %v2612 = vld [vmem:[%s9 + $0x28] sm:$0xff]
        %v2613 = vld [vmem:[%s9 + $0x30] sm:$0xff]
        %v2614 = vld [vmem:[%s9 + $0x38] sm:$0xff]
        %v2615 = vld [vmem:[%s9 + $0x40] sm:$0xff]
        %v2616 = vld [vmem:[%s9 + $0x48] sm:$0xff]
        %v2617 = vld [vmem:[%s9 + $0x50] sm:$0xff]
        %v2618 = vld [vmem:[%s9 + $0x58] sm:$0xff]
        %v2619 = vld [vmem:[%s9 + $0x60] sm:$0xff]
        %v2620 = vld [vmem:[%s9 + $0x68] sm:$0xff]
        %v2621 = vld [vmem:[%s9 + $0x70] sm:$0xff]
        %v2622 = vld [vmem:[%s9 + $0x78] sm:$0xff]
        %v2623 = vld [vmem:[%s9 + $0x80] sm:$0xff]
        %v2624 = vld [vmem:[%s9 + $0x88] sm:$0xff]
        %v2625 = vld [vmem:[%s9 + $0x90] sm:$0xff]
        %v2626 = vld [vmem:[%s9 + $0x98] sm:$0xff]
        %v2627 = vld [vmem:[%s9 + $0xa0] sm:$0xff]
        %v2628 = vld [vmem:[%s9 + $0xa8] sm:$0xff]
        %v2629 = vld [vmem:[%s9 + $0xb0] sm:$0xff]
        %v2630 = vld [vmem:[%s9 + $0xb8] sm:$0xff]
        %v2631 = vld [vmem:[%s9 + $0xc0] sm:$0xff]
        %v2632 = vld [vmem:[%s9 + $0xc8] sm:$0xff]
        %v2633 = vld [vmem:[%s9 + $0xd0] sm:$0xff]
        %v2634 = vld [vmem:[%s9 + $0xd8] sm:$0xff]
        %v2635 = vld [vmem:[%s9 + $0xe0] sm:$0xff]
        %v2636 = vld [vmem:[%s9 + $0xe8] sm:$0xff]
        %v2637 = vld [vmem:[%s9 + $0xf0] sm:$0xff]
        %v2638 = vld [vmem:[%s9 + $0xf8] sm:$0xff]
        %v2639 = vld [vmem:[%s10] sm:$0x1]
        %v2641 = vlaneseq
        %v2642 = vshrl.u32 %v2641, 7
        %v2643 = vsub.s32 0, %v2642
        %v2644 = vrot.slane %v2606, %v2643
        %v2645 = vlaneseq
        %v2646 = vshrl.u32 %v2645, 7
        %v2647 = vsub.s32 1, %v2646
        %v2648 = vrot.slane %v2606, %v2647
        %2651 = vmatprep.subr.mxu0 0.0
        %2652 = vmatpush1.msra.mxu0 %v2607
        %2653 = vmatprep.subr.mxu0 0.0
        %2654 = vmatpush1.msra.mxu0 %v2608
        %2655 = vmatprep.subr.mxu0 0.0
        %2656 = vmatpush1.msra.mxu0 %v2609
        %2657 = vmatprep.subr.mxu0 0.0
        %2658 = vmatpush1.msra.mxu0 %v2610
        %2659 = vmatprep.subr.mxu0 0.0
        %2660 = vmatpush1.msra.mxu0 %v2611
        %2661 = vmatprep.subr.mxu0 0.0
        %2662 = vmatpush1.msra.mxu0 %v2612
        %2663 = vmatprep.subr.mxu0 0.0
        %2664 = vmatpush1.msra.mxu0 %v2613
        %2665 = vmatprep.subr.mxu0 0.0
        %2666 = vmatpush1.msra.mxu0 %v2614
        %2667 = vmatprep.subr.mxu0 0.0
        %2668 = vmatpush1.msra.mxu0 %v2615
        %2669 = vmatprep.subr.mxu0 0.0
        %2670 = vmatpush1.msra.mxu0 %v2616
        %2671 = vmatprep.subr.mxu0 0.0
        %2672 = vmatpush1.msra.mxu0 %v2617
        %2673 = vmatprep.subr.mxu0 0.0
        %2674 = vmatpush1.msra.mxu0 %v2618
        %2675 = vmatprep.subr.mxu0 0.0
        %2676 = vmatpush1.msra.mxu0 %v2619
        %2677 = vmatprep.subr.mxu0 0.0
        %2678 = vmatpush1.msra.mxu0 %v2620
        %2679 = vmatprep.subr.mxu0 0.0
        %2680 = vmatpush1.msra.mxu0 %v2621
        %2681 = vmatprep.subr.mxu0 0.0
        %2682 = vmatpush1.msra.mxu0 %v2622
        %2683 = vmatprep.subr.mxu0 0.0
        %2684 = vmatpush1.msra.mxu0 %v2623
        %2685 = vmatprep.subr.mxu0 0.0
        %2686 = vmatpush1.msra.mxu0 %v2624
        %2687 = vmatprep.subr.mxu0 0.0
        %2688 = vmatpush1.msra.mxu0 %v2625
        %2689 = vmatprep.subr.mxu0 0.0
        %2690 = vmatpush1.msra.mxu0 %v2626
        %2691 = vmatprep.subr.mxu0 0.0
        %2692 = vmatpush1.msra.mxu0 %v2627
        %2693 = vmatprep.subr.mxu0 0.0
        %2694 = vmatpush1.msra.mxu0 %v2628
        %2695 = vmatprep.subr.mxu0 0.0
        %2696 = vmatpush1.msra.mxu0 %v2629
        %2697 = vmatprep.subr.mxu0 0.0
        %2698 = vmatpush1.msra.mxu0 %v2630
        %2699 = vmatprep.subr.mxu0 0.0
        %2700 = vmatpush1.msra.mxu0 %v2631
        %2701 = vmatprep.subr.mxu0 0.0
        %2702 = vmatpush1.msra.mxu0 %v2632
        %2703 = vmatprep.subr.mxu0 0.0
        %2704 = vmatpush1.msra.mxu0 %v2633
        %2705 = vmatprep.subr.mxu0 0.0
        %2706 = vmatpush1.msra.mxu0 %v2634
        %2707 = vmatprep.subr.mxu0 0.0
        %2708 = vmatpush1.msra.mxu0 %v2635
        %2709 = vmatprep.subr.mxu0 0.0
        %2710 = vmatpush1.msra.mxu0 %v2636
        %2711 = vmatprep.subr.mxu0 0.0
        %2712 = vmatpush1.msra.mxu0 %v2637
        %2713 = vmatprep.subr.mxu0 0.0
        %2714 = vmatpush1.msra.mxu0 %v2638
        %2715 = vmatprep.mubr.f32.mxu0 %v2648
        %2716 = vmatmul.mubr.f32.gmra.mrb[0].mxu0 %v2644
        %v2717 = vpop.f32.mrb[0].mxu0
        %v2718 = vadd.f32 %v2639, %v2717
        %v2719 = vpop.f32.mrb[0].mxu0
        %2720 = vdwg.mxu0
        %v2721 = vmax.f32 %v2718, 0.0
        %vm2722 = vcmask 253952
        %2723 = vst.msk [vmem:[%s378] sm:$0x1] %vm2722, %v2721
        %s2724 = sand.u32 %s269, 1
        %s2725 = scalar_lea.sflag [#allocation4], %s2724
        %s2726 = sand.u32 %s269, 1
        %s2727 = scalar_lea.vmem [#allocation3], %s2726
        // Predicated region
        $region65: #{modified_model_forward.1} parent=63 // pred_check
          %p2728 = pneg %p279
        $region66: #{modified_model_forward.1} parent=63 // pred_check_branch
          %2730 = sbr.rel (%p2728) target = $region68
        $region67: #{modified_model_forward.1} parent=63 // pred_region
          %s2732 = ssub.s32 16, 16
          %2733 = vsyncadd %s2725, %s2732
          %s2734 = smul.addr %s25, 16
          %s2735 = scalar_lea.hbm %s11, %s2734
          %s2737 = sshll.u32 %s2727, 4
          %s2738 = int_to_ptr.vmem [resolvable:$true] %s2737
          %2740 = dma.vmem_to_hbm [thread:$0]  %s2738, 16, %s2735, %s2725
        $region68: #{modified_model_forward.1} parent=63 // pred_fallthru
          _
      $region64: #{modified_model_forward.1} parent=5 // pred_fallthru
        _
      %p2741 = scmp.le.s32.totalorder 2, %s20
      // Predicated region
      $region69: #{modified_model_forward.1} parent=5 // pred_check
        %p2742 = pneg %p2741
      $region70: #{modified_model_forward.1} parent=5 // pred_check_branch
        %2744 = sbr.rel (%p2742) target = $region72
      $region71: #{modified_model_forward.1} parent=5 // pred_region
        %s2745 = ssub.s32 %s20, 2
        // Predicated region
        $region73: #{modified_model_forward.1} parent=71 // pred_check
          %p2746 = pneg %p285
        $region74: #{modified_model_forward.1} parent=71 // pred_check_branch
          %2748 = sbr.rel (%p2746) target = $region76
        $region75: #{modified_model_forward.1} parent=71 // pred_region
          %s2749 = sand.u32 %s270, 1
          %s2750 = scalar_lea.sflag [#allocation4], %s2749
          %s2751 = sand.u32 %s270, 1
          %s2752 = scalar_lea.vmem [#allocation3], %s2751
          %2753 = dma.done %s2750, 16
        $region76: #{modified_model_forward.1} parent=71 // pred_fallthru
          _
      $region72: #{modified_model_forward.1} parent=5 // pred_fallthru
        _
    $region6: #{modified_model_forward.1} parent=1 // loop_footer
      %s24 = sadd.s32 1, %s20
    $region7: #{modified_model_forward.1} parent=1 // loop_footer_branch
      %19 = sbr.rel target = $region3
    $region8: #{modified_model_forward.1} parent=1 // loop_exit
      _
    %2754 = vsyncpa [#allocation4], 1
    %s2755 = scalar_lea.sflag [#allocation4], 1
    %2756 = vsyncpa %s2755, 1

</llo_original>
